<compile_context>
chip_gen: v6e
topology: v6e:2x2x1
jax: 0.10.0
libtpu: 0.0.40
codegen_flags: <defaults>
</compile_context>

<pallas_src>
import jax
import jax.numpy as jnp
from jax.experimental import pallas as pl
from jax.experimental.pallas import tpu as pltpu


_ALIGN = 16  # bf16 sublane packing: keep row pitch and store offsets 16-aligned


def _row_pitch(w):
    """Padded row pitch: smallest multiple of 16 that is >= W + 2."""
    return ((w + 2 + _ALIGN - 1) // _ALIGN) * _ALIGN


def _fused_block_kernel(x_ref, w1_ref, w2_ref, bias_ref, o_ref, xpad_ref):
    """One batch element per grid step (whole fused Block).

    x_ref:    (1, H, W, C)  f32 input block (also the residual / identity)
    w1_ref:   (9*C, C)      bf16 conv1 weight, tap-major, BN scale pre-folded
    w2_ref:   (9*C, C)      bf16 conv2 weight, BN scale pre-folded
    bias_ref: (1, C)        f32 folded BN bias (bn2)
    o_ref:    (1, H, W, C)  f32 output
    xpad_ref: (RPAD, C)     bf16 flattened zero-padded image scratch (pitch WP)
    """
    H, W, C = o_ref.shape[1], o_ref.shape[2], o_ref.shape[3]
    WP = _row_pitch(W)
    A = _ALIGN - 1           # interior row h starts at A + WP*(h+1) + 1 (16-aligned)
    HWP = H * WP
    RPAD = xpad_ref.shape[0]

    bias = bias_ref[...]                                     # (1, C) f32, hoisted

    # Flat conv-view row r -> (h, w) = (r // WP, r % WP); columns w >= W are
    # wrap-around garbage and must be zeroed before feeding conv2.
    col = jax.lax.broadcasted_iota(jnp.int32, (HWP, 1), 0) % WP
    col_valid = col < W

    def conv3x3(w_ref):
        # K = 9*C im2col contraction: the 9 shifted tap views are plain
        # sublane-offset reads of the flat scratch (no reshape copies); the
        # whole accumulation stays inside the MXU (single bf16 dot, f32 acc).
        taps = [xpad_ref[pl.ds(A + dy * WP + dx, HWP), :]
                for dy in range(3) for dx in range(3)]
        patches = jnp.concatenate(taps, axis=-1)             # (HWP, 9C) bf16
        return jnp.dot(patches, w_ref[...],
                       preferred_element_type=jnp.float32)   # (HWP, C) f32

    # ---- zero only the halo rows + inter-row pad columns ----------------------
    # (the H*W interior is fully overwritten by the staging stores below, and
    #  the masked y store re-zeroes the pad columns again before conv2)
    top = A + WP + 1
    xpad_ref[pl.ds(0, top), :] = jnp.zeros((top, C), xpad_ref.dtype)
    gap = WP - W
    for h in range(H - 1):
        xpad_ref[pl.ds(A + WP * (h + 1) + 1 + W, gap), :] = jnp.zeros(
            (gap, C), xpad_ref.dtype)
    bot_start = A + WP * H + 1 + W            # last row's pad cols + bottom halo
    bot = RPAD - bot_start
    xpad_ref[pl.ds(bot_start, bot), :] = jnp.zeros((bot, C), xpad_ref.dtype)

    # ---- stage the input interior as bf16 (16-aligned W-wide stores) ----------
    for h in range(H):
        xpad_ref[pl.ds(A + WP * (h + 1) + 1, W), :] = x_ref[0, h].astype(
            xpad_ref.dtype)

    # ---- conv1 -> bn2 -> relu (result never leaves VMEM) -----------------------
    y = jnp.maximum(conv3x3(w1_ref) + bias, 0.0)             # f32 elementwise
    y = jnp.where(col_valid, y, 0.0)                         # zero garbage cols
    # Relocate y into its zero-padded position (shift by one padded row + one
    # column); the masked columns double as left/right zero padding for conv2.
    xpad_ref[pl.ds(A + WP + 1, HWP), :] = y.astype(xpad_ref.dtype)

    # ---- conv2 -> bn2 -> +identity -> relu, single bulk writeback --------------
    z = conv3x3(w2_ref) + bias                               # (HWP, C) f32
    z = z.reshape(H, WP, C)[:, :W, :]                        # drop pad columns
    o_ref[0] = jnp.maximum(z + x_ref[0], 0.0).astype(o_ref.dtype)


def _fold_bn(gamma, beta, running_mean, running_var, eps=1e-5):
    scale = gamma / jnp.sqrt(running_var + eps)
    bias = beta - running_mean * scale
    return scale, bias


def _fused_block(x_nhwc, w1_hwio, w2_hwio, scale, bias):
    N, H, W, C = x_nhwc.shape
    WP = _row_pitch(W)
    rpad = (H + 2) * WP + 2 * _ALIGN   # covers the last tap window (A+2WP+2+HWP)
    # Fold the per-output-channel BN scale into the conv weights (tiny,
    # grid-constant work) so the kernel only applies "+ bias".
    # (3,3,Cin,Cout) -> (9*Cin, Cout), tap-major; contiguous so reshape is free.
    w1 = (w1_hwio.reshape(9 * C, C) * scale[None, :]).astype(jnp.bfloat16)
    w2 = (w2_hwio.reshape(9 * C, C) * scale[None, :]).astype(jnp.bfloat16)
    bias2d = bias.reshape(1, C).astype(jnp.float32)
    return pl.pallas_call(
        _fused_block_kernel,
        out_shape=jax.ShapeDtypeStruct((N, H, W, C), jnp.float32),
        grid_spec=pltpu.PrefetchScalarGridSpec(
            num_scalar_prefetch=0,
            grid=(N,),
            in_specs=[
                pl.BlockSpec((1, H, W, C), lambda n: (n, 0, 0, 0)),
                # TODO(synk): single-buffer these grid-constant blocks with
                # pipeline_mode=pl.Buffered(1) to save double-buffer VMEM on v7x.
                pl.BlockSpec((9 * C, C), lambda n: (0, 0)),
                pl.BlockSpec((9 * C, C), lambda n: (0, 0)),
                pl.BlockSpec((1, C), lambda n: (0, 0)),
            ],
            out_specs=pl.BlockSpec((1, H, W, C), lambda n: (n, 0, 0, 0)),
            scratch_shapes=[pltpu.VMEM((rpad, C), jnp.bfloat16)],
        ),
        compiler_params=pltpu.CompilerParams(
            dimension_semantics=("parallel",)),
    )(x_nhwc, w1, w2, bias2d)


@jax.jit
def block_forward(x_nchw, params):
    """Forward pass of Block (stride=1, i_downsample=None), eval-mode BN."""
    # TODO(synk): keep activations NHWC end-to-end in a full model to drop
    #             these two transposes (pure HBM bandwidth).
    x = jnp.transpose(x_nchw, (0, 2, 3, 1))  # NCHW -> NHWC
    scale2, bias2 = _fold_bn(params["bn2_gamma"], params["bn2_beta"],
                             params["bn2_mean"], params["bn2_var"])
    out = _fused_block(x, params["w1"], params["w2"], scale2, bias2)
    return jnp.transpose(out, (0, 3, 1, 2))  # NHWC -> NCHW


def _reference_forward(x_nchw, params):
    """Pure-JAX f32 reference (lax.conv) for a numerical check."""
    scale2, bias2 = _fold_bn(params["bn2_gamma"], params["bn2_beta"],
                             params["bn2_mean"], params["bn2_var"])
    scale2 = scale2.reshape(1, -1, 1, 1)
    bias2 = bias2.reshape(1, -1, 1, 1)

    def conv(x, w_hwio):
        return jax.lax.conv_general_dilated(
            x, w_hwio, window_strides=(1, 1), padding="SAME",
            dimension_numbers=("NCHW", "HWIO", "NCHW"))

    identity = x_nchw
    y = jax.nn.relu(conv(x_nchw, params["w1"]) * scale2 + bias2)
    y = conv(y, params["w2"]) * scale2 + bias2
    return jax.nn.relu(y + identity)


if __name__ == "__main__":
    N, C, HW = 2, 4, 16   # batch=2, in_channels=out_channels=4, spatial=16

    key = jax.random.PRNGKey(0)
    k = jax.random.split(key, 8)
    params = {
        # conv weights in HWIO (3, 3, Cin, Cout); no bias (bias=False).
        "w1": 0.2 * jax.random.normal(k[0], (3, 3, C, C), jnp.float32),
        "w2": 0.2 * jax.random.normal(k[1], (3, 3, C, C), jnp.float32),
        # batch_norm2 parameters (the only BN actually used by forward()).
        "bn2_gamma": 1.0 + 0.1 * jax.random.normal(k[2], (C,), jnp.float32),
        "bn2_beta": 0.1 * jax.random.normal(k[3], (C,), jnp.float32),
        "bn2_mean": 0.1 * jax.random.normal(k[4], (C,), jnp.float32),
        "bn2_var": jnp.abs(1.0 + 0.1 * jax.random.normal(k[5], (C,), jnp.float32)),
        # batch_norm1 parameters exist in __init__ but are never used in forward().
        "bn1_gamma": jnp.ones((C,), jnp.float32),
        "bn1_beta": jnp.zeros((C,), jnp.float32),
    }

    x = jax.random.normal(k[6], (N, C, HW, HW), jnp.float32)  # NCHW, like PyTorch

    out = block_forward(x, params)
    out = jax.block_until_ready(out)

    ref = _reference_forward(x, params)
    assert out.shape == (N, C, HW, HW)
    # bf16 matmul operands vs f32 reference: loosened tolerance.
    assert jnp.allclose(out, ref, atol=1e-1, rtol=1e-1), "mismatch vs reference"

    print("KERNEL_OK")
</pallas_src>

<mosaic_0001>
module attributes {stable_mosaic.version = 11 : i64} {
  func.func @_fused_block_kernel(%arg0: i32, %arg1: memref<1x16x16x4xf32, #tpu.memory_space<vmem>>, %arg2: memref<36x4xbf16, #tpu.memory_space<vmem>>, %arg3: memref<36x4xbf16, #tpu.memory_space<vmem>>, %arg4: memref<1x4xf32, #tpu.memory_space<vmem>>, %arg5: memref<1x16x16x4xf32, #tpu.memory_space<vmem>>, %arg6: memref<608x4xbf16, #tpu.memory_space<vmem>>) attributes {dimension_semantics = [#tpu.dimension_semantics<parallel>], iteration_bounds = array<i64: 2>, scalar_prefetch = 0 : i64, scratch_operands = 1 : i64, tpu.core_type = #tpu.core_type<tc>, window_params = [{transform_indices = @transform_0, window_bounds = array<i64: 1, 16, 16, 4>}, {pipeline_mode = #tpu.pipeline_mode<synchronous>, transform_indices = @transform_1, window_bounds = array<i64: 36, 4>}, {pipeline_mode = #tpu.pipeline_mode<synchronous>, transform_indices = @transform_2, window_bounds = array<i64: 36, 4>}, {pipeline_mode = #tpu.pipeline_mode<synchronous>, transform_indices = @transform_3, window_bounds = array<i64: 1, 4>}, {transform_indices = @transform_4, window_bounds = array<i64: 1, 16, 16, 4>}]} {
    %c0 = arith.constant 0 : index
    %c0_0 = arith.constant 0 : index
    %0 = vector.load %arg4[%c0, %c0_0] : memref<1x4xf32, #tpu.memory_space<vmem>>, vector<1x4xf32>
    %1 = tpu.iota {dimensions = array<i32: 0>} : vector<512x1xi32>
    %c32_i32 = arith.constant 32 : i32
    %c0_i32 = arith.constant 0 : i32
    %2 = arith.cmpi eq, %c32_i32, %c0_i32 : i32
    %c1_i32 = arith.constant 1 : i32
    %3 = arith.select %2, %c1_i32, %c32_i32 : i32
    %4 = vector.broadcast %3 : i32 to vector<512x1xi32>
    %5 = arith.remsi %1, %4 : vector<512x1xi32>
    %c0_i32_1 = arith.constant 0 : i32
    %6 = vector.broadcast %c0_i32_1 : i32 to vector<512x1xi32>
    %7 = arith.cmpi ne, %5, %6 : vector<512x1xi32>
    %c0_i32_2 = arith.constant 0 : i32
    %8 = vector.broadcast %c0_i32_2 : i32 to vector<512x1xi32>
    %9 = arith.cmpi slt, %5, %8 : vector<512x1xi32>
    %c0_i32_3 = arith.constant 0 : i32
    %10 = arith.cmpi slt, %3, %c0_i32_3 : i32
    %11 = vector.broadcast %10 : i1 to vector<512x1xi1>
    %12 = vector.broadcast %11 : vector<512x1xi1> to vector<512x1xi1>
    %13 = arith.xori %9, %12 : vector<512x1xi1>
    %14 = arith.andi %13, %7 : vector<512x1xi1>
    %15 = vector.broadcast %3 : i32 to vector<512x1xi32>
    %16 = arith.addi %5, %15 : vector<512x1xi32>
    %17 = arith.select %14, %16, %5 : vector<512x1xi1>, vector<512x1xi32>
    %c16_i32 = arith.constant 16 : i32
    %18 = vector.broadcast %c16_i32 : i32 to vector<512x1xi32>
    %19 = arith.cmpi slt, %17, %18 : vector<512x1xi32>
    %cst = arith.constant 0.000000e+00 : bf16
    %20 = vector.broadcast %cst : bf16 to vector<48x4xbf16>
    %c0_4 = arith.constant 0 : index
    %c0_5 = arith.constant 0 : index
    %21 = vector.load %arg6[%c0_4, %c0_5] : memref<608x4xbf16, #tpu.memory_space<vmem>>, vector<48x4xbf16>
    tpu.vector_store %arg6[%c0_4, %c0_5], %20 {strides = array<i32>} : memref<608x4xbf16, #tpu.memory_space<vmem>>, vector<48x4xbf16>,
    %cst_6 = arith.constant 0.000000e+00 : bf16
    %22 = vector.broadcast %cst_6 : bf16 to vector<16x4xbf16>
    %c64 = arith.constant 64 : index
    %c0_7 = arith.constant 0 : index
    %23 = vector.load %arg6[%c64, %c0_7] : memref<608x4xbf16, #tpu.memory_space<vmem>>, vector<16x4xbf16>
    tpu.vector_store %arg6[%c64, %c0_7], %22 {strides = array<i32>} : memref<608x4xbf16, #tpu.memory_space<vmem>>, vector<16x4xbf16>,
    %cst_8 = arith.constant 0.000000e+00 : bf16
    %24 = vector.broadcast %cst_8 : bf16 to vector<16x4xbf16>
    %c96 = arith.constant 96 : index
    %c0_9 = arith.constant 0 : index
    %25 = vector.load %arg6[%c96, %c0_9] : memref<608x4xbf16, #tpu.memory_space<vmem>>, vector<16x4xbf16>
    tpu.vector_store %arg6[%c96, %c0_9], %24 {strides = array<i32>} : memref<608x4xbf16, #tpu.memory_space<vmem>>, vector<16x4xbf16>,
    %cst_10 = arith.constant 0.000000e+00 : bf16
    %26 = vector.broadcast %cst_10 : bf16 to vector<16x4xbf16>
    %c128 = arith.constant 128 : index
    %c0_11 = arith.constant 0 : index
    %27 = vector.load %arg6[%c128, %c0_11] : memref<608x4xbf16, #tpu.memory_space<vmem>>, vector<16x4xbf16>
    tpu.vector_store %arg6[%c128, %c0_11], %26 {strides = array<i32>} : memref<608x4xbf16, #tpu.memory_space<vmem>>, vector<16x4xbf16>,
    %cst_12 = arith.constant 0.000000e+00 : bf16
    %28 = vector.broadcast %cst_12 : bf16 to vector<16x4xbf16>
    %c160 = arith.constant 160 : index
    %c0_13 = arith.constant 0 : index
    %29 = vector.load %arg6[%c160, %c0_13] : memref<608x4xbf16, #tpu.memory_space<vmem>>, vector<16x4xbf16>
    tpu.vector_store %arg6[%c160, %c0_13], %28 {strides = array<i32>} : memref<608x4xbf16, #tpu.memory_space<vmem>>, vector<16x4xbf16>,
    %cst_14 = arith.constant 0.000000e+00 : bf16
    %30 = vector.broadcast %cst_14 : bf16 to vector<16x4xbf16>
    %c192 = arith.constant 192 : index
    %c0_15 = arith.constant 0 : index
    %31 = vector.load %arg6[%c192, %c0_15] : memref<608x4xbf16, #tpu.memory_space<vmem>>, vector<16x4xbf16>
    tpu.vector_store %arg6[%c192, %c0_15], %30 {strides = array<i32>} : memref<608x4xbf16, #tpu.memory_space<vmem>>, vector<16x4xbf16>,
    %cst_16 = arith.constant 0.000000e+00 : bf16
    %32 = vector.broadcast %cst_16 : bf16 to vector<16x4xbf16>
    %c224 = arith.constant 224 : index
    %c0_17 = arith.constant 0 : index
    %33 = vector.load %arg6[%c224, %c0_17] : memref<608x4xbf16, #tpu.memory_space<vmem>>, vector<16x4xbf16>
    tpu.vector_store %arg6[%c224, %c0_17], %32 {strides = array<i32>} : memref<608x4xbf16, #tpu.memory_space<vmem>>, vector<16x4xbf16>,
    %cst_18 = arith.constant 0.000000e+00 : bf16
    %34 = vector.broadcast %cst_18 : bf16 to vector<16x4xbf16>
    %c256 = arith.constant 256 : index
    %c0_19 = arith.constant 0 : index
    %35 = vector.load %arg6[%c256, %c0_19] : memref<608x4xbf16, #tpu.memory_space<vmem>>, vector<16x4xbf16>
    tpu.vector_store %arg6[%c256, %c0_19], %34 {strides = array<i32>} : memref<608x4xbf16, #tpu.memory_space<vmem>>, vector<16x4xbf16>,
    %cst_20 = arith.constant 0.000000e+00 : bf16
    %36 = vector.broadcast %cst_20 : bf16 to vector<16x4xbf16>
    %c288 = arith.constant 288 : index
    %c0_21 = arith.constant 0 : index
    %37 = vector.load %arg6[%c288, %c0_21] : memref<608x4xbf16, #tpu.memory_space<vmem>>, vector<16x4xbf16>
    tpu.vector_store %arg6[%c288, %c0_21], %36 {strides = array<i32>} : memref<608x4xbf16, #tpu.memory_space<vmem>>, vector<16x4xbf16>,
    %cst_22 = arith.constant 0.000000e+00 : bf16
    %38 = vector.broadcast %cst_22 : bf16 to vector<16x4xbf16>
    %c320 = arith.constant 320 : index
    %c0_23 = arith.constant 0 : index
    %39 = vector.load %arg6[%c320, %c0_23] : memref<608x4xbf16, #tpu.memory_space<vmem>>, vector<16x4xbf16>
    tpu.vector_store %arg6[%c320, %c0_23], %38 {strides = array<i32>} : memref<608x4xbf16, #tpu.memory_space<vmem>>, vector<16x4xbf16>,
    %cst_24 = arith.constant 0.000000e+00 : bf16
    %40 = vector.broadcast %cst_24 : bf16 to vector<16x4xbf16>
    %c352 = arith.constant 352 : index
    %c0_25 = arith.constant 0 : index
    %41 = vector.load %arg6[%c352, %c0_25] : memref<608x4xbf16, #tpu.memory_space<vmem>>, vector<16x4xbf16>
    tpu.vector_store %arg6[%c352, %c0_25], %40 {strides = array<i32>} : memref<608x4xbf16, #tpu.memory_space<vmem>>, vector<16x4xbf16>,
    %cst_26 = arith.constant 0.000000e+00 : bf16
    %42 = vector.broadcast %cst_26 : bf16 to vector<16x4xbf16>
    %c384 = arith.constant 384 : index
    %c0_27 = arith.constant 0 : index
    %43 = vector.load %arg6[%c384, %c0_27] : memref<608x4xbf16, #tpu.memory_space<vmem>>, vector<16x4xbf16>
    tpu.vector_store %arg6[%c384, %c0_27], %42 {strides = array<i32>} : memref<608x4xbf16, #tpu.memory_space<vmem>>, vector<16x4xbf16>,
    %cst_28 = arith.constant 0.000000e+00 : bf16
    %44 = vector.broadcast %cst_28 : bf16 to vector<16x4xbf16>
    %c416 = arith.constant 416 : index
    %c0_29 = arith.constant 0 : index
    %45 = vector.load %arg6[%c416, %c0_29] : memref<608x4xbf16, #tpu.memory_space<vmem>>, vector<16x4xbf16>
    tpu.vector_store %arg6[%c416, %c0_29], %44 {strides = array<i32>} : memref<608x4xbf16, #tpu.memory_space<vmem>>, vector<16x4xbf16>,
    %cst_30 = arith.constant 0.000000e+00 : bf16
    %46 = vector.broadcast %cst_30 : bf16 to vector<16x4xbf16>
    %c448 = arith.constant 448 : index
    %c0_31 = arith.constant 0 : index
    %47 = vector.load %arg6[%c448, %c0_31] : memref<608x4xbf16, #tpu.memory_space<vmem>>, vector<16x4xbf16>
    tpu.vector_store %arg6[%c448, %c0_31], %46 {strides = array<i32>} : memref<608x4xbf16, #tpu.memory_space<vmem>>, vector<16x4xbf16>,
    %cst_32 = arith.constant 0.000000e+00 : bf16
    %48 = vector.broadcast %cst_32 : bf16 to vector<16x4xbf16>
    %c480 = arith.constant 480 : index
    %c0_33 = arith.constant 0 : index
    %49 = vector.load %arg6[%c480, %c0_33] : memref<608x4xbf16, #tpu.memory_space<vmem>>, vector<16x4xbf16>
    tpu.vector_store %arg6[%c480, %c0_33], %48 {strides = array<i32>} : memref<608x4xbf16, #tpu.memory_space<vmem>>, vector<16x4xbf16>,
    %cst_34 = arith.constant 0.000000e+00 : bf16
    %50 = vector.broadcast %cst_34 : bf16 to vector<16x4xbf16>
    %c512 = arith.constant 512 : index
    %c0_35 = arith.constant 0 : index
    %51 = vector.load %arg6[%c512, %c0_35] : memref<608x4xbf16, #tpu.memory_space<vmem>>, vector<16x4xbf16>
    tpu.vector_store %arg6[%c512, %c0_35], %50 {strides = array<i32>} : memref<608x4xbf16, #tpu.memory_space<vmem>>, vector<16x4xbf16>,
    %cst_36 = arith.constant 0.000000e+00 : bf16
    %52 = vector.broadcast %cst_36 : bf16 to vector<64x4xbf16>
    %c544 = arith.constant 544 : index
    %c0_37 = arith.constant 0 : index
    %53 = vector.load %arg6[%c544, %c0_37] : memref<608x4xbf16, #tpu.memory_space<vmem>>, vector<64x4xbf16>
    tpu.vector_store %arg6[%c544, %c0_37], %52 {strides = array<i32>} : memref<608x4xbf16, #tpu.memory_space<vmem>>, vector<64x4xbf16>,
    %c0_38 = arith.constant 0 : index
    %c0_39 = arith.constant 0 : index
    %c0_40 = arith.constant 0 : index
    %c0_41 = arith.constant 0 : index
    %54 = vector.load %arg1[%c0_38, %c0_39, %c0_40, %c0_41] : memref<1x16x16x4xf32, #tpu.memory_space<vmem>>, vector<1x1x16x4xf32>
    %55 = vector.shape_cast %54 : vector<1x1x16x4xf32> to vector<16x4xf32>
    %56 = arith.truncf %55 : vector<16x4xf32> to vector<16x4xbf16>
    %c48 = arith.constant 48 : index
    %c0_42 = arith.constant 0 : index
    %57 = vector.load %arg6[%c48, %c0_42] : memref<608x4xbf16, #tpu.memory_space<vmem>>, vector<16x4xbf16>
    tpu.vector_store %arg6[%c48, %c0_42], %56 {strides = array<i32>} : memref<608x4xbf16, #tpu.memory_space<vmem>>, vector<16x4xbf16>,
    %c0_43 = arith.constant 0 : index
    %c1 = arith.constant 1 : index
    %c0_44 = arith.constant 0 : index
    %c0_45 = arith.constant 0 : index
    %58 = vector.load %arg1[%c0_43, %c1, %c0_44, %c0_45] : memref<1x16x16x4xf32, #tpu.memory_space<vmem>>, vector<1x1x16x4xf32>
    %59 = vector.shape_cast %58 : vector<1x1x16x4xf32> to vector<16x4xf32>
    %60 = arith.truncf %59 : vector<16x4xf32> to vector<16x4xbf16>
    %c80 = arith.constant 80 : index
    %c0_46 = arith.constant 0 : index
    %61 = vector.load %arg6[%c80, %c0_46] : memref<608x4xbf16, #tpu.memory_space<vmem>>, vector<16x4xbf16>
    tpu.vector_store %arg6[%c80, %c0_46], %60 {strides = array<i32>} : memref<608x4xbf16, #tpu.memory_space<vmem>>, vector<16x4xbf16>,
    %c0_47 = arith.constant 0 : index
    %c2 = arith.constant 2 : index
    %c0_48 = arith.constant 0 : index
    %c0_49 = arith.constant 0 : index
    %62 = vector.load %arg1[%c0_47, %c2, %c0_48, %c0_49] : memref<1x16x16x4xf32, #tpu.memory_space<vmem>>, vector<1x1x16x4xf32>
    %63 = vector.shape_cast %62 : vector<1x1x16x4xf32> to vector<16x4xf32>
    %64 = arith.truncf %63 : vector<16x4xf32> to vector<16x4xbf16>
    %c112 = arith.constant 112 : index
    %c0_50 = arith.constant 0 : index
    %65 = vector.load %arg6[%c112, %c0_50] : memref<608x4xbf16, #tpu.memory_space<vmem>>, vector<16x4xbf16>
    tpu.vector_store %arg6[%c112, %c0_50], %64 {strides = array<i32>} : memref<608x4xbf16, #tpu.memory_space<vmem>>, vector<16x4xbf16>,
    %c0_51 = arith.constant 0 : index
    %c3 = arith.constant 3 : index
    %c0_52 = arith.constant 0 : index
    %c0_53 = arith.constant 0 : index
    %66 = vector.load %arg1[%c0_51, %c3, %c0_52, %c0_53] : memref<1x16x16x4xf32, #tpu.memory_space<vmem>>, vector<1x1x16x4xf32>
    %67 = vector.shape_cast %66 : vector<1x1x16x4xf32> to vector<16x4xf32>
    %68 = arith.truncf %67 : vector<16x4xf32> to vector<16x4xbf16>
    %c144 = arith.constant 144 : index
    %c0_54 = arith.constant 0 : index
    %69 = vector.load %arg6[%c144, %c0_54] : memref<608x4xbf16, #tpu.memory_space<vmem>>, vector<16x4xbf16>
    tpu.vector_store %arg6[%c144, %c0_54], %68 {strides = array<i32>} : memref<608x4xbf16, #tpu.memory_space<vmem>>, vector<16x4xbf16>,
    %c0_55 = arith.constant 0 : index
    %c4 = arith.constant 4 : index
    %c0_56 = arith.constant 0 : index
    %c0_57 = arith.constant 0 : index
    %70 = vector.load %arg1[%c0_55, %c4, %c0_56, %c0_57] : memref<1x16x16x4xf32, #tpu.memory_space<vmem>>, vector<1x1x16x4xf32>
    %71 = vector.shape_cast %70 : vector<1x1x16x4xf32> to vector<16x4xf32>
    %72 = arith.truncf %71 : vector<16x4xf32> to vector<16x4xbf16>
    %c176 = arith.constant 176 : index
    %c0_58 = arith.constant 0 : index
    %73 = vector.load %arg6[%c176, %c0_58] : memref<608x4xbf16, #tpu.memory_space<vmem>>, vector<16x4xbf16>
    tpu.vector_store %arg6[%c176, %c0_58], %72 {strides = array<i32>} : memref<608x4xbf16, #tpu.memory_space<vmem>>, vector<16x4xbf16>,
    %c0_59 = arith.constant 0 : index
    %c5 = arith.constant 5 : index
    %c0_60 = arith.constant 0 : index
    %c0_61 = arith.constant 0 : index
    %74 = vector.load %arg1[%c0_59, %c5, %c0_60, %c0_61] : memref<1x16x16x4xf32, #tpu.memory_space<vmem>>, vector<1x1x16x4xf32>
    %75 = vector.shape_cast %74 : vector<1x1x16x4xf32> to vector<16x4xf32>
    %76 = arith.truncf %75 : vector<16x4xf32> to vector<16x4xbf16>
    %c208 = arith.constant 208 : index
    %c0_62 = arith.constant 0 : index
    %77 = vector.load %arg6[%c208, %c0_62] : memref<608x4xbf16, #tpu.memory_space<vmem>>, vector<16x4xbf16>
    tpu.vector_store %arg6[%c208, %c0_62], %76 {strides = array<i32>} : memref<608x4xbf16, #tpu.memory_space<vmem>>, vector<16x4xbf16>,
    %c0_63 = arith.constant 0 : index
    %c6 = arith.constant 6 : index
    %c0_64 = arith.constant 0 : index
    %c0_65 = arith.constant 0 : index
    %78 = vector.load %arg1[%c0_63, %c6, %c0_64, %c0_65] : memref<1x16x16x4xf32, #tpu.memory_space<vmem>>, vector<1x1x16x4xf32>
    %79 = vector.shape_cast %78 : vector<1x1x16x4xf32> to vector<16x4xf32>
    %80 = arith.truncf %79 : vector<16x4xf32> to vector<16x4xbf16>
    %c240 = arith.constant 240 : index
    %c0_66 = arith.constant 0 : index
    %81 = vector.load %arg6[%c240, %c0_66] : memref<608x4xbf16, #tpu.memory_space<vmem>>, vector<16x4xbf16>
    tpu.vector_store %arg6[%c240, %c0_66], %80 {strides = array<i32>} : memref<608x4xbf16, #tpu.memory_space<vmem>>, vector<16x4xbf16>,
    %c0_67 = arith.constant 0 : index
    %c7 = arith.constant 7 : index
    %c0_68 = arith.constant 0 : index
    %c0_69 = arith.constant 0 : index
    %82 = vector.load %arg1[%c0_67, %c7, %c0_68, %c0_69] : memref<1x16x16x4xf32, #tpu.memory_space<vmem>>, vector<1x1x16x4xf32>
    %83 = vector.shape_cast %82 : vector<1x1x16x4xf32> to vector<16x4xf32>
    %84 = arith.truncf %83 : vector<16x4xf32> to vector<16x4xbf16>
    %c272 = arith.constant 272 : index
    %c0_70 = arith.constant 0 : index
    %85 = vector.load %arg6[%c272, %c0_70] : memref<608x4xbf16, #tpu.memory_space<vmem>>, vector<16x4xbf16>
    tpu.vector_store %arg6[%c272, %c0_70], %84 {strides = array<i32>} : memref<608x4xbf16, #tpu.memory_space<vmem>>, vector<16x4xbf16>,
    %c0_71 = arith.constant 0 : index
    %c8 = arith.constant 8 : index
    %c0_72 = arith.constant 0 : index
    %c0_73 = arith.constant 0 : index
    %86 = vector.load %arg1[%c0_71, %c8, %c0_72, %c0_73] : memref<1x16x16x4xf32, #tpu.memory_space<vmem>>, vector<1x1x16x4xf32>
    %87 = vector.shape_cast %86 : vector<1x1x16x4xf32> to vector<16x4xf32>
    %88 = arith.truncf %87 : vector<16x4xf32> to vector<16x4xbf16>
    %c304 = arith.constant 304 : index
    %c0_74 = arith.constant 0 : index
    %89 = vector.load %arg6[%c304, %c0_74] : memref<608x4xbf16, #tpu.memory_space<vmem>>, vector<16x4xbf16>
    tpu.vector_store %arg6[%c304, %c0_74], %88 {strides = array<i32>} : memref<608x4xbf16, #tpu.memory_space<vmem>>, vector<16x4xbf16>,
    %c0_75 = arith.constant 0 : index
    %c9 = arith.constant 9 : index
    %c0_76 = arith.constant 0 : index
    %c0_77 = arith.constant 0 : index
    %90 = vector.load %arg1[%c0_75, %c9, %c0_76, %c0_77] : memref<1x16x16x4xf32, #tpu.memory_space<vmem>>, vector<1x1x16x4xf32>
    %91 = vector.shape_cast %90 : vector<1x1x16x4xf32> to vector<16x4xf32>
    %92 = arith.truncf %91 : vector<16x4xf32> to vector<16x4xbf16>
    %c336 = arith.constant 336 : index
    %c0_78 = arith.constant 0 : index
    %93 = vector.load %arg6[%c336, %c0_78] : memref<608x4xbf16, #tpu.memory_space<vmem>>, vector<16x4xbf16>
    tpu.vector_store %arg6[%c336, %c0_78], %92 {strides = array<i32>} : memref<608x4xbf16, #tpu.memory_space<vmem>>, vector<16x4xbf16>,
    %c0_79 = arith.constant 0 : index
    %c10 = arith.constant 10 : index
    %c0_80 = arith.constant 0 : index
    %c0_81 = arith.constant 0 : index
    %94 = vector.load %arg1[%c0_79, %c10, %c0_80, %c0_81] : memref<1x16x16x4xf32, #tpu.memory_space<vmem>>, vector<1x1x16x4xf32>
    %95 = vector.shape_cast %94 : vector<1x1x16x4xf32> to vector<16x4xf32>
    %96 = arith.truncf %95 : vector<16x4xf32> to vector<16x4xbf16>
    %c368 = arith.constant 368 : index
    %c0_82 = arith.constant 0 : index
    %97 = vector.load %arg6[%c368, %c0_82] : memref<608x4xbf16, #tpu.memory_space<vmem>>, vector<16x4xbf16>
    tpu.vector_store %arg6[%c368, %c0_82], %96 {strides = array<i32>} : memref<608x4xbf16, #tpu.memory_space<vmem>>, vector<16x4xbf16>,
    %c0_83 = arith.constant 0 : index
    %c11 = arith.constant 11 : index
    %c0_84 = arith.constant 0 : index
    %c0_85 = arith.constant 0 : index
    %98 = vector.load %arg1[%c0_83, %c11, %c0_84, %c0_85] : memref<1x16x16x4xf32, #tpu.memory_space<vmem>>, vector<1x1x16x4xf32>
    %99 = vector.shape_cast %98 : vector<1x1x16x4xf32> to vector<16x4xf32>
    %100 = arith.truncf %99 : vector<16x4xf32> to vector<16x4xbf16>
    %c400 = arith.constant 400 : index
    %c0_86 = arith.constant 0 : index
    %101 = vector.load %arg6[%c400, %c0_86] : memref<608x4xbf16, #tpu.memory_space<vmem>>, vector<16x4xbf16>
    tpu.vector_store %arg6[%c400, %c0_86], %100 {strides = array<i32>} : memref<608x4xbf16, #tpu.memory_space<vmem>>, vector<16x4xbf16>,
    %c0_87 = arith.constant 0 : index
    %c12 = arith.constant 12 : index
    %c0_88 = arith.constant 0 : index
    %c0_89 = arith.constant 0 : index
    %102 = vector.load %arg1[%c0_87, %c12, %c0_88, %c0_89] : memref<1x16x16x4xf32, #tpu.memory_space<vmem>>, vector<1x1x16x4xf32>
    %103 = vector.shape_cast %102 : vector<1x1x16x4xf32> to vector<16x4xf32>
    %104 = arith.truncf %103 : vector<16x4xf32> to vector<16x4xbf16>
    %c432 = arith.constant 432 : index
    %c0_90 = arith.constant 0 : index
    %105 = vector.load %arg6[%c432, %c0_90] : memref<608x4xbf16, #tpu.memory_space<vmem>>, vector<16x4xbf16>
    tpu.vector_store %arg6[%c432, %c0_90], %104 {strides = array<i32>} : memref<608x4xbf16, #tpu.memory_space<vmem>>, vector<16x4xbf16>,
    %c0_91 = arith.constant 0 : index
    %c13 = arith.constant 13 : index
    %c0_92 = arith.constant 0 : index
    %c0_93 = arith.constant 0 : index
    %106 = vector.load %arg1[%c0_91, %c13, %c0_92, %c0_93] : memref<1x16x16x4xf32, #tpu.memory_space<vmem>>, vector<1x1x16x4xf32>
    %107 = vector.shape_cast %106 : vector<1x1x16x4xf32> to vector<16x4xf32>
    %108 = arith.truncf %107 : vector<16x4xf32> to vector<16x4xbf16>
    %c464 = arith.constant 464 : index
    %c0_94 = arith.constant 0 : index
    %109 = vector.load %arg6[%c464, %c0_94] : memref<608x4xbf16, #tpu.memory_space<vmem>>, vector<16x4xbf16>
    tpu.vector_store %arg6[%c464, %c0_94], %108 {strides = array<i32>} : memref<608x4xbf16, #tpu.memory_space<vmem>>, vector<16x4xbf16>,
    %c0_95 = arith.constant 0 : index
    %c14 = arith.constant 14 : index
    %c0_96 = arith.constant 0 : index
    %c0_97 = arith.constant 0 : index
    %110 = vector.load %arg1[%c0_95, %c14, %c0_96, %c0_97] : memref<1x16x16x4xf32, #tpu.memory_space<vmem>>, vector<1x1x16x4xf32>
    %111 = vector.shape_cast %110 : vector<1x1x16x4xf32> to vector<16x4xf32>
    %112 = arith.truncf %111 : vector<16x4xf32> to vector<16x4xbf16>
    %c496 = arith.constant 496 : index
    %c0_98 = arith.constant 0 : index
    %113 = vector.load %arg6[%c496, %c0_98] : memref<608x4xbf16, #tpu.memory_space<vmem>>, vector<16x4xbf16>
    tpu.vector_store %arg6[%c496, %c0_98], %112 {strides = array<i32>} : memref<608x4xbf16, #tpu.memory_space<vmem>>, vector<16x4xbf16>,
    %c0_99 = arith.constant 0 : index
    %c15 = arith.constant 15 : index
    %c0_100 = arith.constant 0 : index
    %c0_101 = arith.constant 0 : index
    %114 = vector.load %arg1[%c0_99, %c15, %c0_100, %c0_101] : memref<1x16x16x4xf32, #tpu.memory_space<vmem>>, vector<1x1x16x4xf32>
    %115 = vector.shape_cast %114 : vector<1x1x16x4xf32> to vector<16x4xf32>
    %116 = arith.truncf %115 : vector<16x4xf32> to vector<16x4xbf16>
    %c528 = arith.constant 528 : index
    %c0_102 = arith.constant 0 : index
    %117 = vector.load %arg6[%c528, %c0_102] : memref<608x4xbf16, #tpu.memory_space<vmem>>, vector<16x4xbf16>
    tpu.vector_store %arg6[%c528, %c0_102], %116 {strides = array<i32>} : memref<608x4xbf16, #tpu.memory_space<vmem>>, vector<16x4xbf16>,
    %c15_103 = arith.constant 15 : index
    %c0_104 = arith.constant 0 : index
    %118 = vector.load %arg6[%c15_103, %c0_104] : memref<608x4xbf16, #tpu.memory_space<vmem>>, vector<512x4xbf16>
    %c16 = arith.constant 16 : index
    %c0_105 = arith.constant 0 : index
    %119 = vector.load %arg6[%c16, %c0_105] : memref<608x4xbf16, #tpu.memory_space<vmem>>, vector<512x4xbf16>
    %c17 = arith.constant 17 : index
    %c0_106 = arith.constant 0 : index
    %120 = vector.load %arg6[%c17, %c0_106] : memref<608x4xbf16, #tpu.memory_space<vmem>>, vector<512x4xbf16>
    %c47 = arith.constant 47 : index
    %c0_107 = arith.constant 0 : index
    %121 = vector.load %arg6[%c47, %c0_107] : memref<608x4xbf16, #tpu.memory_space<vmem>>, vector<512x4xbf16>
    %c48_108 = arith.constant 48 : index
    %c0_109 = arith.constant 0 : index
    %122 = vector.load %arg6[%c48_108, %c0_109] : memref<608x4xbf16, #tpu.memory_space<vmem>>, vector<512x4xbf16>
    %c49 = arith.constant 49 : index
    %c0_110 = arith.constant 0 : index
    %123 = vector.load %arg6[%c49, %c0_110] : memref<608x4xbf16, #tpu.memory_space<vmem>>, vector<512x4xbf16>
    %c79 = arith.constant 79 : index
    %c0_111 = arith.constant 0 : index
    %124 = vector.load %arg6[%c79, %c0_111] : memref<608x4xbf16, #tpu.memory_space<vmem>>, vector<512x4xbf16>
    %c80_112 = arith.constant 80 : index
    %c0_113 = arith.constant 0 : index
    %125 = vector.load %arg6[%c80_112, %c0_113] : memref<608x4xbf16, #tpu.memory_space<vmem>>, vector<512x4xbf16>
    %c81 = arith.constant 81 : index
    %c0_114 = arith.constant 0 : index
    %126 = vector.load %arg6[%c81, %c0_114] : memref<608x4xbf16, #tpu.memory_space<vmem>>, vector<512x4xbf16>
    %127 = tpu.concatenate %118, %119, %120, %121, %122, %123, %124, %125, %126 in 1 : vector<512x4xbf16>, vector<512x4xbf16>, vector<512x4xbf16>, vector<512x4xbf16>, vector<512x4xbf16>, vector<512x4xbf16>, vector<512x4xbf16>, vector<512x4xbf16>, vector<512x4xbf16> -> vector<512x36xbf16>
    %c0_115 = arith.constant 0 : index
    %c0_116 = arith.constant 0 : index
    %128 = vector.load %arg2[%c0_115, %c0_116] : memref<36x4xbf16, #tpu.memory_space<vmem>>, vector<36x4xbf16>
    %cst_117 = arith.constant dense<0.000000e+00> : vector<512x4xf32>
    %129 = tpu.matmul %127, %128, %cst_117 {dimension_numbers = #tpu.dot_dimension_numbers<[1], [0], [0], [1], [0, 0, 1, 1], [], []>} : vector<512x36xbf16>, vector<36x4xbf16>, vector<512x4xf32> -> vector<512x4xf32>
    %130 = vector.broadcast %0 : vector<1x4xf32> to vector<512x4xf32>
    %131 = arith.addf %129, %130 : vector<512x4xf32>
    %cst_118 = arith.constant 0.000000e+00 : f32
    %132 = vector.broadcast %cst_118 : f32 to vector<512x4xf32>
    %133 = arith.maximumf %131, %132 : vector<512x4xf32>
    %cst_119 = arith.constant 0.000000e+00 : f32
    %134 = vector.shape_cast %19 : vector<512x1xi1> to vector<512x1xi1>
    %135 = vector.broadcast %134 : vector<512x1xi1> to vector<512x4xi1>
    %136 = vector.broadcast %cst_119 : f32 to vector<512x4xf32>
    %137 = arith.select %135, %133, %136 : vector<512x4xi1>, vector<512x4xf32>
    %138 = arith.truncf %137 : vector<512x4xf32> to vector<512x4xbf16>
    %c48_120 = arith.constant 48 : index
    %c0_121 = arith.constant 0 : index
    %139 = vector.load %arg6[%c48_120, %c0_121] : memref<608x4xbf16, #tpu.memory_space<vmem>>, vector<512x4xbf16>
    tpu.vector_store %arg6[%c48_120, %c0_121], %138 {strides = array<i32>} : memref<608x4xbf16, #tpu.memory_space<vmem>>, vector<512x4xbf16>,
    %c15_122 = arith.constant 15 : index
    %c0_123 = arith.constant 0 : index
    %140 = vector.load %arg6[%c15_122, %c0_123] : memref<608x4xbf16, #tpu.memory_space<vmem>>, vector<512x4xbf16>
    %c16_124 = arith.constant 16 : index
    %c0_125 = arith.constant 0 : index
    %141 = vector.load %arg6[%c16_124, %c0_125] : memref<608x4xbf16, #tpu.memory_space<vmem>>, vector<512x4xbf16>
    %c17_126 = arith.constant 17 : index
    %c0_127 = arith.constant 0 : index
    %142 = vector.load %arg6[%c17_126, %c0_127] : memref<608x4xbf16, #tpu.memory_space<vmem>>, vector<512x4xbf16>
    %c47_128 = arith.constant 47 : index
    %c0_129 = arith.constant 0 : index
    %143 = vector.load %arg6[%c47_128, %c0_129] : memref<608x4xbf16, #tpu.memory_space<vmem>>, vector<512x4xbf16>
    %c48_130 = arith.constant 48 : index
    %c0_131 = arith.constant 0 : index
    %144 = vector.load %arg6[%c48_130, %c0_131] : memref<608x4xbf16, #tpu.memory_space<vmem>>, vector<512x4xbf16>
    %c49_132 = arith.constant 49 : index
    %c0_133 = arith.constant 0 : index
    %145 = vector.load %arg6[%c49_132, %c0_133] : memref<608x4xbf16, #tpu.memory_space<vmem>>, vector<512x4xbf16>
    %c79_134 = arith.constant 79 : index
    %c0_135 = arith.constant 0 : index
    %146 = vector.load %arg6[%c79_134, %c0_135] : memref<608x4xbf16, #tpu.memory_space<vmem>>, vector<512x4xbf16>
    %c80_136 = arith.constant 80 : index
    %c0_137 = arith.constant 0 : index
    %147 = vector.load %arg6[%c80_136, %c0_137] : memref<608x4xbf16, #tpu.memory_space<vmem>>, vector<512x4xbf16>
    %c81_138 = arith.constant 81 : index
    %c0_139 = arith.constant 0 : index
    %148 = vector.load %arg6[%c81_138, %c0_139] : memref<608x4xbf16, #tpu.memory_space<vmem>>, vector<512x4xbf16>
    %149 = tpu.concatenate %140, %141, %142, %143, %144, %145, %146, %147, %148 in 1 : vector<512x4xbf16>, vector<512x4xbf16>, vector<512x4xbf16>, vector<512x4xbf16>, vector<512x4xbf16>, vector<512x4xbf16>, vector<512x4xbf16>, vector<512x4xbf16>, vector<512x4xbf16> -> vector<512x36xbf16>
    %c0_140 = arith.constant 0 : index
    %c0_141 = arith.constant 0 : index
    %150 = vector.load %arg3[%c0_140, %c0_141] : memref<36x4xbf16, #tpu.memory_space<vmem>>, vector<36x4xbf16>
    %cst_142 = arith.constant dense<0.000000e+00> : vector<512x4xf32>
    %151 = tpu.matmul %149, %150, %cst_142 {dimension_numbers = #tpu.dot_dimension_numbers<[1], [0], [0], [1], [0, 0, 1, 1], [], []>} : vector<512x36xbf16>, vector<36x4xbf16>, vector<512x4xf32> -> vector<512x4xf32>
    %152 = vector.broadcast %0 : vector<1x4xf32> to vector<512x4xf32>
    %153 = arith.addf %151, %152 : vector<512x4xf32>
    %154 = vector.shape_cast %153 : vector<512x4xf32> to vector<16x32x4xf32>
    %155 = vector.extract_strided_slice %154 {offsets = [0, 0, 0], sizes = [16, 16, 4], strides = [1, 1, 1]} : vector<16x32x4xf32> to vector<16x16x4xf32>
    %c0_143 = arith.constant 0 : index
    %c0_144 = arith.constant 0 : index
    %c0_145 = arith.constant 0 : index
    %c0_146 = arith.constant 0 : index
    %156 = vector.load %arg1[%c0_143, %c0_144, %c0_145, %c0_146] : memref<1x16x16x4xf32, #tpu.memory_space<vmem>>, vector<1x16x16x4xf32>
    %157 = vector.shape_cast %156 : vector<1x16x16x4xf32> to vector<16x16x4xf32>
    %158 = arith.addf %155, %157 : vector<16x16x4xf32>
    %cst_147 = arith.constant 0.000000e+00 : f32
    %159 = vector.broadcast %cst_147 : f32 to vector<16x16x4xf32>
    %160 = arith.maximumf %158, %159 : vector<16x16x4xf32>
    %c0_148 = arith.constant 0 : index
    %c0_149 = arith.constant 0 : index
    %c0_150 = arith.constant 0 : index
    %c0_151 = arith.constant 0 : index
    %161 = vector.load %arg5[%c0_148, %c0_149, %c0_150, %c0_151] : memref<1x16x16x4xf32, #tpu.memory_space<vmem>>, vector<1x16x16x4xf32>
    %162 = vector.shape_cast %161 : vector<1x16x16x4xf32> to vector<16x16x4xf32>
    %163 = vector.shape_cast %160 : vector<16x16x4xf32> to vector<1x16x16x4xf32>
    tpu.vector_store %arg5[%c0_148, %c0_149, %c0_150, %c0_151], %163 {strides = array<i32>} : memref<1x16x16x4xf32, #tpu.memory_space<vmem>>, vector<1x16x16x4xf32>,
    return
  }
  func.func @transform_0(%arg0: i32) -> (i32, i32, i32, i32) {
    %c0_i32 = arith.constant 0 : i32
    %c0_i32_0 = arith.constant 0 : i32
    %c0_i32_1 = arith.constant 0 : i32
    %c0_i32_2 = arith.constant 0 : i32
    return %arg0, %c0_i32, %c0_i32_0, %c0_i32_1 : i32, i32, i32, i32
  }
  func.func @transform_1(%arg0: i32) -> (i32, i32) {
    %c0_i32 = arith.constant 0 : i32
    %c0_i32_0 = arith.constant 0 : i32
    %c0_i32_1 = arith.constant 0 : i32
    return %c0_i32, %c0_i32_0 : i32, i32
  }
  func.func @transform_2(%arg0: i32) -> (i32, i32) {
    %c0_i32 = arith.constant 0 : i32
    %c0_i32_0 = arith.constant 0 : i32
    %c0_i32_1 = arith.constant 0 : i32
    return %c0_i32, %c0_i32_0 : i32, i32
  }
  func.func @transform_3(%arg0: i32) -> (i32, i32) {
    %c0_i32 = arith.constant 0 : i32
    %c0_i32_0 = arith.constant 0 : i32
    %c0_i32_1 = arith.constant 0 : i32
    return %c0_i32, %c0_i32_0 : i32, i32
  }
  func.func @transform_4(%arg0: i32) -> (i32, i32, i32, i32) {
    %c0_i32 = arith.constant 0 : i32
    %c0_i32_0 = arith.constant 0 : i32
    %c0_i32_1 = arith.constant 0 : i32
    %c0_i32_2 = arith.constant 0 : i32
    return %arg0, %c0_i32, %c0_i32_0, %c0_i32_1 : i32, i32, i32, i32
  }
}

</mosaic_0001>

<llo_original>
// kernel: block_forward.1
$region0: #{block_forward.1}
  #allocation0 [shape = 'u32[]', space=smem, size = 0x4, offset = 0x4, fixed_abs, tag = 'smem constant byte address 0x4 - core index']
  #allocation1 [shape = 'u32[144,128]{1,0:T(1,128)}', space=vmem, size = 0x12000, scoped, tag = 'internal scratch']
  #allocation2 [shape = 'bf16[608,4]{1,0:T(8,128)(2,1)}', space=vmem, size = 0x26000, scoped, tag = 'scratch operand']
  %s0 = inlined_call_operand.vmem [shape: f32[2,16,16,4], index: 0, kind: input, shape index: {}]
  %s1 = inlined_call_operand.vmem [shape: bf16[36,4], index: 1, kind: input, shape index: {}]
  %s2 = inlined_call_operand.vmem [shape: bf16[36,4], index: 2, kind: input, shape index: {}]
  %s3 = inlined_call_operand.vmem [shape: f32[1,4], index: 3, kind: input, shape index: {}]
  %s4 = inlined_call_operand.vmem [shape: f32[2,16,16,4], index: 4, kind: output, shape index: {}]
  %s5 = sld [smem:[#allocation0]]
  $region49: #{block_forward.1} parent=0
    _
  %s7 = ssub.s32 1, %s5
  %s8 = scalar_select 0, %s7, %s5
  loop: start=0, step=1, limit=4
  $region2: #{block_forward.1} parent=0 // loop_pre_header
    _
  $region3: #{block_forward.1} parent=0 // loop_header
    %s10 = sphi 0, %s14
    %p11 = scmp.ge.s32.totalorder %s10, 4
    %s20 = sphi 0, %s22
    %s23 = sphi 0, %s20
    %s24 = sphi 0, %s23
    %s40 = sphi 0, %s24
    %s44 = sphi 0, %s44
    %s46 = sphi 0, %s44
    %s47 = sphi 0, %s46
    %s61 = sphi 0, %s47
    %s65 = sphi 0, %s65
    %s67 = sphi 0, %s65
    %s68 = sphi 0, %s67
    %s82 = sphi 0, %s68
    %s86 = sphi 0, %s86
    %s88 = sphi 0, %s86
    %s89 = sphi 0, %s88
    %s103 = sphi 0, %s89
    %s109 = sphi 0, %s111
    %s112 = sphi 0, %s109
    %s113 = sphi 0, %s112
    %s129 = sphi 0, %s113
  $region4: #{block_forward.1} parent=0 // loop_header_branch
    %13 = sbr.rel (%p11) target = $region8
  $region5: #{block_forward.1} parent=0 // loop_body
    %s15 = ssub.s32 %s10, 1
    %s16 = ssub.s32 %s10, 2
    %s17 = sadd.s32 %s10, 1
    %s18 = ssub.s32 %s10, %s17
    %p19 = scmp.eq.s32.totalorder %s18, 0
    %s21 = sadd.s32 %s20, 1
    %s22 = scalar_select %p19, %s20, %s21
    %p25 = pneg %p19
    %p26 = scmp.eq.s32.totalorder %s10, 1
    %p27 = por %p25, %p26
    %p28 = scmp.ne.s32.totalorder %s20, %s23
    %p29 = scmp.eq.s32.totalorder %s10, 0
    %p30 = por %p28, %p29
    %p31 = scmp.ne.s32.totalorder %s20, %s23
    %p32 = scmp.eq.s32.totalorder %s15, 1
    %p33 = por %p31, %p32
    %p34 = scmp.ne.s32.totalorder %s23, %s24
    %p35 = scmp.eq.s32.totalorder %s15, 0
    %p36 = por %p34, %p35
    %p37 = scmp.ne.s32.totalorder %s23, %s24
    %p38 = scmp.eq.s32.totalorder %s16, 1
    %p39 = por %p37, %p38
    %p41 = scmp.ne.s32.totalorder %s24, %s40
    %p42 = scmp.eq.s32.totalorder %s16, 0
    %p43 = por %p41, %p42
    %s45 = sadd.s32 %s44, 1
    %p48 = scmp.eq.s32.totalorder %s10, 1
    %p49 = scmp.ne.s32.totalorder %s44, %s46
    %p50 = scmp.eq.s32.totalorder %s10, 0
    %p51 = por %p49, %p50
    %p52 = scmp.ne.s32.totalorder %s44, %s46
    %p53 = scmp.eq.s32.totalorder %s15, 1
    %p54 = por %p52, %p53
    %p55 = scmp.ne.s32.totalorder %s46, %s47
    %p56 = scmp.eq.s32.totalorder %s15, 0
    %p57 = por %p55, %p56
    %p58 = scmp.ne.s32.totalorder %s46, %s47
    %p59 = scmp.eq.s32.totalorder %s16, 1
    %p60 = por %p58, %p59
    %p62 = scmp.ne.s32.totalorder %s47, %s61
    %p63 = scmp.eq.s32.totalorder %s16, 0
    %p64 = por %p62, %p63
    %s66 = sadd.s32 %s65, 1
    %p69 = scmp.eq.s32.totalorder %s10, 1
    %p70 = scmp.ne.s32.totalorder %s65, %s67
    %p71 = scmp.eq.s32.totalorder %s10, 0
    %p72 = por %p70, %p71
    %p73 = scmp.ne.s32.totalorder %s65, %s67
    %p74 = scmp.eq.s32.totalorder %s15, 1
    %p75 = por %p73, %p74
    %p76 = scmp.ne.s32.totalorder %s67, %s68
    %p77 = scmp.eq.s32.totalorder %s15, 0
    %p78 = por %p76, %p77
    %p79 = scmp.ne.s32.totalorder %s67, %s68
    %p80 = scmp.eq.s32.totalorder %s16, 1
    %p81 = por %p79, %p80
    %p83 = scmp.ne.s32.totalorder %s68, %s82
    %p84 = scmp.eq.s32.totalorder %s16, 0
    %p85 = por %p83, %p84
    %s87 = sadd.s32 %s86, 1
    %p90 = scmp.eq.s32.totalorder %s10, 1
    %p91 = scmp.ne.s32.totalorder %s86, %s88
    %p92 = scmp.eq.s32.totalorder %s10, 0
    %p93 = por %p91, %p92
    %p94 = scmp.ne.s32.totalorder %s86, %s88
    %p95 = scmp.eq.s32.totalorder %s15, 1
    %p96 = por %p94, %p95
    %p97 = scmp.ne.s32.totalorder %s88, %s89
    %p98 = scmp.eq.s32.totalorder %s15, 0
    %p99 = por %p97, %p98
    %p100 = scmp.ne.s32.totalorder %s88, %s89
    %p101 = scmp.eq.s32.totalorder %s16, 1
    %p102 = por %p100, %p101
    %p104 = scmp.ne.s32.totalorder %s89, %s103
    %p105 = scmp.eq.s32.totalorder %s16, 0
    %p106 = por %p104, %p105
    %s107 = ssub.s32 %s10, %s17
    %p108 = scmp.eq.s32.totalorder %s107, 0
    %s110 = sadd.s32 %s109, 1
    %s111 = scalar_select %p108, %s109, %s110
    %p114 = pneg %p108
    %p115 = scmp.eq.s32.totalorder %s10, 1
    %p116 = por %p114, %p115
    %p117 = scmp.ne.s32.totalorder %s109, %s112
    %p118 = scmp.eq.s32.totalorder %s10, 0
    %p119 = por %p117, %p118
    %p120 = scmp.ne.s32.totalorder %s109, %s112
    %p121 = scmp.eq.s32.totalorder %s15, 1
    %p122 = por %p120, %p121
    %p123 = scmp.ne.s32.totalorder %s112, %s113
    %p124 = scmp.eq.s32.totalorder %s15, 0
    %p125 = por %p123, %p124
    %p126 = scmp.ne.s32.totalorder %s112, %s113
    %p127 = scmp.eq.s32.totalorder %s16, 1
    %p128 = por %p126, %p127
    %p130 = scmp.ne.s32.totalorder %s113, %s129
    %p131 = scmp.eq.s32.totalorder %s16, 0
    %p132 = por %p130, %p131
    %p133 = scmp.le.s32.totalorder 1, %s10
    %p134 = scmp.lt.s32.totalorder %s10, 3
    %p135 = pnand %p133, %p134
    %p136 = pneg %p135
    // Predicated region
    $region9: #{block_forward.1} parent=5 // pred_check
      _
    $region10: #{block_forward.1} parent=5 // pred_check_branch
      %138 = sbr.rel (%p135) target = $region12
    $region11: #{block_forward.1} parent=5 // pred_region
      %s139 = ssub.s32 %s10, 1
      // Predicated region
      $region13: #{block_forward.1} parent=11 // pred_check
        %p140 = pneg %p57
      $region14: #{block_forward.1} parent=11 // pred_check_branch
        %142 = sbr.rel (%p140) target = $region16
      $region15: #{block_forward.1} parent=11 // pred_region
        _
      $region16: #{block_forward.1} parent=11 // pred_fallthru
        _
      // Predicated region
      $region17: #{block_forward.1} parent=11 // pred_check
        %p143 = pneg %p78
      $region18: #{block_forward.1} parent=11 // pred_check_branch
        %145 = sbr.rel (%p143) target = $region20
      $region19: #{block_forward.1} parent=11 // pred_region
        _
      $region20: #{block_forward.1} parent=11 // pred_fallthru
        _
      // Predicated region
      $region21: #{block_forward.1} parent=11 // pred_check
        %p146 = pneg %p99
      $region22: #{block_forward.1} parent=11 // pred_check_branch
        %148 = sbr.rel (%p146) target = $region24
      $region23: #{block_forward.1} parent=11 // pred_region
        _
      $region24: #{block_forward.1} parent=11 // pred_fallthru
        _
    $region12: #{block_forward.1} parent=5 // pred_fallthru
      _
    %p149 = scmp.lt.s32.totalorder %s10, 2
    // Predicated region
    $region25: #{block_forward.1} parent=5 // pred_check
      %p150 = pneg %p149
    $region26: #{block_forward.1} parent=5 // pred_check_branch
      %152 = sbr.rel (%p150) target = $region28
    $region27: #{block_forward.1} parent=5 // pred_region
      // Predicated region
      $region29: #{block_forward.1} parent=27 // pred_check
        %p153 = pneg %p30
      $region30: #{block_forward.1} parent=27 // pred_check_branch
        %155 = sbr.rel (%p153) target = $region32
      $region31: #{block_forward.1} parent=27 // pred_region
        %p156 = scmp.lt.s32.totalorder %s10, 1
        %s157 = scalar_select %p156, %s10, 1
        %s158 = smul.addr %s157, 32
        %s159 = smul.addr %s158, 8
        %s160 = scalar_lea.vmem %s0, %s159
      $region32: #{block_forward.1} parent=27 // pred_fallthru
        _
    $region28: #{block_forward.1} parent=5 // pred_fallthru
      _
    %p161 = scmp.le.s32.totalorder 1, %s10
    %p162 = scmp.lt.s32.totalorder %s10, 3
    %p163 = pnand %p161, %p162
    %p164 = pneg %p163
    // Predicated region
    $region33: #{block_forward.1} parent=5 // pred_check
      _
    $region34: #{block_forward.1} parent=5 // pred_check_branch
      %166 = sbr.rel (%p163) target = $region36
    $region35: #{block_forward.1} parent=5 // pred_region
      %s167 = ssub.s32 %s10, 1
      %p168 = scmp.lt.s32.totalorder %s15, 1
      %s169 = scalar_select %p168, %s15, 1
      %s170 = smul.addr %s169, 32
      %s171 = smul.addr %s170, 8
      %s172 = scalar_lea.vmem %s0, %s171
      %p173 = pneg %p36
      %p174 = pneg %p33
      %p175 = pneg %p57
      %p176 = pneg %p54
      %p177 = pneg %p78
      %p178 = pneg %p75
      %p179 = pneg %p99
      %p180 = pneg %p96
      %p181 = pneg %p125
      %p182 = pneg %p122
      %p183 = scmp.lt.s32.totalorder %s15, 1
      %s184 = scalar_select %p183, %s15, 1
      %s185 = smul.addr %s184, 32
      %s186 = smul.addr %s185, 8
      %s187 = scalar_lea.vmem %s4, %s186
      %p188 = scmp.lt.s32.totalorder %s15, 1
      %s189 = scalar_select %p188, %s15, 1
      %s190 = smul.addr %s189, 32
      %s191 = smul.addr %s190, 8
      %s192 = scalar_lea.vmem %s0, %s191
      %p193 = scmp.lt.s32.totalorder %s15, 1
      %s194 = scalar_select %p193, %s15, 1
      %s195 = smul.addr %s194, 32
      %s196 = smul.addr %s195, 8
      %s197 = scalar_lea.vmem %s4, %s196
      %v199 = vld [vmem:[%s3] sm:$0x1]
      %v200 = vlaneseq
      %v201 = vshrl.u32 %v200, 7
      %v202 = vadd.s32 %v201, 8
      %v203 = vadd.s32 %v201, 16
      %v204 = vadd.s32 %v201, 24
      %v205 = vadd.s32 %v201, 32
      %v206 = vadd.s32 %v201, 40
      %v207 = vadd.s32 %v201, 48
      %v208 = vadd.s32 %v201, 56
      %v209 = vadd.s32 %v201, 64
      %v210 = vadd.s32 %v201, 72
      %v211 = vadd.s32 %v201, 80
      %v212 = vadd.s32 %v201, 88
      %v213 = vadd.s32 %v201, 96
      %v214 = vadd.s32 %v201, 104
      %v215 = vadd.s32 %v201, 112
      %v216 = vadd.s32 %v201, 120
      %v217 = vadd.s32 %v201, 128
      %v218 = vadd.s32 %v201, 136
      %v219 = vadd.s32 %v201, 144
      %v220 = vadd.s32 %v201, 152
      %v221 = vadd.s32 %v201, 160
      %v222 = vadd.s32 %v201, 168
      %v223 = vadd.s32 %v201, 176
      %v224 = vadd.s32 %v201, 184
      %v225 = vadd.s32 %v201, 192
      %v226 = vadd.s32 %v201, 200
      %v227 = vadd.s32 %v201, 208
      %v228 = vadd.s32 %v201, 216
      %v229 = vadd.s32 %v201, 224
      %v230 = vadd.s32 %v201, 232
      %v231 = vadd.s32 %v201, 240
      %v232 = vadd.s32 %v201, 248
      %v233 = vadd.s32 %v201, 256
      %v234 = vadd.s32 %v201, 264
      %v235 = vadd.s32 %v201, 272
      %v236 = vadd.s32 %v201, 280
      %v237 = vadd.s32 %v201, 288
      %v238 = vadd.s32 %v201, 296
      %v239 = vadd.s32 %v201, 304
      %v240 = vadd.s32 %v201, 312
      %v241 = vadd.s32 %v201, 320
      %v242 = vadd.s32 %v201, 328
      %v243 = vadd.s32 %v201, 336
      %v244 = vadd.s32 %v201, 344
      %v245 = vadd.s32 %v201, 352
      %v246 = vadd.s32 %v201, 360
      %v247 = vadd.s32 %v201, 368
      %v248 = vadd.s32 %v201, 376
      %v249 = vadd.s32 %v201, 384
      %v250 = vadd.s32 %v201, 392
      %v251 = vadd.s32 %v201, 400
      %v252 = vadd.s32 %v201, 408
      %v253 = vadd.s32 %v201, 416
      %v254 = vadd.s32 %v201, 424
      %v255 = vadd.s32 %v201, 432
      %v256 = vadd.s32 %v201, 440
      %v257 = vadd.s32 %v201, 448
      %v258 = vadd.s32 %v201, 456
      %v259 = vadd.s32 %v201, 464
      %v260 = vadd.s32 %v201, 472
      %v261 = vadd.s32 %v201, 480
      %v262 = vadd.s32 %v201, 488
      %v263 = vadd.s32 %v201, 496
      %v264 = vadd.s32 %v201, 504
      %vm265 = vcmp.lt.s32.totalorder %v201, 0
      %v266 = vsub.s32 0, %v201
      %v267 = vsel %vm265, %v266, %v201
      %v268 = vshrl.u32 %v267, 5
      %v269 = vand.u32 %v267, 31
      %v270 = vsub.s32 0, %v269
      %v271 = vsel %vm265, %v270, %v269
      %vm272 = vcmp.lt.s32.totalorder %v202, 0
      %v273 = vsub.s32 0, %v202
      %v274 = vsel %vm272, %v273, %v202
      %v275 = vshrl.u32 %v274, 5
      %v276 = vand.u32 %v274, 31
      %v277 = vsub.s32 0, %v276
      %v278 = vsel %vm272, %v277, %v276
      %vm279 = vcmp.lt.s32.totalorder %v203, 0
      %v280 = vsub.s32 0, %v203
      %v281 = vsel %vm279, %v280, %v203
      %v282 = vshrl.u32 %v281, 5
      %v283 = vand.u32 %v281, 31
      %v284 = vsub.s32 0, %v283
      %v285 = vsel %vm279, %v284, %v283
      %vm286 = vcmp.lt.s32.totalorder %v204, 0
      %v287 = vsub.s32 0, %v204
      %v288 = vsel %vm286, %v287, %v204
      %v289 = vshrl.u32 %v288, 5
      %v290 = vand.u32 %v288, 31
      %v291 = vsub.s32 0, %v290
      %v292 = vsel %vm286, %v291, %v290
      %vm293 = vcmp.lt.s32.totalorder %v205, 0
      %v294 = vsub.s32 0, %v205
      %v295 = vsel %vm293, %v294, %v205
      %v296 = vshrl.u32 %v295, 5
      %v297 = vand.u32 %v295, 31
      %v298 = vsub.s32 0, %v297
      %v299 = vsel %vm293, %v298, %v297
      %vm300 = vcmp.lt.s32.totalorder %v206, 0
      %v301 = vsub.s32 0, %v206
      %v302 = vsel %vm300, %v301, %v206
      %v303 = vshrl.u32 %v302, 5
      %v304 = vand.u32 %v302, 31
      %v305 = vsub.s32 0, %v304
      %v306 = vsel %vm300, %v305, %v304
      %vm307 = vcmp.lt.s32.totalorder %v207, 0
      %v308 = vsub.s32 0, %v207
      %v309 = vsel %vm307, %v308, %v207
      %v310 = vshrl.u32 %v309, 5
      %v311 = vand.u32 %v309, 31
      %v312 = vsub.s32 0, %v311
      %v313 = vsel %vm307, %v312, %v311
      %vm314 = vcmp.lt.s32.totalorder %v208, 0
      %v315 = vsub.s32 0, %v208
      %v316 = vsel %vm314, %v315, %v208
      %v317 = vshrl.u32 %v316, 5
      %v318 = vand.u32 %v316, 31
      %v319 = vsub.s32 0, %v318
      %v320 = vsel %vm314, %v319, %v318
      %vm321 = vcmp.lt.s32.totalorder %v209, 0
      %v322 = vsub.s32 0, %v209
      %v323 = vsel %vm321, %v322, %v209
      %v324 = vshrl.u32 %v323, 5
      %v325 = vand.u32 %v323, 31
      %v326 = vsub.s32 0, %v325
      %v327 = vsel %vm321, %v326, %v325
      %vm328 = vcmp.lt.s32.totalorder %v210, 0
      %v329 = vsub.s32 0, %v210
      %v330 = vsel %vm328, %v329, %v210
      %v331 = vshrl.u32 %v330, 5
      %v332 = vand.u32 %v330, 31
      %v333 = vsub.s32 0, %v332
      %v334 = vsel %vm328, %v333, %v332
      %vm335 = vcmp.lt.s32.totalorder %v211, 0
      %v336 = vsub.s32 0, %v211
      %v337 = vsel %vm335, %v336, %v211
      %v338 = vshrl.u32 %v337, 5
      %v339 = vand.u32 %v337, 31
      %v340 = vsub.s32 0, %v339
      %v341 = vsel %vm335, %v340, %v339
      %vm342 = vcmp.lt.s32.totalorder %v212, 0
      %v343 = vsub.s32 0, %v212
      %v344 = vsel %vm342, %v343, %v212
      %v345 = vshrl.u32 %v344, 5
      %v346 = vand.u32 %v344, 31
      %v347 = vsub.s32 0, %v346
      %v348 = vsel %vm342, %v347, %v346
      %vm349 = vcmp.lt.s32.totalorder %v213, 0
      %v350 = vsub.s32 0, %v213
      %v351 = vsel %vm349, %v350, %v213
      %v352 = vshrl.u32 %v351, 5
      %v353 = vand.u32 %v351, 31
      %v354 = vsub.s32 0, %v353
      %v355 = vsel %vm349, %v354, %v353
      %vm356 = vcmp.lt.s32.totalorder %v214, 0
      %v357 = vsub.s32 0, %v214
      %v358 = vsel %vm356, %v357, %v214
      %v359 = vshrl.u32 %v358, 5
      %v360 = vand.u32 %v358, 31
      %v361 = vsub.s32 0, %v360
      %v362 = vsel %vm356, %v361, %v360
      %vm363 = vcmp.lt.s32.totalorder %v215, 0
      %v364 = vsub.s32 0, %v215
      %v365 = vsel %vm363, %v364, %v215
      %v366 = vshrl.u32 %v365, 5
      %v367 = vand.u32 %v365, 31
      %v368 = vsub.s32 0, %v367
      %v369 = vsel %vm363, %v368, %v367
      %vm370 = vcmp.lt.s32.totalorder %v216, 0
      %v371 = vsub.s32 0, %v216
      %v372 = vsel %vm370, %v371, %v216
      %v373 = vshrl.u32 %v372, 5
      %v374 = vand.u32 %v372, 31
      %v375 = vsub.s32 0, %v374
      %v376 = vsel %vm370, %v375, %v374
      %vm377 = vcmp.lt.s32.totalorder %v217, 0
      %v378 = vsub.s32 0, %v217
      %v379 = vsel %vm377, %v378, %v217
      %v380 = vshrl.u32 %v379, 5
      %v381 = vand.u32 %v379, 31
      %v382 = vsub.s32 0, %v381
      %v383 = vsel %vm377, %v382, %v381
      %vm384 = vcmp.lt.s32.totalorder %v218, 0
      %v385 = vsub.s32 0, %v218
      %v386 = vsel %vm384, %v385, %v218
      %v387 = vshrl.u32 %v386, 5
      %v388 = vand.u32 %v386, 31
      %v389 = vsub.s32 0, %v388
      %v390 = vsel %vm384, %v389, %v388
      %vm391 = vcmp.lt.s32.totalorder %v219, 0
      %v392 = vsub.s32 0, %v219
      %v393 = vsel %vm391, %v392, %v219
      %v394 = vshrl.u32 %v393, 5
      %v395 = vand.u32 %v393, 31
      %v396 = vsub.s32 0, %v395
      %v397 = vsel %vm391, %v396, %v395
      %vm398 = vcmp.lt.s32.totalorder %v220, 0
      %v399 = vsub.s32 0, %v220
      %v400 = vsel %vm398, %v399, %v220
      %v401 = vshrl.u32 %v400, 5
      %v402 = vand.u32 %v400, 31
      %v403 = vsub.s32 0, %v402
      %v404 = vsel %vm398, %v403, %v402
      %vm405 = vcmp.lt.s32.totalorder %v221, 0
      %v406 = vsub.s32 0, %v221
      %v407 = vsel %vm405, %v406, %v221
      %v408 = vshrl.u32 %v407, 5
      %v409 = vand.u32 %v407, 31
      %v410 = vsub.s32 0, %v409
      %v411 = vsel %vm405, %v410, %v409
      %vm412 = vcmp.lt.s32.totalorder %v222, 0
      %v413 = vsub.s32 0, %v222
      %v414 = vsel %vm412, %v413, %v222
      %v415 = vshrl.u32 %v414, 5
      %v416 = vand.u32 %v414, 31
      %v417 = vsub.s32 0, %v416
      %v418 = vsel %vm412, %v417, %v416
      %vm419 = vcmp.lt.s32.totalorder %v223, 0
      %v420 = vsub.s32 0, %v223
      %v421 = vsel %vm419, %v420, %v223
      %v422 = vshrl.u32 %v421, 5
      %v423 = vand.u32 %v421, 31
      %v424 = vsub.s32 0, %v423
      %v425 = vsel %vm419, %v424, %v423
      %vm426 = vcmp.lt.s32.totalorder %v224, 0
      %v427 = vsub.s32 0, %v224
      %v428 = vsel %vm426, %v427, %v224
      %v429 = vshrl.u32 %v428, 5
      %v430 = vand.u32 %v428, 31
      %v431 = vsub.s32 0, %v430
      %v432 = vsel %vm426, %v431, %v430
      %vm433 = vcmp.lt.s32.totalorder %v225, 0
      %v434 = vsub.s32 0, %v225
      %v435 = vsel %vm433, %v434, %v225
      %v436 = vshrl.u32 %v435, 5
      %v437 = vand.u32 %v435, 31
      %v438 = vsub.s32 0, %v437
      %v439 = vsel %vm433, %v438, %v437
      %vm440 = vcmp.lt.s32.totalorder %v226, 0
      %v441 = vsub.s32 0, %v226
      %v442 = vsel %vm440, %v441, %v226
      %v443 = vshrl.u32 %v442, 5
      %v444 = vand.u32 %v442, 31
      %v445 = vsub.s32 0, %v444
      %v446 = vsel %vm440, %v445, %v444
      %vm447 = vcmp.lt.s32.totalorder %v227, 0
      %v448 = vsub.s32 0, %v227
      %v449 = vsel %vm447, %v448, %v227
      %v450 = vshrl.u32 %v449, 5
      %v451 = vand.u32 %v449, 31
      %v452 = vsub.s32 0, %v451
      %v453 = vsel %vm447, %v452, %v451
      %vm454 = vcmp.lt.s32.totalorder %v228, 0
      %v455 = vsub.s32 0, %v228
      %v456 = vsel %vm454, %v455, %v228
      %v457 = vshrl.u32 %v456, 5
      %v458 = vand.u32 %v456, 31
      %v459 = vsub.s32 0, %v458
      %v460 = vsel %vm454, %v459, %v458
      %vm461 = vcmp.lt.s32.totalorder %v229, 0
      %v462 = vsub.s32 0, %v229
      %v463 = vsel %vm461, %v462, %v229
      %v464 = vshrl.u32 %v463, 5
      %v465 = vand.u32 %v463, 31
      %v466 = vsub.s32 0, %v465
      %v467 = vsel %vm461, %v466, %v465
      %vm468 = vcmp.lt.s32.totalorder %v230, 0
      %v469 = vsub.s32 0, %v230
      %v470 = vsel %vm468, %v469, %v230
      %v471 = vshrl.u32 %v470, 5
      %v472 = vand.u32 %v470, 31
      %v473 = vsub.s32 0, %v472
      %v474 = vsel %vm468, %v473, %v472
      %vm475 = vcmp.lt.s32.totalorder %v231, 0
      %v476 = vsub.s32 0, %v231
      %v477 = vsel %vm475, %v476, %v231
      %v478 = vshrl.u32 %v477, 5
      %v479 = vand.u32 %v477, 31
      %v480 = vsub.s32 0, %v479
      %v481 = vsel %vm475, %v480, %v479
      %vm482 = vcmp.lt.s32.totalorder %v232, 0
      %v483 = vsub.s32 0, %v232
      %v484 = vsel %vm482, %v483, %v232
      %v485 = vshrl.u32 %v484, 5
      %v486 = vand.u32 %v484, 31
      %v487 = vsub.s32 0, %v486
      %v488 = vsel %vm482, %v487, %v486
      %vm489 = vcmp.lt.s32.totalorder %v233, 0
      %v490 = vsub.s32 0, %v233
      %v491 = vsel %vm489, %v490, %v233
      %v492 = vshrl.u32 %v491, 5
      %v493 = vand.u32 %v491, 31
      %v494 = vsub.s32 0, %v493
      %v495 = vsel %vm489, %v494, %v493
      %vm496 = vcmp.lt.s32.totalorder %v234, 0
      %v497 = vsub.s32 0, %v234
      %v498 = vsel %vm496, %v497, %v234
      %v499 = vshrl.u32 %v498, 5
      %v500 = vand.u32 %v498, 31
      %v501 = vsub.s32 0, %v500
      %v502 = vsel %vm496, %v501, %v500
      %vm503 = vcmp.lt.s32.totalorder %v235, 0
      %v504 = vsub.s32 0, %v235
      %v505 = vsel %vm503, %v504, %v235
      %v506 = vshrl.u32 %v505, 5
      %v507 = vand.u32 %v505, 31
      %v508 = vsub.s32 0, %v507
      %v509 = vsel %vm503, %v508, %v507
      %vm510 = vcmp.lt.s32.totalorder %v236, 0
      %v511 = vsub.s32 0, %v236
      %v512 = vsel %vm510, %v511, %v236
      %v513 = vshrl.u32 %v512, 5
      %v514 = vand.u32 %v512, 31
      %v515 = vsub.s32 0, %v514
      %v516 = vsel %vm510, %v515, %v514
      %vm517 = vcmp.lt.s32.totalorder %v237, 0
      %v518 = vsub.s32 0, %v237
      %v519 = vsel %vm517, %v518, %v237
      %v520 = vshrl.u32 %v519, 5
      %v521 = vand.u32 %v519, 31
      %v522 = vsub.s32 0, %v521
      %v523 = vsel %vm517, %v522, %v521
      %vm524 = vcmp.lt.s32.totalorder %v238, 0
      %v525 = vsub.s32 0, %v238
      %v526 = vsel %vm524, %v525, %v238
      %v527 = vshrl.u32 %v526, 5
      %v528 = vand.u32 %v526, 31
      %v529 = vsub.s32 0, %v528
      %v530 = vsel %vm524, %v529, %v528
      %vm531 = vcmp.lt.s32.totalorder %v239, 0
      %v532 = vsub.s32 0, %v239
      %v533 = vsel %vm531, %v532, %v239
      %v534 = vshrl.u32 %v533, 5
      %v535 = vand.u32 %v533, 31
      %v536 = vsub.s32 0, %v535
      %v537 = vsel %vm531, %v536, %v535
      %vm538 = vcmp.lt.s32.totalorder %v240, 0
      %v539 = vsub.s32 0, %v240
      %v540 = vsel %vm538, %v539, %v240
      %v541 = vshrl.u32 %v540, 5
      %v542 = vand.u32 %v540, 31
      %v543 = vsub.s32 0, %v542
      %v544 = vsel %vm538, %v543, %v542
      %vm545 = vcmp.lt.s32.totalorder %v241, 0
      %v546 = vsub.s32 0, %v241
      %v547 = vsel %vm545, %v546, %v241
      %v548 = vshrl.u32 %v547, 5
      %v549 = vand.u32 %v547, 31
      %v550 = vsub.s32 0, %v549
      %v551 = vsel %vm545, %v550, %v549
      %vm552 = vcmp.lt.s32.totalorder %v242, 0
      %v553 = vsub.s32 0, %v242
      %v554 = vsel %vm552, %v553, %v242
      %v555 = vshrl.u32 %v554, 5
      %v556 = vand.u32 %v554, 31
      %v557 = vsub.s32 0, %v556
      %v558 = vsel %vm552, %v557, %v556
      %vm559 = vcmp.lt.s32.totalorder %v243, 0
      %v560 = vsub.s32 0, %v243
      %v561 = vsel %vm559, %v560, %v243
      %v562 = vshrl.u32 %v561, 5
      %v563 = vand.u32 %v561, 31
      %v564 = vsub.s32 0, %v563
      %v565 = vsel %vm559, %v564, %v563
      %vm566 = vcmp.lt.s32.totalorder %v244, 0
      %v567 = vsub.s32 0, %v244
      %v568 = vsel %vm566, %v567, %v244
      %v569 = vshrl.u32 %v568, 5
      %v570 = vand.u32 %v568, 31
      %v571 = vsub.s32 0, %v570
      %v572 = vsel %vm566, %v571, %v570
      %vm573 = vcmp.lt.s32.totalorder %v245, 0
      %v574 = vsub.s32 0, %v245
      %v575 = vsel %vm573, %v574, %v245
      %v576 = vshrl.u32 %v575, 5
      %v577 = vand.u32 %v575, 31
      %v578 = vsub.s32 0, %v577
      %v579 = vsel %vm573, %v578, %v577
      %vm580 = vcmp.lt.s32.totalorder %v246, 0
      %v581 = vsub.s32 0, %v246
      %v582 = vsel %vm580, %v581, %v246
      %v583 = vshrl.u32 %v582, 5
      %v584 = vand.u32 %v582, 31
      %v585 = vsub.s32 0, %v584
      %v586 = vsel %vm580, %v585, %v584
      %vm587 = vcmp.lt.s32.totalorder %v247, 0
      %v588 = vsub.s32 0, %v247
      %v589 = vsel %vm587, %v588, %v247
      %v590 = vshrl.u32 %v589, 5
      %v591 = vand.u32 %v589, 31
      %v592 = vsub.s32 0, %v591
      %v593 = vsel %vm587, %v592, %v591
      %vm594 = vcmp.lt.s32.totalorder %v248, 0
      %v595 = vsub.s32 0, %v248
      %v596 = vsel %vm594, %v595, %v248
      %v597 = vshrl.u32 %v596, 5
      %v598 = vand.u32 %v596, 31
      %v599 = vsub.s32 0, %v598
      %v600 = vsel %vm594, %v599, %v598
      %vm601 = vcmp.lt.s32.totalorder %v249, 0
      %v602 = vsub.s32 0, %v249
      %v603 = vsel %vm601, %v602, %v249
      %v604 = vshrl.u32 %v603, 5
      %v605 = vand.u32 %v603, 31
      %v606 = vsub.s32 0, %v605
      %v607 = vsel %vm601, %v606, %v605
      %vm608 = vcmp.lt.s32.totalorder %v250, 0
      %v609 = vsub.s32 0, %v250
      %v610 = vsel %vm608, %v609, %v250
      %v611 = vshrl.u32 %v610, 5
      %v612 = vand.u32 %v610, 31
      %v613 = vsub.s32 0, %v612
      %v614 = vsel %vm608, %v613, %v612
      %vm615 = vcmp.lt.s32.totalorder %v251, 0
      %v616 = vsub.s32 0, %v251
      %v617 = vsel %vm615, %v616, %v251
      %v618 = vshrl.u32 %v617, 5
      %v619 = vand.u32 %v617, 31
      %v620 = vsub.s32 0, %v619
      %v621 = vsel %vm615, %v620, %v619
      %vm622 = vcmp.lt.s32.totalorder %v252, 0
      %v623 = vsub.s32 0, %v252
      %v624 = vsel %vm622, %v623, %v252
      %v625 = vshrl.u32 %v624, 5
      %v626 = vand.u32 %v624, 31
      %v627 = vsub.s32 0, %v626
      %v628 = vsel %vm622, %v627, %v626
      %vm629 = vcmp.lt.s32.totalorder %v253, 0
      %v630 = vsub.s32 0, %v253
      %v631 = vsel %vm629, %v630, %v253
      %v632 = vshrl.u32 %v631, 5
      %v633 = vand.u32 %v631, 31
      %v634 = vsub.s32 0, %v633
      %v635 = vsel %vm629, %v634, %v633
      %vm636 = vcmp.lt.s32.totalorder %v254, 0
      %v637 = vsub.s32 0, %v254
      %v638 = vsel %vm636, %v637, %v254
      %v639 = vshrl.u32 %v638, 5
      %v640 = vand.u32 %v638, 31
      %v641 = vsub.s32 0, %v640
      %v642 = vsel %vm636, %v641, %v640
      %vm643 = vcmp.lt.s32.totalorder %v255, 0
      %v644 = vsub.s32 0, %v255
      %v645 = vsel %vm643, %v644, %v255
      %v646 = vshrl.u32 %v645, 5
      %v647 = vand.u32 %v645, 31
      %v648 = vsub.s32 0, %v647
      %v649 = vsel %vm643, %v648, %v647
      %vm650 = vcmp.lt.s32.totalorder %v256, 0
      %v651 = vsub.s32 0, %v256
      %v652 = vsel %vm650, %v651, %v256
      %v653 = vshrl.u32 %v652, 5
      %v654 = vand.u32 %v652, 31
      %v655 = vsub.s32 0, %v654
      %v656 = vsel %vm650, %v655, %v654
      %vm657 = vcmp.lt.s32.totalorder %v257, 0
      %v658 = vsub.s32 0, %v257
      %v659 = vsel %vm657, %v658, %v257
      %v660 = vshrl.u32 %v659, 5
      %v661 = vand.u32 %v659, 31
      %v662 = vsub.s32 0, %v661
      %v663 = vsel %vm657, %v662, %v661
      %vm664 = vcmp.lt.s32.totalorder %v258, 0
      %v665 = vsub.s32 0, %v258
      %v666 = vsel %vm664, %v665, %v258
      %v667 = vshrl.u32 %v666, 5
      %v668 = vand.u32 %v666, 31
      %v669 = vsub.s32 0, %v668
      %v670 = vsel %vm664, %v669, %v668
      %vm671 = vcmp.lt.s32.totalorder %v259, 0
      %v672 = vsub.s32 0, %v259
      %v673 = vsel %vm671, %v672, %v259
      %v674 = vshrl.u32 %v673, 5
      %v675 = vand.u32 %v673, 31
      %v676 = vsub.s32 0, %v675
      %v677 = vsel %vm671, %v676, %v675
      %vm678 = vcmp.lt.s32.totalorder %v260, 0
      %v679 = vsub.s32 0, %v260
      %v680 = vsel %vm678, %v679, %v260
      %v681 = vshrl.u32 %v680, 5
      %v682 = vand.u32 %v680, 31
      %v683 = vsub.s32 0, %v682
      %v684 = vsel %vm678, %v683, %v682
      %vm685 = vcmp.lt.s32.totalorder %v261, 0
      %v686 = vsub.s32 0, %v261
      %v687 = vsel %vm685, %v686, %v261
      %v688 = vshrl.u32 %v687, 5
      %v689 = vand.u32 %v687, 31
      %v690 = vsub.s32 0, %v689
      %v691 = vsel %vm685, %v690, %v689
      %vm692 = vcmp.lt.s32.totalorder %v262, 0
      %v693 = vsub.s32 0, %v262
      %v694 = vsel %vm692, %v693, %v262
      %v695 = vshrl.u32 %v694, 5
      %v696 = vand.u32 %v694, 31
      %v697 = vsub.s32 0, %v696
      %v698 = vsel %vm692, %v697, %v696
      %vm699 = vcmp.lt.s32.totalorder %v263, 0
      %v700 = vsub.s32 0, %v263
      %v701 = vsel %vm699, %v700, %v263
      %v702 = vshrl.u32 %v701, 5
      %v703 = vand.u32 %v701, 31
      %v704 = vsub.s32 0, %v703
      %v705 = vsel %vm699, %v704, %v703
      %vm706 = vcmp.lt.s32.totalorder %v264, 0
      %v707 = vsub.s32 0, %v264
      %v708 = vsel %vm706, %v707, %v264
      %v709 = vshrl.u32 %v708, 5
      %v710 = vand.u32 %v708, 31
      %v711 = vsub.s32 0, %v710
      %v712 = vsel %vm706, %v711, %v710
      %vm713 = vcmp.ne.s32.totalorder %v271, 0
      %vm714 = vcmp.ne.s32.totalorder %v278, 0
      %vm715 = vcmp.ne.s32.totalorder %v285, 0
      %vm716 = vcmp.ne.s32.totalorder %v292, 0
      %vm717 = vcmp.ne.s32.totalorder %v299, 0
      %vm718 = vcmp.ne.s32.totalorder %v306, 0
      %vm719 = vcmp.ne.s32.totalorder %v313, 0
      %vm720 = vcmp.ne.s32.totalorder %v320, 0
      %vm721 = vcmp.ne.s32.totalorder %v327, 0
      %vm722 = vcmp.ne.s32.totalorder %v334, 0
      %vm723 = vcmp.ne.s32.totalorder %v341, 0
      %vm724 = vcmp.ne.s32.totalorder %v348, 0
      %vm725 = vcmp.ne.s32.totalorder %v355, 0
      %vm726 = vcmp.ne.s32.totalorder %v362, 0
      %vm727 = vcmp.ne.s32.totalorder %v369, 0
      %vm728 = vcmp.ne.s32.totalorder %v376, 0
      %vm729 = vcmp.ne.s32.totalorder %v383, 0
      %vm730 = vcmp.ne.s32.totalorder %v390, 0
      %vm731 = vcmp.ne.s32.totalorder %v397, 0
      %vm732 = vcmp.ne.s32.totalorder %v404, 0
      %vm733 = vcmp.ne.s32.totalorder %v411, 0
      %vm734 = vcmp.ne.s32.totalorder %v418, 0
      %vm735 = vcmp.ne.s32.totalorder %v425, 0
      %vm736 = vcmp.ne.s32.totalorder %v432, 0
      %vm737 = vcmp.ne.s32.totalorder %v439, 0
      %vm738 = vcmp.ne.s32.totalorder %v446, 0
      %vm739 = vcmp.ne.s32.totalorder %v453, 0
      %vm740 = vcmp.ne.s32.totalorder %v460, 0
      %vm741 = vcmp.ne.s32.totalorder %v467, 0
      %vm742 = vcmp.ne.s32.totalorder %v474, 0
      %vm743 = vcmp.ne.s32.totalorder %v481, 0
      %vm744 = vcmp.ne.s32.totalorder %v488, 0
      %vm745 = vcmp.ne.s32.totalorder %v495, 0
      %vm746 = vcmp.ne.s32.totalorder %v502, 0
      %vm747 = vcmp.ne.s32.totalorder %v509, 0
      %vm748 = vcmp.ne.s32.totalorder %v516, 0
      %vm749 = vcmp.ne.s32.totalorder %v523, 0
      %vm750 = vcmp.ne.s32.totalorder %v530, 0
      %vm751 = vcmp.ne.s32.totalorder %v537, 0
      %vm752 = vcmp.ne.s32.totalorder %v544, 0
      %vm753 = vcmp.ne.s32.totalorder %v551, 0
      %vm754 = vcmp.ne.s32.totalorder %v558, 0
      %vm755 = vcmp.ne.s32.totalorder %v565, 0
      %vm756 = vcmp.ne.s32.totalorder %v572, 0
      %vm757 = vcmp.ne.s32.totalorder %v579, 0
      %vm758 = vcmp.ne.s32.totalorder %v586, 0
      %vm759 = vcmp.ne.s32.totalorder %v593, 0
      %vm760 = vcmp.ne.s32.totalorder %v600, 0
      %vm761 = vcmp.ne.s32.totalorder %v607, 0
      %vm762 = vcmp.ne.s32.totalorder %v614, 0
      %vm763 = vcmp.ne.s32.totalorder %v621, 0
      %vm764 = vcmp.ne.s32.totalorder %v628, 0
      %vm765 = vcmp.ne.s32.totalorder %v635, 0
      %vm766 = vcmp.ne.s32.totalorder %v642, 0
      %vm767 = vcmp.ne.s32.totalorder %v649, 0
      %vm768 = vcmp.ne.s32.totalorder %v656, 0
      %vm769 = vcmp.ne.s32.totalorder %v663, 0
      %vm770 = vcmp.ne.s32.totalorder %v670, 0
      %vm771 = vcmp.ne.s32.totalorder %v677, 0
      %vm772 = vcmp.ne.s32.totalorder %v684, 0
      %vm773 = vcmp.ne.s32.totalorder %v691, 0
      %vm774 = vcmp.ne.s32.totalorder %v698, 0
      %vm775 = vcmp.ne.s32.totalorder %v705, 0
      %vm776 = vcmp.ne.s32.totalorder %v712, 0
      %vm777 = vcmp.lt.s32.totalorder %v271, 0
      %vm778 = vcmp.lt.s32.totalorder %v278, 0
      %vm779 = vcmp.lt.s32.totalorder %v285, 0
      %vm780 = vcmp.lt.s32.totalorder %v292, 0
      %vm781 = vcmp.lt.s32.totalorder %v299, 0
      %vm782 = vcmp.lt.s32.totalorder %v306, 0
      %vm783 = vcmp.lt.s32.totalorder %v313, 0
      %vm784 = vcmp.lt.s32.totalorder %v320, 0
      %vm785 = vcmp.lt.s32.totalorder %v327, 0
      %vm786 = vcmp.lt.s32.totalorder %v334, 0
      %vm787 = vcmp.lt.s32.totalorder %v341, 0
      %vm788 = vcmp.lt.s32.totalorder %v348, 0
      %vm789 = vcmp.lt.s32.totalorder %v355, 0
      %vm790 = vcmp.lt.s32.totalorder %v362, 0
      %vm791 = vcmp.lt.s32.totalorder %v369, 0
      %vm792 = vcmp.lt.s32.totalorder %v376, 0
      %vm793 = vcmp.lt.s32.totalorder %v383, 0
      %vm794 = vcmp.lt.s32.totalorder %v390, 0
      %vm795 = vcmp.lt.s32.totalorder %v397, 0
      %vm796 = vcmp.lt.s32.totalorder %v404, 0
      %vm797 = vcmp.lt.s32.totalorder %v411, 0
      %vm798 = vcmp.lt.s32.totalorder %v418, 0
      %vm799 = vcmp.lt.s32.totalorder %v425, 0
      %vm800 = vcmp.lt.s32.totalorder %v432, 0
      %vm801 = vcmp.lt.s32.totalorder %v439, 0
      %vm802 = vcmp.lt.s32.totalorder %v446, 0
      %vm803 = vcmp.lt.s32.totalorder %v453, 0
      %vm804 = vcmp.lt.s32.totalorder %v460, 0
      %vm805 = vcmp.lt.s32.totalorder %v467, 0
      %vm806 = vcmp.lt.s32.totalorder %v474, 0
      %vm807 = vcmp.lt.s32.totalorder %v481, 0
      %vm808 = vcmp.lt.s32.totalorder %v488, 0
      %vm809 = vcmp.lt.s32.totalorder %v495, 0
      %vm810 = vcmp.lt.s32.totalorder %v502, 0
      %vm811 = vcmp.lt.s32.totalorder %v509, 0
      %vm812 = vcmp.lt.s32.totalorder %v516, 0
      %vm813 = vcmp.lt.s32.totalorder %v523, 0
      %vm814 = vcmp.lt.s32.totalorder %v530, 0
      %vm815 = vcmp.lt.s32.totalorder %v537, 0
      %vm816 = vcmp.lt.s32.totalorder %v544, 0
      %vm817 = vcmp.lt.s32.totalorder %v551, 0
      %vm818 = vcmp.lt.s32.totalorder %v558, 0
      %vm819 = vcmp.lt.s32.totalorder %v565, 0
      %vm820 = vcmp.lt.s32.totalorder %v572, 0
      %vm821 = vcmp.lt.s32.totalorder %v579, 0
      %vm822 = vcmp.lt.s32.totalorder %v586, 0
      %vm823 = vcmp.lt.s32.totalorder %v593, 0
      %vm824 = vcmp.lt.s32.totalorder %v600, 0
      %vm825 = vcmp.lt.s32.totalorder %v607, 0
      %vm826 = vcmp.lt.s32.totalorder %v614, 0
      %vm827 = vcmp.lt.s32.totalorder %v621, 0
      %vm828 = vcmp.lt.s32.totalorder %v628, 0
      %vm829 = vcmp.lt.s32.totalorder %v635, 0
      %vm830 = vcmp.lt.s32.totalorder %v642, 0
      %vm831 = vcmp.lt.s32.totalorder %v649, 0
      %vm832 = vcmp.lt.s32.totalorder %v656, 0
      %vm833 = vcmp.lt.s32.totalorder %v663, 0
      %vm834 = vcmp.lt.s32.totalorder %v670, 0
      %vm835 = vcmp.lt.s32.totalorder %v677, 0
      %vm836 = vcmp.lt.s32.totalorder %v684, 0
      %vm837 = vcmp.lt.s32.totalorder %v691, 0
      %vm838 = vcmp.lt.s32.totalorder %v698, 0
      %vm839 = vcmp.lt.s32.totalorder %v705, 0
      %vm840 = vcmp.lt.s32.totalorder %v712, 0
      %vm841 = vmand %vm777, %vm713
      %vm842 = vmand %vm778, %vm714
      %vm843 = vmand %vm779, %vm715
      %vm844 = vmand %vm780, %vm716
      %vm845 = vmand %vm781, %vm717
      %vm846 = vmand %vm782, %vm718
      %vm847 = vmand %vm783, %vm719
      %vm848 = vmand %vm784, %vm720
      %vm849 = vmand %vm785, %vm721
      %vm850 = vmand %vm786, %vm722
      %vm851 = vmand %vm787, %vm723
      %vm852 = vmand %vm788, %vm724
      %vm853 = vmand %vm789, %vm725
      %vm854 = vmand %vm790, %vm726
      %vm855 = vmand %vm791, %vm727
      %vm856 = vmand %vm792, %vm728
      %vm857 = vmand %vm793, %vm729
      %vm858 = vmand %vm794, %vm730
      %vm859 = vmand %vm795, %vm731
      %vm860 = vmand %vm796, %vm732
      %vm861 = vmand %vm797, %vm733
      %vm862 = vmand %vm798, %vm734
      %vm863 = vmand %vm799, %vm735
      %vm864 = vmand %vm800, %vm736
      %vm865 = vmand %vm801, %vm737
      %vm866 = vmand %vm802, %vm738
      %vm867 = vmand %vm803, %vm739
      %vm868 = vmand %vm804, %vm740
      %vm869 = vmand %vm805, %vm741
      %vm870 = vmand %vm806, %vm742
      %vm871 = vmand %vm807, %vm743
      %vm872 = vmand %vm808, %vm744
      %vm873 = vmand %vm809, %vm745
      %vm874 = vmand %vm810, %vm746
      %vm875 = vmand %vm811, %vm747
      %vm876 = vmand %vm812, %vm748
      %vm877 = vmand %vm813, %vm749
      %vm878 = vmand %vm814, %vm750
      %vm879 = vmand %vm815, %vm751
      %vm880 = vmand %vm816, %vm752
      %vm881 = vmand %vm817, %vm753
      %vm882 = vmand %vm818, %vm754
      %vm883 = vmand %vm819, %vm755
      %vm884 = vmand %vm820, %vm756
      %vm885 = vmand %vm821, %vm757
      %vm886 = vmand %vm822, %vm758
      %vm887 = vmand %vm823, %vm759
      %vm888 = vmand %vm824, %vm760
      %vm889 = vmand %vm825, %vm761
      %vm890 = vmand %vm826, %vm762
      %vm891 = vmand %vm827, %vm763
      %vm892 = vmand %vm828, %vm764
      %vm893 = vmand %vm829, %vm765
      %vm894 = vmand %vm830, %vm766
      %vm895 = vmand %vm831, %vm767
      %vm896 = vmand %vm832, %vm768
      %vm897 = vmand %vm833, %vm769
      %vm898 = vmand %vm834, %vm770
      %vm899 = vmand %vm835, %vm771
      %vm900 = vmand %vm836, %vm772
      %vm901 = vmand %vm837, %vm773
      %vm902 = vmand %vm838, %vm774
      %vm903 = vmand %vm839, %vm775
      %vm904 = vmand %vm840, %vm776
      %v905 = vadd.s32 %v271, 32
      %v906 = vadd.s32 %v278, 32
      %v907 = vadd.s32 %v285, 32
      %v908 = vadd.s32 %v292, 32
      %v909 = vadd.s32 %v299, 32
      %v910 = vadd.s32 %v306, 32
      %v911 = vadd.s32 %v313, 32
      %v912 = vadd.s32 %v320, 32
      %v913 = vadd.s32 %v327, 32
      %v914 = vadd.s32 %v334, 32
      %v915 = vadd.s32 %v341, 32
      %v916 = vadd.s32 %v348, 32
      %v917 = vadd.s32 %v355, 32
      %v918 = vadd.s32 %v362, 32
      %v919 = vadd.s32 %v369, 32
      %v920 = vadd.s32 %v376, 32
      %v921 = vadd.s32 %v383, 32
      %v922 = vadd.s32 %v390, 32
      %v923 = vadd.s32 %v397, 32
      %v924 = vadd.s32 %v404, 32
      %v925 = vadd.s32 %v411, 32
      %v926 = vadd.s32 %v418, 32
      %v927 = vadd.s32 %v425, 32
      %v928 = vadd.s32 %v432, 32
      %v929 = vadd.s32 %v439, 32
      %v930 = vadd.s32 %v446, 32
      %v931 = vadd.s32 %v453, 32
      %v932 = vadd.s32 %v460, 32
      %v933 = vadd.s32 %v467, 32
      %v934 = vadd.s32 %v474, 32
      %v935 = vadd.s32 %v481, 32
      %v936 = vadd.s32 %v488, 32
      %v937 = vadd.s32 %v495, 32
      %v938 = vadd.s32 %v502, 32
      %v939 = vadd.s32 %v509, 32
      %v940 = vadd.s32 %v516, 32
      %v941 = vadd.s32 %v523, 32
      %v942 = vadd.s32 %v530, 32
      %v943 = vadd.s32 %v537, 32
      %v944 = vadd.s32 %v544, 32
      %v945 = vadd.s32 %v551, 32
      %v946 = vadd.s32 %v558, 32
      %v947 = vadd.s32 %v565, 32
      %v948 = vadd.s32 %v572, 32
      %v949 = vadd.s32 %v579, 32
      %v950 = vadd.s32 %v586, 32
      %v951 = vadd.s32 %v593, 32
      %v952 = vadd.s32 %v600, 32
      %v953 = vadd.s32 %v607, 32
      %v954 = vadd.s32 %v614, 32
      %v955 = vadd.s32 %v621, 32
      %v956 = vadd.s32 %v628, 32
      %v957 = vadd.s32 %v635, 32
      %v958 = vadd.s32 %v642, 32
      %v959 = vadd.s32 %v649, 32
      %v960 = vadd.s32 %v656, 32
      %v961 = vadd.s32 %v663, 32
      %v962 = vadd.s32 %v670, 32
      %v963 = vadd.s32 %v677, 32
      %v964 = vadd.s32 %v684, 32
      %v965 = vadd.s32 %v691, 32
      %v966 = vadd.s32 %v698, 32
      %v967 = vadd.s32 %v705, 32
      %v968 = vadd.s32 %v712, 32
      %v969 = vsel %vm841, %v905, %v271
      %v970 = vsel %vm842, %v906, %v278
      %v971 = vsel %vm843, %v907, %v285
      %v972 = vsel %vm844, %v908, %v292
      %v973 = vsel %vm845, %v909, %v299
      %v974 = vsel %vm846, %v910, %v306
      %v975 = vsel %vm847, %v911, %v313
      %v976 = vsel %vm848, %v912, %v320
      %v977 = vsel %vm849, %v913, %v327
      %v978 = vsel %vm850, %v914, %v334
      %v979 = vsel %vm851, %v915, %v341
      %v980 = vsel %vm852, %v916, %v348
      %v981 = vsel %vm853, %v917, %v355
      %v982 = vsel %vm854, %v918, %v362
      %v983 = vsel %vm855, %v919, %v369
      %v984 = vsel %vm856, %v920, %v376
      %v985 = vsel %vm857, %v921, %v383
      %v986 = vsel %vm858, %v922, %v390
      %v987 = vsel %vm859, %v923, %v397
      %v988 = vsel %vm860, %v924, %v404
      %v989 = vsel %vm861, %v925, %v411
      %v990 = vsel %vm862, %v926, %v418
      %v991 = vsel %vm863, %v927, %v425
      %v992 = vsel %vm864, %v928, %v432
      %v993 = vsel %vm865, %v929, %v439
      %v994 = vsel %vm866, %v930, %v446
      %v995 = vsel %vm867, %v931, %v453
      %v996 = vsel %vm868, %v932, %v460
      %v997 = vsel %vm869, %v933, %v467
      %v998 = vsel %vm870, %v934, %v474
      %v999 = vsel %vm871, %v935, %v481
      %v1000 = vsel %vm872, %v936, %v488
      %v1001 = vsel %vm873, %v937, %v495
      %v1002 = vsel %vm874, %v938, %v502
      %v1003 = vsel %vm875, %v939, %v509
      %v1004 = vsel %vm876, %v940, %v516
      %v1005 = vsel %vm877, %v941, %v523
      %v1006 = vsel %vm878, %v942, %v530
      %v1007 = vsel %vm879, %v943, %v537
      %v1008 = vsel %vm880, %v944, %v544
      %v1009 = vsel %vm881, %v945, %v551
      %v1010 = vsel %vm882, %v946, %v558
      %v1011 = vsel %vm883, %v947, %v565
      %v1012 = vsel %vm884, %v948, %v572
      %v1013 = vsel %vm885, %v949, %v579
      %v1014 = vsel %vm886, %v950, %v586
      %v1015 = vsel %vm887, %v951, %v593
      %v1016 = vsel %vm888, %v952, %v600
      %v1017 = vsel %vm889, %v953, %v607
      %v1018 = vsel %vm890, %v954, %v614
      %v1019 = vsel %vm891, %v955, %v621
      %v1020 = vsel %vm892, %v956, %v628
      %v1021 = vsel %vm893, %v957, %v635
      %v1022 = vsel %vm894, %v958, %v642
      %v1023 = vsel %vm895, %v959, %v649
      %v1024 = vsel %vm896, %v960, %v656
      %v1025 = vsel %vm897, %v961, %v663
      %v1026 = vsel %vm898, %v962, %v670
      %v1027 = vsel %vm899, %v963, %v677
      %v1028 = vsel %vm900, %v964, %v684
      %v1029 = vsel %vm901, %v965, %v691
      %v1030 = vsel %vm902, %v966, %v698
      %v1031 = vsel %vm903, %v967, %v705
      %v1032 = vsel %vm904, %v968, %v712
      %vm1033 = vcmp.lt.s32.totalorder %v969, 16
      %vm1034 = vcmp.lt.s32.totalorder %v970, 16
      %vm1035 = vcmp.lt.s32.totalorder %v971, 16
      %vm1036 = vcmp.lt.s32.totalorder %v972, 16
      %vm1037 = vcmp.lt.s32.totalorder %v973, 16
      %vm1038 = vcmp.lt.s32.totalorder %v974, 16
      %vm1039 = vcmp.lt.s32.totalorder %v975, 16
      %vm1040 = vcmp.lt.s32.totalorder %v976, 16
      %vm1041 = vcmp.lt.s32.totalorder %v977, 16
      %vm1042 = vcmp.lt.s32.totalorder %v978, 16
      %vm1043 = vcmp.lt.s32.totalorder %v979, 16
      %vm1044 = vcmp.lt.s32.totalorder %v980, 16
      %vm1045 = vcmp.lt.s32.totalorder %v981, 16
      %vm1046 = vcmp.lt.s32.totalorder %v982, 16
      %vm1047 = vcmp.lt.s32.totalorder %v983, 16
      %vm1048 = vcmp.lt.s32.totalorder %v984, 16
      %vm1049 = vcmp.lt.s32.totalorder %v985, 16
      %vm1050 = vcmp.lt.s32.totalorder %v986, 16
      %vm1051 = vcmp.lt.s32.totalorder %v987, 16
      %vm1052 = vcmp.lt.s32.totalorder %v988, 16
      %vm1053 = vcmp.lt.s32.totalorder %v989, 16
      %vm1054 = vcmp.lt.s32.totalorder %v990, 16
      %vm1055 = vcmp.lt.s32.totalorder %v991, 16
      %vm1056 = vcmp.lt.s32.totalorder %v992, 16
      %vm1057 = vcmp.lt.s32.totalorder %v993, 16
      %vm1058 = vcmp.lt.s32.totalorder %v994, 16
      %vm1059 = vcmp.lt.s32.totalorder %v995, 16
      %vm1060 = vcmp.lt.s32.totalorder %v996, 16
      %vm1061 = vcmp.lt.s32.totalorder %v997, 16
      %vm1062 = vcmp.lt.s32.totalorder %v998, 16
      %vm1063 = vcmp.lt.s32.totalorder %v999, 16
      %vm1064 = vcmp.lt.s32.totalorder %v1000, 16
      %vm1065 = vcmp.lt.s32.totalorder %v1001, 16
      %vm1066 = vcmp.lt.s32.totalorder %v1002, 16
      %vm1067 = vcmp.lt.s32.totalorder %v1003, 16
      %vm1068 = vcmp.lt.s32.totalorder %v1004, 16
      %vm1069 = vcmp.lt.s32.totalorder %v1005, 16
      %vm1070 = vcmp.lt.s32.totalorder %v1006, 16
      %vm1071 = vcmp.lt.s32.totalorder %v1007, 16
      %vm1072 = vcmp.lt.s32.totalorder %v1008, 16
      %vm1073 = vcmp.lt.s32.totalorder %v1009, 16
      %vm1074 = vcmp.lt.s32.totalorder %v1010, 16
      %vm1075 = vcmp.lt.s32.totalorder %v1011, 16
      %vm1076 = vcmp.lt.s32.totalorder %v1012, 16
      %vm1077 = vcmp.lt.s32.totalorder %v1013, 16
      %vm1078 = vcmp.lt.s32.totalorder %v1014, 16
      %vm1079 = vcmp.lt.s32.totalorder %v1015, 16
      %vm1080 = vcmp.lt.s32.totalorder %v1016, 16
      %vm1081 = vcmp.lt.s32.totalorder %v1017, 16
      %vm1082 = vcmp.lt.s32.totalorder %v1018, 16
      %vm1083 = vcmp.lt.s32.totalorder %v1019, 16
      %vm1084 = vcmp.lt.s32.totalorder %v1020, 16
      %vm1085 = vcmp.lt.s32.totalorder %v1021, 16
      %vm1086 = vcmp.lt.s32.totalorder %v1022, 16
      %vm1087 = vcmp.lt.s32.totalorder %v1023, 16
      %vm1088 = vcmp.lt.s32.totalorder %v1024, 16
      %vm1089 = vcmp.lt.s32.totalorder %v1025, 16
      %vm1090 = vcmp.lt.s32.totalorder %v1026, 16
      %vm1091 = vcmp.lt.s32.totalorder %v1027, 16
      %vm1092 = vcmp.lt.s32.totalorder %v1028, 16
      %vm1093 = vcmp.lt.s32.totalorder %v1029, 16
      %vm1094 = vcmp.lt.s32.totalorder %v1030, 16
      %vm1095 = vcmp.lt.s32.totalorder %v1031, 16
      %vm1096 = vcmp.lt.s32.totalorder %v1032, 16
      %vm1097 = vcmask 27648
      %1098 = vst.msk [vmem:[#allocation2] sm:$0xf] %vm1097, 0
      %1099 = vst.msk [vmem:[#allocation2 + $0x4] sm:$0xf] %vm1097, 0
      %1100 = vst.msk [vmem:[#allocation2 + $0x8] sm:$0xf] %vm1097, 0
      %1101 = vst.msk [vmem:[#allocation2 + $0xc] sm:$0xf] %vm1097, 0
      %1102 = vst.msk [vmem:[#allocation2 + $0x10] sm:$0xf] %vm1097, 0
      %1103 = vst.msk [vmem:[#allocation2 + $0x14] sm:$0xf] %vm1097, 0
      %1104 = vst.msk [vmem:[#allocation2 + $0x20] sm:$0xf] %vm1097, 0
      %1105 = vst.msk [vmem:[#allocation2 + $0x24] sm:$0xf] %vm1097, 0
      %1106 = vst.msk [vmem:[#allocation2 + $0x30] sm:$0xf] %vm1097, 0
      %1107 = vst.msk [vmem:[#allocation2 + $0x34] sm:$0xf] %vm1097, 0
      %1108 = vst.msk [vmem:[#allocation2 + $0x40] sm:$0xf] %vm1097, 0
      %1109 = vst.msk [vmem:[#allocation2 + $0x44] sm:$0xf] %vm1097, 0
      %1110 = vst.msk [vmem:[#allocation2 + $0x50] sm:$0xf] %vm1097, 0
      %1111 = vst.msk [vmem:[#allocation2 + $0x54] sm:$0xf] %vm1097, 0
      %1112 = vst.msk [vmem:[#allocation2 + $0x60] sm:$0xf] %vm1097, 0
      %1113 = vst.msk [vmem:[#allocation2 + $0x64] sm:$0xf] %vm1097, 0
      %1114 = vst.msk [vmem:[#allocation2 + $0x70] sm:$0xf] %vm1097, 0
      %1115 = vst.msk [vmem:[#allocation2 + $0x74] sm:$0xf] %vm1097, 0
      %1116 = vst.msk [vmem:[#allocation2 + $0x80] sm:$0xf] %vm1097, 0
      %1117 = vst.msk [vmem:[#allocation2 + $0x84] sm:$0xf] %vm1097, 0
      %1118 = vst.msk [vmem:[#allocation2 + $0x90] sm:$0xf] %vm1097, 0
      %1119 = vst.msk [vmem:[#allocation2 + $0x94] sm:$0xf] %vm1097, 0
      %1120 = vst.msk [vmem:[#allocation2 + $0xa0] sm:$0xf] %vm1097, 0
      %1121 = vst.msk [vmem:[#allocation2 + $0xa4] sm:$0xf] %vm1097, 0
      %1122 = vst.msk [vmem:[#allocation2 + $0xb0] sm:$0xf] %vm1097, 0
      %1123 = vst.msk [vmem:[#allocation2 + $0xb4] sm:$0xf] %vm1097, 0
      %1124 = vst.msk [vmem:[#allocation2 + $0xc0] sm:$0xf] %vm1097, 0
      %1125 = vst.msk [vmem:[#allocation2 + $0xc4] sm:$0xf] %vm1097, 0
      %1126 = vst.msk [vmem:[#allocation2 + $0xd0] sm:$0xf] %vm1097, 0
      %1127 = vst.msk [vmem:[#allocation2 + $0xd4] sm:$0xf] %vm1097, 0
      %1128 = vst.msk [vmem:[#allocation2 + $0xe0] sm:$0xf] %vm1097, 0
      %1129 = vst.msk [vmem:[#allocation2 + $0xe4] sm:$0xf] %vm1097, 0
      %1130 = vst.msk [vmem:[#allocation2 + $0xf0] sm:$0xf] %vm1097, 0
      %1131 = vst.msk [vmem:[#allocation2 + $0xf4] sm:$0xf] %vm1097, 0
      %1132 = vst.msk [vmem:[#allocation2 + $0x100] sm:$0xf] %vm1097, 0
      %1133 = vst.msk [vmem:[#allocation2 + $0x104] sm:$0xf] %vm1097, 0
      %1134 = vst.msk [vmem:[#allocation2 + $0x110] sm:$0xf] %vm1097, 0
      %1135 = vst.msk [vmem:[#allocation2 + $0x114] sm:$0xf] %vm1097, 0
      %1136 = vst.msk [vmem:[#allocation2 + $0x118] sm:$0xf] %vm1097, 0
      %1137 = vst.msk [vmem:[#allocation2 + $0x11c] sm:$0xf] %vm1097, 0
      %1138 = vst.msk [vmem:[#allocation2 + $0x120] sm:$0xf] %vm1097, 0
      %1139 = vst.msk [vmem:[#allocation2 + $0x124] sm:$0xf] %vm1097, 0
      %1140 = vst.msk [vmem:[#allocation2 + $0x128] sm:$0xf] %vm1097, 0
      %1141 = vst.msk [vmem:[#allocation2 + $0x12c] sm:$0xf] %vm1097, 0
      %v1142 = vld [vmem:[%s192] sm:$0xff]
      %v1143 = vld [vmem:[%s192 + $0x8] sm:$0xff]
      %v1144 = vpack.c.bf16 %v1143, %v1142
      %v1146 = vunpack.c.l.b16 %v1144
      %v1147 = vunpack.c.h.b16 %v1144
      %v1148 = vpack.c.b16 %v1146, %v1146
      %v1149 = vpack.c.b16 %v1147, %v1147
      %1152 = vst.msk [vmem:[#allocation2 + $0x18] sm:$0xf] %vm1097, %v1148
      %1153 = vst.msk [vmem:[#allocation2 + $0x1c] sm:$0xf] %vm1097, %v1149
      %s1154 = scalar_lea.vmem %s192, 16
      %v1155 = vld [vmem:[%s1154] sm:$0xff]
      %v1156 = vld [vmem:[%s1154 + $0x8] sm:$0xff]
      %v1157 = vpack.c.bf16 %v1156, %v1155
      %v1159 = vunpack.c.l.b16 %v1157
      %v1160 = vunpack.c.h.b16 %v1157
      %v1161 = vpack.c.b16 %v1159, %v1159
      %v1162 = vpack.c.b16 %v1160, %v1160
      %1165 = vst.msk [vmem:[#allocation2 + $0x28] sm:$0xf] %vm1097, %v1161
      %1166 = vst.msk [vmem:[#allocation2 + $0x2c] sm:$0xf] %vm1097, %v1162
      %s1167 = scalar_lea.vmem %s192, 32
      %v1168 = vld [vmem:[%s1167] sm:$0xff]
      %v1169 = vld [vmem:[%s1167 + $0x8] sm:$0xff]
      %v1170 = vpack.c.bf16 %v1169, %v1168
      %v1172 = vunpack.c.l.b16 %v1170
      %v1173 = vunpack.c.h.b16 %v1170
      %v1174 = vpack.c.b16 %v1172, %v1172
      %v1175 = vpack.c.b16 %v1173, %v1173
      %1178 = vst.msk [vmem:[#allocation2 + $0x38] sm:$0xf] %vm1097, %v1174
      %1179 = vst.msk [vmem:[#allocation2 + $0x3c] sm:$0xf] %vm1097, %v1175
      %s1180 = scalar_lea.vmem %s192, 48
      %v1181 = vld [vmem:[%s1180] sm:$0xff]
      %v1182 = vld [vmem:[%s1180 + $0x8] sm:$0xff]
      %v1183 = vpack.c.bf16 %v1182, %v1181
      %v1185 = vunpack.c.l.b16 %v1183
      %v1186 = vunpack.c.h.b16 %v1183
      %v1187 = vpack.c.b16 %v1185, %v1185
      %v1188 = vpack.c.b16 %v1186, %v1186
      %1191 = vst.msk [vmem:[#allocation2 + $0x48] sm:$0xf] %vm1097, %v1187
      %1192 = vst.msk [vmem:[#allocation2 + $0x4c] sm:$0xf] %vm1097, %v1188
      %s1193 = scalar_lea.vmem %s192, 64
      %v1194 = vld [vmem:[%s1193] sm:$0xff]
      %v1195 = vld [vmem:[%s1193 + $0x8] sm:$0xff]
      %v1196 = vpack.c.bf16 %v1195, %v1194
      %v1198 = vunpack.c.l.b16 %v1196
      %v1199 = vunpack.c.h.b16 %v1196
      %v1200 = vpack.c.b16 %v1198, %v1198
      %v1201 = vpack.c.b16 %v1199, %v1199
      %1204 = vst.msk [vmem:[#allocation2 + $0x58] sm:$0xf] %vm1097, %v1200
      %1205 = vst.msk [vmem:[#allocation2 + $0x5c] sm:$0xf] %vm1097, %v1201
      %s1206 = scalar_lea.vmem %s192, 80
      %v1207 = vld [vmem:[%s1206] sm:$0xff]
      %v1208 = vld [vmem:[%s1206 + $0x8] sm:$0xff]
      %v1209 = vpack.c.bf16 %v1208, %v1207
      %v1211 = vunpack.c.l.b16 %v1209
      %v1212 = vunpack.c.h.b16 %v1209
      %v1213 = vpack.c.b16 %v1211, %v1211
      %v1214 = vpack.c.b16 %v1212, %v1212
      %1217 = vst.msk [vmem:[#allocation2 + $0x68] sm:$0xf] %vm1097, %v1213
      %1218 = vst.msk [vmem:[#allocation2 + $0x6c] sm:$0xf] %vm1097, %v1214
      %s1219 = scalar_lea.vmem %s192, 96
      %v1220 = vld [vmem:[%s1219] sm:$0xff]
      %v1221 = vld [vmem:[%s1219 + $0x8] sm:$0xff]
      %v1222 = vpack.c.bf16 %v1221, %v1220
      %v1224 = vunpack.c.l.b16 %v1222
      %v1225 = vunpack.c.h.b16 %v1222
      %v1226 = vpack.c.b16 %v1224, %v1224
      %v1227 = vpack.c.b16 %v1225, %v1225
      %1230 = vst.msk [vmem:[#allocation2 + $0x78] sm:$0xf] %vm1097, %v1226
      %1231 = vst.msk [vmem:[#allocation2 + $0x7c] sm:$0xf] %vm1097, %v1227
      %s1232 = scalar_lea.vmem %s192, 112
      %v1233 = vld [vmem:[%s1232] sm:$0xff]
      %v1234 = vld [vmem:[%s1232 + $0x8] sm:$0xff]
      %v1235 = vpack.c.bf16 %v1234, %v1233
      %v1237 = vunpack.c.l.b16 %v1235
      %v1238 = vunpack.c.h.b16 %v1235
      %v1239 = vpack.c.b16 %v1237, %v1237
      %v1240 = vpack.c.b16 %v1238, %v1238
      %1243 = vst.msk [vmem:[#allocation2 + $0x88] sm:$0xf] %vm1097, %v1239
      %1244 = vst.msk [vmem:[#allocation2 + $0x8c] sm:$0xf] %vm1097, %v1240
      %s1245 = scalar_lea.vmem %s192, 128
      %v1246 = vld [vmem:[%s1245] sm:$0xff]
      %v1247 = vld [vmem:[%s1245 + $0x8] sm:$0xff]
      %v1248 = vpack.c.bf16 %v1247, %v1246
      %v1250 = vunpack.c.l.b16 %v1248
      %v1251 = vunpack.c.h.b16 %v1248
      %v1252 = vpack.c.b16 %v1250, %v1250
      %v1253 = vpack.c.b16 %v1251, %v1251
      %1256 = vst.msk [vmem:[#allocation2 + $0x98] sm:$0xf] %vm1097, %v1252
      %1257 = vst.msk [vmem:[#allocation2 + $0x9c] sm:$0xf] %vm1097, %v1253
      %s1258 = scalar_lea.vmem %s192, 144
      %v1259 = vld [vmem:[%s1258] sm:$0xff]
      %v1260 = vld [vmem:[%s1258 + $0x8] sm:$0xff]
      %v1261 = vpack.c.bf16 %v1260, %v1259
      %v1263 = vunpack.c.l.b16 %v1261
      %v1264 = vunpack.c.h.b16 %v1261
      %v1265 = vpack.c.b16 %v1263, %v1263
      %v1266 = vpack.c.b16 %v1264, %v1264
      %1269 = vst.msk [vmem:[#allocation2 + $0xa8] sm:$0xf] %vm1097, %v1265
      %1270 = vst.msk [vmem:[#allocation2 + $0xac] sm:$0xf] %vm1097, %v1266
      %s1271 = scalar_lea.vmem %s192, 160
      %v1272 = vld [vmem:[%s1271] sm:$0xff]
      %v1273 = vld [vmem:[%s1271 + $0x8] sm:$0xff]
      %v1274 = vpack.c.bf16 %v1273, %v1272
      %v1276 = vunpack.c.l.b16 %v1274
      %v1277 = vunpack.c.h.b16 %v1274
      %v1278 = vpack.c.b16 %v1276, %v1276
      %v1279 = vpack.c.b16 %v1277, %v1277
      %1282 = vst.msk [vmem:[#allocation2 + $0xb8] sm:$0xf] %vm1097, %v1278
      %1283 = vst.msk [vmem:[#allocation2 + $0xbc] sm:$0xf] %vm1097, %v1279
      %s1284 = scalar_lea.vmem %s192, 176
      %v1285 = vld [vmem:[%s1284] sm:$0xff]
      %v1286 = vld [vmem:[%s1284 + $0x8] sm:$0xff]
      %v1287 = vpack.c.bf16 %v1286, %v1285
      %v1289 = vunpack.c.l.b16 %v1287
      %v1290 = vunpack.c.h.b16 %v1287
      %v1291 = vpack.c.b16 %v1289, %v1289
      %v1292 = vpack.c.b16 %v1290, %v1290
      %1295 = vst.msk [vmem:[#allocation2 + $0xc8] sm:$0xf] %vm1097, %v1291
      %1296 = vst.msk [vmem:[#allocation2 + $0xcc] sm:$0xf] %vm1097, %v1292
      %s1297 = scalar_lea.vmem %s192, 192
      %v1298 = vld [vmem:[%s1297] sm:$0xff]
      %v1299 = vld [vmem:[%s1297 + $0x8] sm:$0xff]
      %v1300 = vpack.c.bf16 %v1299, %v1298
      %v1302 = vunpack.c.l.b16 %v1300
      %v1303 = vunpack.c.h.b16 %v1300
      %v1304 = vpack.c.b16 %v1302, %v1302
      %v1305 = vpack.c.b16 %v1303, %v1303
      %1308 = vst.msk [vmem:[#allocation2 + $0xd8] sm:$0xf] %vm1097, %v1304
      %1309 = vst.msk [vmem:[#allocation2 + $0xdc] sm:$0xf] %vm1097, %v1305
      %s1310 = scalar_lea.vmem %s192, 208
      %v1311 = vld [vmem:[%s1310] sm:$0xff]
      %v1312 = vld [vmem:[%s1310 + $0x8] sm:$0xff]
      %v1313 = vpack.c.bf16 %v1312, %v1311
      %v1315 = vunpack.c.l.b16 %v1313
      %v1316 = vunpack.c.h.b16 %v1313
      %v1317 = vpack.c.b16 %v1315, %v1315
      %v1318 = vpack.c.b16 %v1316, %v1316
      %1321 = vst.msk [vmem:[#allocation2 + $0xe8] sm:$0xf] %vm1097, %v1317
      %1322 = vst.msk [vmem:[#allocation2 + $0xec] sm:$0xf] %vm1097, %v1318
      %s1323 = scalar_lea.vmem %s192, 224
      %v1324 = vld [vmem:[%s1323] sm:$0xff]
      %v1325 = vld [vmem:[%s1323 + $0x8] sm:$0xff]
      %v1326 = vpack.c.bf16 %v1325, %v1324
      %v1328 = vunpack.c.l.b16 %v1326
      %v1329 = vunpack.c.h.b16 %v1326
      %v1330 = vpack.c.b16 %v1328, %v1328
      %v1331 = vpack.c.b16 %v1329, %v1329
      %1334 = vst.msk [vmem:[#allocation2 + $0xf8] sm:$0xf] %vm1097, %v1330
      %1335 = vst.msk [vmem:[#allocation2 + $0xfc] sm:$0xf] %vm1097, %v1331
      %s1336 = scalar_lea.vmem %s192, 240
      %v1337 = vld [vmem:[%s1336] sm:$0xff]
      %v1338 = vld [vmem:[%s1336 + $0x8] sm:$0xff]
      %v1339 = vpack.c.bf16 %v1338, %v1337
      %v1341 = vunpack.c.l.b16 %v1339
      %v1342 = vunpack.c.h.b16 %v1339
      %v1343 = vpack.c.b16 %v1341, %v1341
      %v1344 = vpack.c.b16 %v1342, %v1342
      %1347 = vst.msk [vmem:[#allocation2 + $0x108] sm:$0xf] %vm1097, %v1343
      %1348 = vst.msk [vmem:[#allocation2 + $0x10c] sm:$0xf] %vm1097, %v1344
      %v1349 = vld [vmem:[#allocation2 + $0x4] sm:$0x8]
      %v1350 = vld [vmem:[#allocation2 + $0x8] sm:$0xf]
      %v1351 = vld [vmem:[#allocation2 + $0xc] sm:$0xf]
      %v1352 = vld [vmem:[#allocation2 + $0x10] sm:$0xf]
      %v1353 = vld [vmem:[#allocation2 + $0x14] sm:$0xf]
      %v1354 = vld [vmem:[#allocation2 + $0x18] sm:$0xf]
      %v1355 = vld [vmem:[#allocation2 + $0x1c] sm:$0xf]
      %v1356 = vld [vmem:[#allocation2 + $0x20] sm:$0xf]
      %v1357 = vld [vmem:[#allocation2 + $0x24] sm:$0xf]
      %v1358 = vld [vmem:[#allocation2 + $0x28] sm:$0xf]
      %v1359 = vld [vmem:[#allocation2 + $0x2c] sm:$0xf]
      %v1360 = vld [vmem:[#allocation2 + $0x30] sm:$0xf]
      %v1361 = vld [vmem:[#allocation2 + $0x34] sm:$0xf]
      %v1362 = vld [vmem:[#allocation2 + $0x38] sm:$0xf]
      %v1363 = vld [vmem:[#allocation2 + $0x3c] sm:$0xf]
      %v1364 = vld [vmem:[#allocation2 + $0x40] sm:$0xf]
      %v1365 = vld [vmem:[#allocation2 + $0x44] sm:$0xf]
      %v1366 = vld [vmem:[#allocation2 + $0x48] sm:$0xf]
      %v1367 = vld [vmem:[#allocation2 + $0x4c] sm:$0xf]
      %v1368 = vld [vmem:[#allocation2 + $0x50] sm:$0xf]
      %v1369 = vld [vmem:[#allocation2 + $0x54] sm:$0xf]
      %v1370 = vld [vmem:[#allocation2 + $0x58] sm:$0xf]
      %v1371 = vld [vmem:[#allocation2 + $0x5c] sm:$0xf]
      %v1372 = vld [vmem:[#allocation2 + $0x60] sm:$0xf]
      %v1373 = vld [vmem:[#allocation2 + $0x64] sm:$0xf]
      %v1374 = vld [vmem:[#allocation2 + $0x68] sm:$0xf]
      %v1375 = vld [vmem:[#allocation2 + $0x6c] sm:$0xf]
      %v1376 = vld [vmem:[#allocation2 + $0x70] sm:$0xf]
      %v1377 = vld [vmem:[#allocation2 + $0x74] sm:$0xf]
      %v1378 = vld [vmem:[#allocation2 + $0x78] sm:$0xf]
      %v1379 = vld [vmem:[#allocation2 + $0x7c] sm:$0xf]
      %v1380 = vld [vmem:[#allocation2 + $0x80] sm:$0xf]
      %v1381 = vld [vmem:[#allocation2 + $0x84] sm:$0xf]
      %v1382 = vld [vmem:[#allocation2 + $0x88] sm:$0xf]
      %v1383 = vld [vmem:[#allocation2 + $0x8c] sm:$0xf]
      %v1384 = vld [vmem:[#allocation2 + $0x90] sm:$0xf]
      %v1385 = vld [vmem:[#allocation2 + $0x94] sm:$0xf]
      %v1386 = vld [vmem:[#allocation2 + $0x98] sm:$0xf]
      %v1387 = vld [vmem:[#allocation2 + $0x9c] sm:$0xf]
      %v1388 = vld [vmem:[#allocation2 + $0xa0] sm:$0xf]
      %v1389 = vld [vmem:[#allocation2 + $0xa4] sm:$0xf]
      %v1390 = vld [vmem:[#allocation2 + $0xa8] sm:$0xf]
      %v1391 = vld [vmem:[#allocation2 + $0xac] sm:$0xf]
      %v1392 = vld [vmem:[#allocation2 + $0xb0] sm:$0xf]
      %v1393 = vld [vmem:[#allocation2 + $0xb4] sm:$0xf]
      %v1394 = vld [vmem:[#allocation2 + $0xb8] sm:$0xf]
      %v1395 = vld [vmem:[#allocation2 + $0xbc] sm:$0xf]
      %v1396 = vld [vmem:[#allocation2 + $0xc0] sm:$0xf]
      %v1397 = vld [vmem:[#allocation2 + $0xc4] sm:$0xf]
      %v1398 = vld [vmem:[#allocation2 + $0xc8] sm:$0xf]
      %v1399 = vld [vmem:[#allocation2 + $0xcc] sm:$0xf]
      %v1400 = vld [vmem:[#allocation2 + $0xd0] sm:$0xf]
      %v1401 = vld [vmem:[#allocation2 + $0xd4] sm:$0xf]
      %v1402 = vld [vmem:[#allocation2 + $0xd8] sm:$0xf]
      %v1403 = vld [vmem:[#allocation2 + $0xdc] sm:$0xf]
      %v1404 = vld [vmem:[#allocation2 + $0xe0] sm:$0xf]
      %v1405 = vld [vmem:[#allocation2 + $0xe4] sm:$0xf]
      %v1406 = vld [vmem:[#allocation2 + $0xe8] sm:$0xf]
      %v1407 = vld [vmem:[#allocation2 + $0xec] sm:$0xf]
      %v1408 = vld [vmem:[#allocation2 + $0xf0] sm:$0xf]
      %v1409 = vld [vmem:[#allocation2 + $0xf4] sm:$0xf]
      %v1410 = vld [vmem:[#allocation2 + $0xf8] sm:$0xf]
      %v1411 = vld [vmem:[#allocation2 + $0xfc] sm:$0xf]
      %v1412 = vld [vmem:[#allocation2 + $0x100] sm:$0xf]
      %v1413 = vld [vmem:[#allocation2 + $0x104] sm:$0xf]
      %v1414 = vld [vmem:[#allocation2 + $0x108] sm:$0x1]
      %v1415 = vld [vmem:[#allocation2 + $0x14] sm:$0x8]
      %v1416 = vld [vmem:[#allocation2 + $0x108] sm:$0xf]
      %v1417 = vld [vmem:[#allocation2 + $0x10c] sm:$0xf]
      %v1418 = vld [vmem:[#allocation2 + $0x110] sm:$0xf]
      %v1419 = vld [vmem:[#allocation2 + $0x114] sm:$0xf]
      %v1420 = vld [vmem:[#allocation2 + $0x118] sm:$0x1]
      %v1421 = vld [vmem:[#allocation2 + $0x24] sm:$0x8]
      %v1422 = vld [vmem:[#allocation2 + $0x118] sm:$0xf]
      %v1423 = vld [vmem:[#allocation2 + $0x11c] sm:$0xf]
      %v1424 = vld [vmem:[#allocation2 + $0x120] sm:$0xf]
      %v1425 = vld [vmem:[#allocation2 + $0x124] sm:$0xf]
      %v1426 = vld [vmem:[#allocation2 + $0x128] sm:$0x1]
      %v1492 = vunpack.c.l.b16 %v1349
      %v1493 = vunpack.c.l.b16 %v1350
      %v1494 = vunpack.c.l.b16 %v1351
      %v1495 = vunpack.c.l.b16 %v1352
      %v1496 = vunpack.c.l.b16 %v1353
      %v1497 = vunpack.c.l.b16 %v1354
      %v1498 = vunpack.c.l.b16 %v1355
      %v1499 = vunpack.c.l.b16 %v1356
      %v1500 = vunpack.c.l.b16 %v1357
      %v1501 = vunpack.c.l.b16 %v1358
      %v1502 = vunpack.c.l.b16 %v1359
      %v1503 = vunpack.c.l.b16 %v1360
      %v1504 = vunpack.c.l.b16 %v1361
      %v1505 = vunpack.c.l.b16 %v1362
      %v1506 = vunpack.c.l.b16 %v1363
      %v1507 = vunpack.c.l.b16 %v1364
      %v1508 = vunpack.c.l.b16 %v1365
      %v1509 = vunpack.c.l.b16 %v1366
      %v1510 = vunpack.c.l.b16 %v1367
      %v1511 = vunpack.c.l.b16 %v1368
      %v1512 = vunpack.c.l.b16 %v1369
      %v1513 = vunpack.c.l.b16 %v1370
      %v1514 = vunpack.c.l.b16 %v1371
      %v1515 = vunpack.c.l.b16 %v1372
      %v1516 = vunpack.c.l.b16 %v1373
      %v1517 = vunpack.c.l.b16 %v1374
      %v1518 = vunpack.c.l.b16 %v1375
      %v1519 = vunpack.c.l.b16 %v1376
      %v1520 = vunpack.c.l.b16 %v1377
      %v1521 = vunpack.c.l.b16 %v1378
      %v1522 = vunpack.c.l.b16 %v1379
      %v1523 = vunpack.c.l.b16 %v1380
      %v1524 = vunpack.c.l.b16 %v1381
      %v1525 = vunpack.c.l.b16 %v1382
      %v1526 = vunpack.c.l.b16 %v1383
      %v1527 = vunpack.c.l.b16 %v1384
      %v1528 = vunpack.c.l.b16 %v1385
      %v1529 = vunpack.c.l.b16 %v1386
      %v1530 = vunpack.c.l.b16 %v1387
      %v1531 = vunpack.c.l.b16 %v1388
      %v1532 = vunpack.c.l.b16 %v1389
      %v1533 = vunpack.c.l.b16 %v1390
      %v1534 = vunpack.c.l.b16 %v1391
      %v1535 = vunpack.c.l.b16 %v1392
      %v1536 = vunpack.c.l.b16 %v1393
      %v1537 = vunpack.c.l.b16 %v1394
      %v1538 = vunpack.c.l.b16 %v1395
      %v1539 = vunpack.c.l.b16 %v1396
      %v1540 = vunpack.c.l.b16 %v1397
      %v1541 = vunpack.c.l.b16 %v1398
      %v1542 = vunpack.c.l.b16 %v1399
      %v1543 = vunpack.c.l.b16 %v1400
      %v1544 = vunpack.c.l.b16 %v1401
      %v1545 = vunpack.c.l.b16 %v1402
      %v1546 = vunpack.c.l.b16 %v1403
      %v1547 = vunpack.c.l.b16 %v1404
      %v1548 = vunpack.c.l.b16 %v1405
      %v1549 = vunpack.c.l.b16 %v1406
      %v1550 = vunpack.c.l.b16 %v1407
      %v1551 = vunpack.c.l.b16 %v1408
      %v1552 = vunpack.c.l.b16 %v1409
      %v1553 = vunpack.c.l.b16 %v1410
      %v1554 = vunpack.c.l.b16 %v1411
      %v1555 = vunpack.c.l.b16 %v1412
      %v1556 = vunpack.c.l.b16 %v1413
      %v1557 = vpack.c.b16 %v1493, %v1492
      %v1558 = vpack.c.b16 %v1495, %v1494
      %v1559 = vpack.c.b16 %v1497, %v1496
      %v1560 = vpack.c.b16 %v1499, %v1498
      %v1561 = vpack.c.b16 %v1501, %v1500
      %v1562 = vpack.c.b16 %v1503, %v1502
      %v1563 = vpack.c.b16 %v1505, %v1504
      %v1564 = vpack.c.b16 %v1507, %v1506
      %v1565 = vpack.c.b16 %v1509, %v1508
      %v1566 = vpack.c.b16 %v1511, %v1510
      %v1567 = vpack.c.b16 %v1513, %v1512
      %v1568 = vpack.c.b16 %v1515, %v1514
      %v1569 = vpack.c.b16 %v1517, %v1516
      %v1570 = vpack.c.b16 %v1519, %v1518
      %v1571 = vpack.c.b16 %v1521, %v1520
      %v1572 = vpack.c.b16 %v1523, %v1522
      %v1573 = vpack.c.b16 %v1525, %v1524
      %v1574 = vpack.c.b16 %v1527, %v1526
      %v1575 = vpack.c.b16 %v1529, %v1528
      %v1576 = vpack.c.b16 %v1531, %v1530
      %v1577 = vpack.c.b16 %v1533, %v1532
      %v1578 = vpack.c.b16 %v1535, %v1534
      %v1579 = vpack.c.b16 %v1537, %v1536
      %v1580 = vpack.c.b16 %v1539, %v1538
      %v1581 = vpack.c.b16 %v1541, %v1540
      %v1582 = vpack.c.b16 %v1543, %v1542
      %v1583 = vpack.c.b16 %v1545, %v1544
      %v1584 = vpack.c.b16 %v1547, %v1546
      %v1585 = vpack.c.b16 %v1549, %v1548
      %v1586 = vpack.c.b16 %v1551, %v1550
      %v1587 = vpack.c.b16 %v1553, %v1552
      %v1588 = vpack.c.b16 %v1555, %v1554
      %v1589 = vpack.c.b16 %v1556, %v1556
      %v1590 = vpack.c.b16 %v1494, %v1493
      %v1591 = vpack.c.b16 %v1496, %v1495
      %v1592 = vpack.c.b16 %v1498, %v1497
      %v1593 = vpack.c.b16 %v1500, %v1499
      %v1594 = vpack.c.b16 %v1502, %v1501
      %v1595 = vpack.c.b16 %v1504, %v1503
      %v1596 = vpack.c.b16 %v1506, %v1505
      %v1597 = vpack.c.b16 %v1508, %v1507
      %v1598 = vpack.c.b16 %v1510, %v1509
      %v1599 = vpack.c.b16 %v1512, %v1511
      %v1600 = vpack.c.b16 %v1514, %v1513
      %v1601 = vpack.c.b16 %v1516, %v1515
      %v1602 = vpack.c.b16 %v1518, %v1517
      %v1603 = vpack.c.b16 %v1520, %v1519
      %v1604 = vpack.c.b16 %v1522, %v1521
      %v1605 = vpack.c.b16 %v1524, %v1523
      %v1606 = vpack.c.b16 %v1526, %v1525
      %v1607 = vpack.c.b16 %v1528, %v1527
      %v1608 = vpack.c.b16 %v1530, %v1529
      %v1609 = vpack.c.b16 %v1532, %v1531
      %v1610 = vpack.c.b16 %v1534, %v1533
      %v1611 = vpack.c.b16 %v1536, %v1535
      %v1612 = vpack.c.b16 %v1538, %v1537
      %v1613 = vpack.c.b16 %v1540, %v1539
      %v1614 = vpack.c.b16 %v1542, %v1541
      %v1615 = vpack.c.b16 %v1544, %v1543
      %v1616 = vpack.c.b16 %v1546, %v1545
      %v1617 = vpack.c.b16 %v1548, %v1547
      %v1618 = vpack.c.b16 %v1550, %v1549
      %v1619 = vpack.c.b16 %v1552, %v1551
      %v1620 = vpack.c.b16 %v1554, %v1553
      %v1621 = vpack.c.b16 %v1556, %v1555
      %vm1622 = vsmask.f32 3328
      %v1624 = vshrl.u32 %v1590, 16
      %v1626 = vrot.slane %v1624, 4
      %v1627 = vshll.u32 %v1590, 16
      %v1629 = vrot.slane %v1627, 5
      %v1630 = vor.u32 %v1626, %v1629
      %v1632 = vshrl.u32 %v1591, 16
      %v1634 = vrot.slane %v1632, 4
      %v1635 = vshll.u32 %v1591, 16
      %v1637 = vrot.slane %v1635, 5
      %v1638 = vor.u32 %v1634, %v1637
      %v1639 = vsel %vm1622, %v1630, %v1638
      %v1641 = vshrl.u32 %v1592, 16
      %v1643 = vrot.slane %v1641, 4
      %v1644 = vshll.u32 %v1592, 16
      %v1646 = vrot.slane %v1644, 5
      %v1647 = vor.u32 %v1643, %v1646
      %v1648 = vsel %vm1622, %v1638, %v1647
      %v1650 = vshrl.u32 %v1593, 16
      %v1652 = vrot.slane %v1650, 4
      %v1653 = vshll.u32 %v1593, 16
      %v1655 = vrot.slane %v1653, 5
      %v1656 = vor.u32 %v1652, %v1655
      %v1657 = vsel %vm1622, %v1647, %v1656
      %v1659 = vshrl.u32 %v1594, 16
      %v1661 = vrot.slane %v1659, 4
      %v1662 = vshll.u32 %v1594, 16
      %v1664 = vrot.slane %v1662, 5
      %v1665 = vor.u32 %v1661, %v1664
      %v1666 = vsel %vm1622, %v1656, %v1665
      %v1668 = vshrl.u32 %v1595, 16
      %v1670 = vrot.slane %v1668, 4
      %v1671 = vshll.u32 %v1595, 16
      %v1673 = vrot.slane %v1671, 5
      %v1674 = vor.u32 %v1670, %v1673
      %v1675 = vsel %vm1622, %v1665, %v1674
      %v1677 = vshrl.u32 %v1596, 16
      %v1679 = vrot.slane %v1677, 4
      %v1680 = vshll.u32 %v1596, 16
      %v1682 = vrot.slane %v1680, 5
      %v1683 = vor.u32 %v1679, %v1682
      %v1684 = vsel %vm1622, %v1674, %v1683
      %v1686 = vshrl.u32 %v1597, 16
      %v1688 = vrot.slane %v1686, 4
      %v1689 = vshll.u32 %v1597, 16
      %v1691 = vrot.slane %v1689, 5
      %v1692 = vor.u32 %v1688, %v1691
      %v1693 = vsel %vm1622, %v1683, %v1692
      %v1695 = vshrl.u32 %v1598, 16
      %v1697 = vrot.slane %v1695, 4
      %v1698 = vshll.u32 %v1598, 16
      %v1700 = vrot.slane %v1698, 5
      %v1701 = vor.u32 %v1697, %v1700
      %v1702 = vsel %vm1622, %v1692, %v1701
      %v1704 = vshrl.u32 %v1599, 16
      %v1706 = vrot.slane %v1704, 4
      %v1707 = vshll.u32 %v1599, 16
      %v1709 = vrot.slane %v1707, 5
      %v1710 = vor.u32 %v1706, %v1709
      %v1711 = vsel %vm1622, %v1701, %v1710
      %v1713 = vshrl.u32 %v1600, 16
      %v1715 = vrot.slane %v1713, 4
      %v1716 = vshll.u32 %v1600, 16
      %v1718 = vrot.slane %v1716, 5
      %v1719 = vor.u32 %v1715, %v1718
      %v1720 = vsel %vm1622, %v1710, %v1719
      %v1722 = vshrl.u32 %v1601, 16
      %v1724 = vrot.slane %v1722, 4
      %v1725 = vshll.u32 %v1601, 16
      %v1727 = vrot.slane %v1725, 5
      %v1728 = vor.u32 %v1724, %v1727
      %v1729 = vsel %vm1622, %v1719, %v1728
      %v1731 = vshrl.u32 %v1602, 16
      %v1733 = vrot.slane %v1731, 4
      %v1734 = vshll.u32 %v1602, 16
      %v1736 = vrot.slane %v1734, 5
      %v1737 = vor.u32 %v1733, %v1736
      %v1738 = vsel %vm1622, %v1728, %v1737
      %v1740 = vshrl.u32 %v1603, 16
      %v1742 = vrot.slane %v1740, 4
      %v1743 = vshll.u32 %v1603, 16
      %v1745 = vrot.slane %v1743, 5
      %v1746 = vor.u32 %v1742, %v1745
      %v1747 = vsel %vm1622, %v1737, %v1746
      %v1749 = vshrl.u32 %v1604, 16
      %v1751 = vrot.slane %v1749, 4
      %v1752 = vshll.u32 %v1604, 16
      %v1754 = vrot.slane %v1752, 5
      %v1755 = vor.u32 %v1751, %v1754
      %v1756 = vsel %vm1622, %v1746, %v1755
      %v1758 = vshrl.u32 %v1605, 16
      %v1760 = vrot.slane %v1758, 4
      %v1761 = vshll.u32 %v1605, 16
      %v1763 = vrot.slane %v1761, 5
      %v1764 = vor.u32 %v1760, %v1763
      %v1765 = vsel %vm1622, %v1755, %v1764
      %v1767 = vshrl.u32 %v1606, 16
      %v1769 = vrot.slane %v1767, 4
      %v1770 = vshll.u32 %v1606, 16
      %v1772 = vrot.slane %v1770, 5
      %v1773 = vor.u32 %v1769, %v1772
      %v1774 = vsel %vm1622, %v1764, %v1773
      %v1776 = vshrl.u32 %v1607, 16
      %v1778 = vrot.slane %v1776, 4
      %v1779 = vshll.u32 %v1607, 16
      %v1781 = vrot.slane %v1779, 5
      %v1782 = vor.u32 %v1778, %v1781
      %v1783 = vsel %vm1622, %v1773, %v1782
      %v1785 = vshrl.u32 %v1608, 16
      %v1787 = vrot.slane %v1785, 4
      %v1788 = vshll.u32 %v1608, 16
      %v1790 = vrot.slane %v1788, 5
      %v1791 = vor.u32 %v1787, %v1790
      %v1792 = vsel %vm1622, %v1782, %v1791
      %v1794 = vshrl.u32 %v1609, 16
      %v1796 = vrot.slane %v1794, 4
      %v1797 = vshll.u32 %v1609, 16
      %v1799 = vrot.slane %v1797, 5
      %v1800 = vor.u32 %v1796, %v1799
      %v1801 = vsel %vm1622, %v1791, %v1800
      %v1803 = vshrl.u32 %v1610, 16
      %v1805 = vrot.slane %v1803, 4
      %v1806 = vshll.u32 %v1610, 16
      %v1808 = vrot.slane %v1806, 5
      %v1809 = vor.u32 %v1805, %v1808
      %v1810 = vsel %vm1622, %v1800, %v1809
      %v1812 = vshrl.u32 %v1611, 16
      %v1814 = vrot.slane %v1812, 4
      %v1815 = vshll.u32 %v1611, 16
      %v1817 = vrot.slane %v1815, 5
      %v1818 = vor.u32 %v1814, %v1817
      %v1819 = vsel %vm1622, %v1809, %v1818
      %v1821 = vshrl.u32 %v1612, 16
      %v1823 = vrot.slane %v1821, 4
      %v1824 = vshll.u32 %v1612, 16
      %v1826 = vrot.slane %v1824, 5
      %v1827 = vor.u32 %v1823, %v1826
      %v1828 = vsel %vm1622, %v1818, %v1827
      %v1830 = vshrl.u32 %v1613, 16
      %v1832 = vrot.slane %v1830, 4
      %v1833 = vshll.u32 %v1613, 16
      %v1835 = vrot.slane %v1833, 5
      %v1836 = vor.u32 %v1832, %v1835
      %v1837 = vsel %vm1622, %v1827, %v1836
      %v1839 = vshrl.u32 %v1614, 16
      %v1841 = vrot.slane %v1839, 4
      %v1842 = vshll.u32 %v1614, 16
      %v1844 = vrot.slane %v1842, 5
      %v1845 = vor.u32 %v1841, %v1844
      %v1846 = vsel %vm1622, %v1836, %v1845
      %v1848 = vshrl.u32 %v1615, 16
      %v1850 = vrot.slane %v1848, 4
      %v1851 = vshll.u32 %v1615, 16
      %v1853 = vrot.slane %v1851, 5
      %v1854 = vor.u32 %v1850, %v1853
      %v1855 = vsel %vm1622, %v1845, %v1854
      %v1857 = vshrl.u32 %v1616, 16
      %v1859 = vrot.slane %v1857, 4
      %v1860 = vshll.u32 %v1616, 16
      %v1862 = vrot.slane %v1860, 5
      %v1863 = vor.u32 %v1859, %v1862
      %v1864 = vsel %vm1622, %v1854, %v1863
      %v1866 = vshrl.u32 %v1617, 16
      %v1868 = vrot.slane %v1866, 4
      %v1869 = vshll.u32 %v1617, 16
      %v1871 = vrot.slane %v1869, 5
      %v1872 = vor.u32 %v1868, %v1871
      %v1873 = vsel %vm1622, %v1863, %v1872
      %v1875 = vshrl.u32 %v1618, 16
      %v1877 = vrot.slane %v1875, 4
      %v1878 = vshll.u32 %v1618, 16
      %v1880 = vrot.slane %v1878, 5
      %v1881 = vor.u32 %v1877, %v1880
      %v1882 = vsel %vm1622, %v1872, %v1881
      %v1884 = vshrl.u32 %v1619, 16
      %v1886 = vrot.slane %v1884, 4
      %v1887 = vshll.u32 %v1619, 16
      %v1889 = vrot.slane %v1887, 5
      %v1890 = vor.u32 %v1886, %v1889
      %v1891 = vsel %vm1622, %v1881, %v1890
      %v1893 = vshrl.u32 %v1620, 16
      %v1895 = vrot.slane %v1893, 4
      %v1896 = vshll.u32 %v1620, 16
      %v1898 = vrot.slane %v1896, 5
      %v1899 = vor.u32 %v1895, %v1898
      %v1900 = vsel %vm1622, %v1890, %v1899
      %v1902 = vshrl.u32 %v1621, 16
      %v1904 = vrot.slane %v1902, 4
      %v1905 = vshll.u32 %v1621, 16
      %v1907 = vrot.slane %v1905, 5
      %v1908 = vor.u32 %v1904, %v1907
      %v1909 = vsel %vm1622, %v1899, %v1908
      %1910 = vrot.lane.b32.xlu0 %v1630, 4
      %v1911 = vpop.permute.xlu0 %1910
      %1912 = vrot.lane.b32.xlu0 %v1639, 4
      %v1913 = vpop.permute.xlu0 %1912
      %1914 = vrot.lane.b32.xlu0 %v1648, 4
      %v1915 = vpop.permute.xlu0 %1914
      %1916 = vrot.lane.b32.xlu0 %v1657, 4
      %v1917 = vpop.permute.xlu0 %1916
      %1918 = vrot.lane.b32.xlu0 %v1666, 4
      %v1919 = vpop.permute.xlu0 %1918
      %1920 = vrot.lane.b32.xlu0 %v1675, 4
      %v1921 = vpop.permute.xlu0 %1920
      %1922 = vrot.lane.b32.xlu0 %v1684, 4
      %v1923 = vpop.permute.xlu0 %1922
      %1924 = vrot.lane.b32.xlu0 %v1693, 4
      %v1925 = vpop.permute.xlu0 %1924
      %1926 = vrot.lane.b32.xlu0 %v1702, 4
      %v1927 = vpop.permute.xlu0 %1926
      %1928 = vrot.lane.b32.xlu0 %v1711, 4
      %v1929 = vpop.permute.xlu0 %1928
      %1930 = vrot.lane.b32.xlu0 %v1720, 4
      %v1931 = vpop.permute.xlu0 %1930
      %1932 = vrot.lane.b32.xlu0 %v1729, 4
      %v1933 = vpop.permute.xlu0 %1932
      %1934 = vrot.lane.b32.xlu0 %v1738, 4
      %v1935 = vpop.permute.xlu0 %1934
      %1936 = vrot.lane.b32.xlu0 %v1747, 4
      %v1937 = vpop.permute.xlu0 %1936
      %1938 = vrot.lane.b32.xlu0 %v1756, 4
      %v1939 = vpop.permute.xlu0 %1938
      %1940 = vrot.lane.b32.xlu0 %v1765, 4
      %v1941 = vpop.permute.xlu0 %1940
      %1942 = vrot.lane.b32.xlu0 %v1774, 4
      %v1943 = vpop.permute.xlu0 %1942
      %1944 = vrot.lane.b32.xlu0 %v1783, 4
      %v1945 = vpop.permute.xlu0 %1944
      %1946 = vrot.lane.b32.xlu0 %v1792, 4
      %v1947 = vpop.permute.xlu0 %1946
      %1948 = vrot.lane.b32.xlu0 %v1801, 4
      %v1949 = vpop.permute.xlu0 %1948
      %1950 = vrot.lane.b32.xlu0 %v1810, 4
      %v1951 = vpop.permute.xlu0 %1950
      %1952 = vrot.lane.b32.xlu0 %v1819, 4
      %v1953 = vpop.permute.xlu0 %1952
      %1954 = vrot.lane.b32.xlu0 %v1828, 4
      %v1955 = vpop.permute.xlu0 %1954
      %1956 = vrot.lane.b32.xlu0 %v1837, 4
      %v1957 = vpop.permute.xlu0 %1956
      %1958 = vrot.lane.b32.xlu0 %v1846, 4
      %v1959 = vpop.permute.xlu0 %1958
      %1960 = vrot.lane.b32.xlu0 %v1855, 4
      %v1961 = vpop.permute.xlu0 %1960
      %1962 = vrot.lane.b32.xlu0 %v1864, 4
      %v1963 = vpop.permute.xlu0 %1962
      %1964 = vrot.lane.b32.xlu0 %v1873, 4
      %v1965 = vpop.permute.xlu0 %1964
      %1966 = vrot.lane.b32.xlu0 %v1882, 4
      %v1967 = vpop.permute.xlu0 %1966
      %1968 = vrot.lane.b32.xlu0 %v1891, 4
      %v1969 = vpop.permute.xlu0 %1968
      %1970 = vrot.lane.b32.xlu0 %v1900, 4
      %v1971 = vpop.permute.xlu0 %1970
      %1972 = vrot.lane.b32.xlu0 %v1909, 4
      %v1973 = vpop.permute.xlu0 %1972
      %1974 = vrot.lane.b32.xlu0 %v1908, 4
      %v1975 = vpop.permute.xlu0 %1974
      %v1977 = vunpack.c.l.b16 %v1414
      %v1978 = vpack.c.b16 %v1977, %v1977
      %vm1979 = vcmask 1042432
      %v1980 = vrot.slane %v1590, 5
      %v1981 = vrot.slane %v1591, 5
      %v1982 = vsel %vm1979, %v1980, %v1981
      %v1983 = vrot.slane %v1592, 5
      %v1984 = vsel %vm1979, %v1981, %v1983
      %v1985 = vrot.slane %v1593, 5
      %v1986 = vsel %vm1979, %v1983, %v1985
      %v1987 = vrot.slane %v1594, 5
      %v1988 = vsel %vm1979, %v1985, %v1987
      %v1989 = vrot.slane %v1595, 5
      %v1990 = vsel %vm1979, %v1987, %v1989
      %v1991 = vrot.slane %v1596, 5
      %v1992 = vsel %vm1979, %v1989, %v1991
      %v1993 = vrot.slane %v1597, 5
      %v1994 = vsel %vm1979, %v1991, %v1993
      %v1995 = vrot.slane %v1598, 5
      %v1996 = vsel %vm1979, %v1993, %v1995
      %v1997 = vrot.slane %v1599, 5
      %v1998 = vsel %vm1979, %v1995, %v1997
      %v1999 = vrot.slane %v1600, 5
      %v2000 = vsel %vm1979, %v1997, %v1999
      %v2001 = vrot.slane %v1601, 5
      %v2002 = vsel %vm1979, %v1999, %v2001
      %v2003 = vrot.slane %v1602, 5
      %v2004 = vsel %vm1979, %v2001, %v2003
      %v2005 = vrot.slane %v1603, 5
      %v2006 = vsel %vm1979, %v2003, %v2005
      %v2007 = vrot.slane %v1604, 5
      %v2008 = vsel %vm1979, %v2005, %v2007
      %v2009 = vrot.slane %v1605, 5
      %v2010 = vsel %vm1979, %v2007, %v2009
      %v2011 = vrot.slane %v1606, 5
      %v2012 = vsel %vm1979, %v2009, %v2011
      %v2013 = vrot.slane %v1607, 5
      %v2014 = vsel %vm1979, %v2011, %v2013
      %v2015 = vrot.slane %v1608, 5
      %v2016 = vsel %vm1979, %v2013, %v2015
      %v2017 = vrot.slane %v1609, 5
      %v2018 = vsel %vm1979, %v2015, %v2017
      %v2019 = vrot.slane %v1610, 5
      %v2020 = vsel %vm1979, %v2017, %v2019
      %v2021 = vrot.slane %v1611, 5
      %v2022 = vsel %vm1979, %v2019, %v2021
      %v2023 = vrot.slane %v1612, 5
      %v2024 = vsel %vm1979, %v2021, %v2023
      %v2025 = vrot.slane %v1613, 5
      %v2026 = vsel %vm1979, %v2023, %v2025
      %v2027 = vrot.slane %v1614, 5
      %v2028 = vsel %vm1979, %v2025, %v2027
      %v2029 = vrot.slane %v1615, 5
      %v2030 = vsel %vm1979, %v2027, %v2029
      %v2031 = vrot.slane %v1616, 5
      %v2032 = vsel %vm1979, %v2029, %v2031
      %v2033 = vrot.slane %v1617, 5
      %v2034 = vsel %vm1979, %v2031, %v2033
      %v2035 = vrot.slane %v1618, 5
      %v2036 = vsel %vm1979, %v2033, %v2035
      %v2037 = vrot.slane %v1619, 5
      %v2038 = vsel %vm1979, %v2035, %v2037
      %v2039 = vrot.slane %v1620, 5
      %v2040 = vsel %vm1979, %v2037, %v2039
      %v2041 = vrot.slane %v1621, 5
      %v2042 = vsel %vm1979, %v2039, %v2041
      %v2043 = vrot.slane %v1978, 5
      %v2044 = vsel %vm1979, %v2041, %v2043
      %2045 = vrot.lane.b32.xlu0 %v1980, 8
      %v2046 = vpop.permute.xlu0 %2045
      %2047 = vrot.lane.b32.xlu0 %v1982, 8
      %v2048 = vpop.permute.xlu0 %2047
      %2049 = vrot.lane.b32.xlu0 %v1984, 8
      %v2050 = vpop.permute.xlu0 %2049
      %2051 = vrot.lane.b32.xlu0 %v1986, 8
      %v2052 = vpop.permute.xlu0 %2051
      %2053 = vrot.lane.b32.xlu0 %v1988, 8
      %v2054 = vpop.permute.xlu0 %2053
      %2055 = vrot.lane.b32.xlu0 %v1990, 8
      %v2056 = vpop.permute.xlu0 %2055
      %2057 = vrot.lane.b32.xlu0 %v1992, 8
      %v2058 = vpop.permute.xlu0 %2057
      %2059 = vrot.lane.b32.xlu0 %v1994, 8
      %v2060 = vpop.permute.xlu0 %2059
      %2061 = vrot.lane.b32.xlu0 %v1996, 8
      %v2062 = vpop.permute.xlu0 %2061
      %2063 = vrot.lane.b32.xlu0 %v1998, 8
      %v2064 = vpop.permute.xlu0 %2063
      %2065 = vrot.lane.b32.xlu0 %v2000, 8
      %v2066 = vpop.permute.xlu0 %2065
      %2067 = vrot.lane.b32.xlu0 %v2002, 8
      %v2068 = vpop.permute.xlu0 %2067
      %2069 = vrot.lane.b32.xlu0 %v2004, 8
      %v2070 = vpop.permute.xlu0 %2069
      %2071 = vrot.lane.b32.xlu0 %v2006, 8
      %v2072 = vpop.permute.xlu0 %2071
      %2073 = vrot.lane.b32.xlu0 %v2008, 8
      %v2074 = vpop.permute.xlu0 %2073
      %2075 = vrot.lane.b32.xlu0 %v2010, 8
      %v2076 = vpop.permute.xlu0 %2075
      %2077 = vrot.lane.b32.xlu0 %v2012, 8
      %v2078 = vpop.permute.xlu0 %2077
      %2079 = vrot.lane.b32.xlu0 %v2014, 8
      %v2080 = vpop.permute.xlu0 %2079
      %2081 = vrot.lane.b32.xlu0 %v2016, 8
      %v2082 = vpop.permute.xlu0 %2081
      %2083 = vrot.lane.b32.xlu0 %v2018, 8
      %v2084 = vpop.permute.xlu0 %2083
      %2085 = vrot.lane.b32.xlu0 %v2020, 8
      %v2086 = vpop.permute.xlu0 %2085
      %2087 = vrot.lane.b32.xlu0 %v2022, 8
      %v2088 = vpop.permute.xlu0 %2087
      %2089 = vrot.lane.b32.xlu0 %v2024, 8
      %v2090 = vpop.permute.xlu0 %2089
      %2091 = vrot.lane.b32.xlu0 %v2026, 8
      %v2092 = vpop.permute.xlu0 %2091
      %2093 = vrot.lane.b32.xlu0 %v2028, 8
      %v2094 = vpop.permute.xlu0 %2093
      %2095 = vrot.lane.b32.xlu0 %v2030, 8
      %v2096 = vpop.permute.xlu0 %2095
      %2097 = vrot.lane.b32.xlu0 %v2032, 8
      %v2098 = vpop.permute.xlu0 %2097
      %2099 = vrot.lane.b32.xlu0 %v2034, 8
      %v2100 = vpop.permute.xlu0 %2099
      %2101 = vrot.lane.b32.xlu0 %v2036, 8
      %v2102 = vpop.permute.xlu0 %2101
      %2103 = vrot.lane.b32.xlu0 %v2038, 8
      %v2104 = vpop.permute.xlu0 %2103
      %2105 = vrot.lane.b32.xlu0 %v2040, 8
      %v2106 = vpop.permute.xlu0 %2105
      %2107 = vrot.lane.b32.xlu0 %v2042, 8
      %v2108 = vpop.permute.xlu0 %2107
      %2109 = vrot.lane.b32.xlu0 %v2044, 8
      %v2110 = vpop.permute.xlu0 %2109
      %v2116 = vunpack.c.l.b16 %v1415
      %v2117 = vunpack.c.l.b16 %v1416
      %v2118 = vunpack.c.l.b16 %v1417
      %v2119 = vunpack.c.l.b16 %v1418
      %v2120 = vunpack.c.l.b16 %v1419
      %v2121 = vpack.c.b16 %v1497, %v2116
      %v2122 = vpack.c.b16 %v2117, %v1556
      %v2123 = vpack.c.b16 %v2119, %v2118
      %v2124 = vpack.c.b16 %v2120, %v2120
      %2125 = vrot.lane.b32.xlu0 %v2121, 12
      %v2126 = vpop.permute.xlu0 %2125
      %2127 = vrot.lane.b32.xlu0 %v1560, 12
      %v2128 = vpop.permute.xlu0 %2127
      %2129 = vrot.lane.b32.xlu0 %v1561, 12
      %v2130 = vpop.permute.xlu0 %2129
      %2131 = vrot.lane.b32.xlu0 %v1562, 12
      %v2132 = vpop.permute.xlu0 %2131
      %2133 = vrot.lane.b32.xlu0 %v1563, 12
      %v2134 = vpop.permute.xlu0 %2133
      %2135 = vrot.lane.b32.xlu0 %v1564, 12
      %v2136 = vpop.permute.xlu0 %2135
      %2137 = vrot.lane.b32.xlu0 %v1565, 12
      %v2138 = vpop.permute.xlu0 %2137
      %2139 = vrot.lane.b32.xlu0 %v1566, 12
      %v2140 = vpop.permute.xlu0 %2139
      %2141 = vrot.lane.b32.xlu0 %v1567, 12
      %v2142 = vpop.permute.xlu0 %2141
      %2143 = vrot.lane.b32.xlu0 %v1568, 12
      %v2144 = vpop.permute.xlu0 %2143
      %2145 = vrot.lane.b32.xlu0 %v1569, 12
      %v2146 = vpop.permute.xlu0 %2145
      %2147 = vrot.lane.b32.xlu0 %v1570, 12
      %v2148 = vpop.permute.xlu0 %2147
      %2149 = vrot.lane.b32.xlu0 %v1571, 12
      %v2150 = vpop.permute.xlu0 %2149
      %2151 = vrot.lane.b32.xlu0 %v1572, 12
      %v2152 = vpop.permute.xlu0 %2151
      %2153 = vrot.lane.b32.xlu0 %v1573, 12
      %v2154 = vpop.permute.xlu0 %2153
      %2155 = vrot.lane.b32.xlu0 %v1574, 12
      %v2156 = vpop.permute.xlu0 %2155
      %2157 = vrot.lane.b32.xlu0 %v1575, 12
      %v2158 = vpop.permute.xlu0 %2157
      %2159 = vrot.lane.b32.xlu0 %v1576, 12
      %v2160 = vpop.permute.xlu0 %2159
      %2161 = vrot.lane.b32.xlu0 %v1577, 12
      %v2162 = vpop.permute.xlu0 %2161
      %2163 = vrot.lane.b32.xlu0 %v1578, 12
      %v2164 = vpop.permute.xlu0 %2163
      %2165 = vrot.lane.b32.xlu0 %v1579, 12
      %v2166 = vpop.permute.xlu0 %2165
      %2167 = vrot.lane.b32.xlu0 %v1580, 12
      %v2168 = vpop.permute.xlu0 %2167
      %2169 = vrot.lane.b32.xlu0 %v1581, 12
      %v2170 = vpop.permute.xlu0 %2169
      %2171 = vrot.lane.b32.xlu0 %v1582, 12
      %v2172 = vpop.permute.xlu0 %2171
      %2173 = vrot.lane.b32.xlu0 %v1583, 12
      %v2174 = vpop.permute.xlu0 %2173
      %2175 = vrot.lane.b32.xlu0 %v1584, 12
      %v2176 = vpop.permute.xlu0 %2175
      %2177 = vrot.lane.b32.xlu0 %v1585, 12
      %v2178 = vpop.permute.xlu0 %2177
      %2179 = vrot.lane.b32.xlu0 %v1586, 12
      %v2180 = vpop.permute.xlu0 %2179
      %2181 = vrot.lane.b32.xlu0 %v1587, 12
      %v2182 = vpop.permute.xlu0 %2181
      %2183 = vrot.lane.b32.xlu0 %v1588, 12
      %v2184 = vpop.permute.xlu0 %2183
      %2185 = vrot.lane.b32.xlu0 %v2122, 12
      %v2186 = vpop.permute.xlu0 %2185
      %2187 = vrot.lane.b32.xlu0 %v2123, 12
      %v2188 = vpop.permute.xlu0 %2187
      %2189 = vrot.lane.b32.xlu0 %v2124, 12
      %v2190 = vpop.permute.xlu0 %2189
      %v2191 = vpack.c.b16 %v2118, %v2117
      %v2192 = vpack.c.b16 %v2120, %v2119
      %v2194 = vshrl.u32 %v2191, 16
      %v2196 = vrot.slane %v2194, 4
      %v2197 = vshll.u32 %v2191, 16
      %v2199 = vrot.slane %v2197, 5
      %v2200 = vor.u32 %v2196, %v2199
      %v2201 = vsel %vm1622, %v1908, %v2200
      %v2203 = vshrl.u32 %v2192, 16
      %v2205 = vrot.slane %v2203, 4
      %v2206 = vshll.u32 %v2192, 16
      %v2208 = vrot.slane %v2206, 5
      %v2209 = vor.u32 %v2205, %v2208
      %v2210 = vsel %vm1622, %v2200, %v2209
      %2211 = vrot.lane.b32.xlu0 %v1647, 16
      %v2212 = vpop.permute.xlu0 %2211
      %2213 = vrot.lane.b32.xlu0 %v1657, 16
      %v2214 = vpop.permute.xlu0 %2213
      %2215 = vrot.lane.b32.xlu0 %v1666, 16
      %v2216 = vpop.permute.xlu0 %2215
      %2217 = vrot.lane.b32.xlu0 %v1675, 16
      %v2218 = vpop.permute.xlu0 %2217
      %2219 = vrot.lane.b32.xlu0 %v1684, 16
      %v2220 = vpop.permute.xlu0 %2219
      %2221 = vrot.lane.b32.xlu0 %v1693, 16
      %v2222 = vpop.permute.xlu0 %2221
      %2223 = vrot.lane.b32.xlu0 %v1702, 16
      %v2224 = vpop.permute.xlu0 %2223
      %2225 = vrot.lane.b32.xlu0 %v1711, 16
      %v2226 = vpop.permute.xlu0 %2225
      %2227 = vrot.lane.b32.xlu0 %v1720, 16
      %v2228 = vpop.permute.xlu0 %2227
      %2229 = vrot.lane.b32.xlu0 %v1729, 16
      %v2230 = vpop.permute.xlu0 %2229
      %2231 = vrot.lane.b32.xlu0 %v1738, 16
      %v2232 = vpop.permute.xlu0 %2231
      %2233 = vrot.lane.b32.xlu0 %v1747, 16
      %v2234 = vpop.permute.xlu0 %2233
      %2235 = vrot.lane.b32.xlu0 %v1756, 16
      %v2236 = vpop.permute.xlu0 %2235
      %2237 = vrot.lane.b32.xlu0 %v1765, 16
      %v2238 = vpop.permute.xlu0 %2237
      %2239 = vrot.lane.b32.xlu0 %v1774, 16
      %v2240 = vpop.permute.xlu0 %2239
      %2241 = vrot.lane.b32.xlu0 %v1783, 16
      %v2242 = vpop.permute.xlu0 %2241
      %2243 = vrot.lane.b32.xlu0 %v1792, 16
      %v2244 = vpop.permute.xlu0 %2243
      %2245 = vrot.lane.b32.xlu0 %v1801, 16
      %v2246 = vpop.permute.xlu0 %2245
      %2247 = vrot.lane.b32.xlu0 %v1810, 16
      %v2248 = vpop.permute.xlu0 %2247
      %2249 = vrot.lane.b32.xlu0 %v1819, 16
      %v2250 = vpop.permute.xlu0 %2249
      %2251 = vrot.lane.b32.xlu0 %v1828, 16
      %v2252 = vpop.permute.xlu0 %2251
      %2253 = vrot.lane.b32.xlu0 %v1837, 16
      %v2254 = vpop.permute.xlu0 %2253
      %2255 = vrot.lane.b32.xlu0 %v1846, 16
      %v2256 = vpop.permute.xlu0 %2255
      %2257 = vrot.lane.b32.xlu0 %v1855, 16
      %v2258 = vpop.permute.xlu0 %2257
      %2259 = vrot.lane.b32.xlu0 %v1864, 16
      %v2260 = vpop.permute.xlu0 %2259
      %2261 = vrot.lane.b32.xlu0 %v1873, 16
      %v2262 = vpop.permute.xlu0 %2261
      %2263 = vrot.lane.b32.xlu0 %v1882, 16
      %v2264 = vpop.permute.xlu0 %2263
      %2265 = vrot.lane.b32.xlu0 %v1891, 16
      %v2266 = vpop.permute.xlu0 %2265
      %2267 = vrot.lane.b32.xlu0 %v1900, 16
      %v2268 = vpop.permute.xlu0 %2267
      %2269 = vrot.lane.b32.xlu0 %v1909, 16
      %v2270 = vpop.permute.xlu0 %2269
      %2271 = vrot.lane.b32.xlu0 %v2201, 16
      %v2272 = vpop.permute.xlu0 %2271
      %2273 = vrot.lane.b32.xlu0 %v2210, 16
      %v2274 = vpop.permute.xlu0 %2273
      %2275 = vrot.lane.b32.xlu0 %v2209, 16
      %v2276 = vpop.permute.xlu0 %2275
      %v2278 = vunpack.c.l.b16 %v1420
      %v2279 = vpack.c.b16 %v2278, %v2278
      %v2280 = vrot.slane %v2191, 5
      %v2281 = vsel %vm1979, %v2041, %v2280
      %v2282 = vrot.slane %v2192, 5
      %v2283 = vsel %vm1979, %v2280, %v2282
      %v2284 = vrot.slane %v2279, 5
      %v2285 = vsel %vm1979, %v2282, %v2284
      %2286 = vrot.lane.b32.xlu0 %v1983, 20
      %v2287 = vpop.permute.xlu0 %2286
      %2288 = vrot.lane.b32.xlu0 %v1986, 20
      %v2289 = vpop.permute.xlu0 %2288
      %2290 = vrot.lane.b32.xlu0 %v1988, 20
      %v2291 = vpop.permute.xlu0 %2290
      %2292 = vrot.lane.b32.xlu0 %v1990, 20
      %v2293 = vpop.permute.xlu0 %2292
      %2294 = vrot.lane.b32.xlu0 %v1992, 20
      %v2295 = vpop.permute.xlu0 %2294
      %2296 = vrot.lane.b32.xlu0 %v1994, 20
      %v2297 = vpop.permute.xlu0 %2296
      %2298 = vrot.lane.b32.xlu0 %v1996, 20
      %v2299 = vpop.permute.xlu0 %2298
      %2300 = vrot.lane.b32.xlu0 %v1998, 20
      %v2301 = vpop.permute.xlu0 %2300
      %2302 = vrot.lane.b32.xlu0 %v2000, 20
      %v2303 = vpop.permute.xlu0 %2302
      %2304 = vrot.lane.b32.xlu0 %v2002, 20
      %v2305 = vpop.permute.xlu0 %2304
      %2306 = vrot.lane.b32.xlu0 %v2004, 20
      %v2307 = vpop.permute.xlu0 %2306
      %2308 = vrot.lane.b32.xlu0 %v2006, 20
      %v2309 = vpop.permute.xlu0 %2308
      %2310 = vrot.lane.b32.xlu0 %v2008, 20
      %v2311 = vpop.permute.xlu0 %2310
      %2312 = vrot.lane.b32.xlu0 %v2010, 20
      %v2313 = vpop.permute.xlu0 %2312
      %2314 = vrot.lane.b32.xlu0 %v2012, 20
      %v2315 = vpop.permute.xlu0 %2314
      %2316 = vrot.lane.b32.xlu0 %v2014, 20
      %v2317 = vpop.permute.xlu0 %2316
      %2318 = vrot.lane.b32.xlu0 %v2016, 20
      %v2319 = vpop.permute.xlu0 %2318
      %2320 = vrot.lane.b32.xlu0 %v2018, 20
      %v2321 = vpop.permute.xlu0 %2320
      %2322 = vrot.lane.b32.xlu0 %v2020, 20
      %v2323 = vpop.permute.xlu0 %2322
      %2324 = vrot.lane.b32.xlu0 %v2022, 20
      %v2325 = vpop.permute.xlu0 %2324
      %2326 = vrot.lane.b32.xlu0 %v2024, 20
      %v2327 = vpop.permute.xlu0 %2326
      %2328 = vrot.lane.b32.xlu0 %v2026, 20
      %v2329 = vpop.permute.xlu0 %2328
      %2330 = vrot.lane.b32.xlu0 %v2028, 20
      %v2331 = vpop.permute.xlu0 %2330
      %2332 = vrot.lane.b32.xlu0 %v2030, 20
      %v2333 = vpop.permute.xlu0 %2332
      %2334 = vrot.lane.b32.xlu0 %v2032, 20
      %v2335 = vpop.permute.xlu0 %2334
      %2336 = vrot.lane.b32.xlu0 %v2034, 20
      %v2337 = vpop.permute.xlu0 %2336
      %2338 = vrot.lane.b32.xlu0 %v2036, 20
      %v2339 = vpop.permute.xlu0 %2338
      %2340 = vrot.lane.b32.xlu0 %v2038, 20
      %v2341 = vpop.permute.xlu0 %2340
      %2342 = vrot.lane.b32.xlu0 %v2040, 20
      %v2343 = vpop.permute.xlu0 %2342
      %2344 = vrot.lane.b32.xlu0 %v2042, 20
      %v2345 = vpop.permute.xlu0 %2344
      %2346 = vrot.lane.b32.xlu0 %v2281, 20
      %v2347 = vpop.permute.xlu0 %2346
      %2348 = vrot.lane.b32.xlu0 %v2283, 20
      %v2349 = vpop.permute.xlu0 %2348
      %2350 = vrot.lane.b32.xlu0 %v2285, 20
      %v2351 = vpop.permute.xlu0 %2350
      %v2357 = vunpack.c.l.b16 %v1421
      %v2358 = vunpack.c.l.b16 %v1422
      %v2359 = vunpack.c.l.b16 %v1423
      %v2360 = vunpack.c.l.b16 %v1424
      %v2361 = vunpack.c.l.b16 %v1425
      %v2362 = vpack.c.b16 %v1501, %v2357
      %v2363 = vpack.c.b16 %v2358, %v2120
      %v2364 = vpack.c.b16 %v2360, %v2359
      %v2365 = vpack.c.b16 %v2361, %v2361
      %2366 = vrot.lane.b32.xlu0 %v2362, 24
      %v2367 = vpop.permute.xlu0 %2366
      %2368 = vrot.lane.b32.xlu0 %v1562, 24
      %v2369 = vpop.permute.xlu0 %2368
      %2370 = vrot.lane.b32.xlu0 %v1563, 24
      %v2371 = vpop.permute.xlu0 %2370
      %2372 = vrot.lane.b32.xlu0 %v1564, 24
      %v2373 = vpop.permute.xlu0 %2372
      %2374 = vrot.lane.b32.xlu0 %v1565, 24
      %v2375 = vpop.permute.xlu0 %2374
      %2376 = vrot.lane.b32.xlu0 %v1566, 24
      %v2377 = vpop.permute.xlu0 %2376
      %2378 = vrot.lane.b32.xlu0 %v1567, 24
      %v2379 = vpop.permute.xlu0 %2378
      %2380 = vrot.lane.b32.xlu0 %v1568, 24
      %v2381 = vpop.permute.xlu0 %2380
      %2382 = vrot.lane.b32.xlu0 %v1569, 24
      %v2383 = vpop.permute.xlu0 %2382
      %2384 = vrot.lane.b32.xlu0 %v1570, 24
      %v2385 = vpop.permute.xlu0 %2384
      %2386 = vrot.lane.b32.xlu0 %v1571, 24
      %v2387 = vpop.permute.xlu0 %2386
      %2388 = vrot.lane.b32.xlu0 %v1572, 24
      %v2389 = vpop.permute.xlu0 %2388
      %2390 = vrot.lane.b32.xlu0 %v1573, 24
      %v2391 = vpop.permute.xlu0 %2390
      %2392 = vrot.lane.b32.xlu0 %v1574, 24
      %v2393 = vpop.permute.xlu0 %2392
      %2394 = vrot.lane.b32.xlu0 %v1575, 24
      %v2395 = vpop.permute.xlu0 %2394
      %2396 = vrot.lane.b32.xlu0 %v1576, 24
      %v2397 = vpop.permute.xlu0 %2396
      %2398 = vrot.lane.b32.xlu0 %v1577, 24
      %v2399 = vpop.permute.xlu0 %2398
      %2400 = vrot.lane.b32.xlu0 %v1578, 24
      %v2401 = vpop.permute.xlu0 %2400
      %2402 = vrot.lane.b32.xlu0 %v1579, 24
      %v2403 = vpop.permute.xlu0 %2402
      %2404 = vrot.lane.b32.xlu0 %v1580, 24
      %v2405 = vpop.permute.xlu0 %2404
      %2406 = vrot.lane.b32.xlu0 %v1581, 24
      %v2407 = vpop.permute.xlu0 %2406
      %2408 = vrot.lane.b32.xlu0 %v1582, 24
      %v2409 = vpop.permute.xlu0 %2408
      %2410 = vrot.lane.b32.xlu0 %v1583, 24
      %v2411 = vpop.permute.xlu0 %2410
      %2412 = vrot.lane.b32.xlu0 %v1584, 24
      %v2413 = vpop.permute.xlu0 %2412
      %2414 = vrot.lane.b32.xlu0 %v1585, 24
      %v2415 = vpop.permute.xlu0 %2414
      %2416 = vrot.lane.b32.xlu0 %v1586, 24
      %v2417 = vpop.permute.xlu0 %2416
      %2418 = vrot.lane.b32.xlu0 %v1587, 24
      %v2419 = vpop.permute.xlu0 %2418
      %2420 = vrot.lane.b32.xlu0 %v1588, 24
      %v2421 = vpop.permute.xlu0 %2420
      %2422 = vrot.lane.b32.xlu0 %v2122, 24
      %v2423 = vpop.permute.xlu0 %2422
      %2424 = vrot.lane.b32.xlu0 %v2123, 24
      %v2425 = vpop.permute.xlu0 %2424
      %2426 = vrot.lane.b32.xlu0 %v2363, 24
      %v2427 = vpop.permute.xlu0 %2426
      %2428 = vrot.lane.b32.xlu0 %v2364, 24
      %v2429 = vpop.permute.xlu0 %2428
      %2430 = vrot.lane.b32.xlu0 %v2365, 24
      %v2431 = vpop.permute.xlu0 %2430
      %v2432 = vpack.c.b16 %v2359, %v2358
      %v2433 = vpack.c.b16 %v2361, %v2360
      %v2435 = vshrl.u32 %v2432, 16
      %v2437 = vrot.slane %v2435, 4
      %v2438 = vshll.u32 %v2432, 16
      %v2440 = vrot.slane %v2438, 5
      %v2441 = vor.u32 %v2437, %v2440
      %v2442 = vsel %vm1622, %v2209, %v2441
      %v2444 = vshrl.u32 %v2433, 16
      %v2446 = vrot.slane %v2444, 4
      %v2447 = vshll.u32 %v2433, 16
      %v2449 = vrot.slane %v2447, 5
      %v2450 = vor.u32 %v2446, %v2449
      %v2451 = vsel %vm1622, %v2441, %v2450
      %2452 = vrot.lane.b32.xlu0 %v1665, 28
      %v2453 = vpop.permute.xlu0 %2452
      %2454 = vrot.lane.b32.xlu0 %v1675, 28
      %v2455 = vpop.permute.xlu0 %2454
      %2456 = vrot.lane.b32.xlu0 %v1684, 28
      %v2457 = vpop.permute.xlu0 %2456
      %2458 = vrot.lane.b32.xlu0 %v1693, 28
      %v2459 = vpop.permute.xlu0 %2458
      %2460 = vrot.lane.b32.xlu0 %v1702, 28
      %v2461 = vpop.permute.xlu0 %2460
      %2462 = vrot.lane.b32.xlu0 %v1711, 28
      %v2463 = vpop.permute.xlu0 %2462
      %2464 = vrot.lane.b32.xlu0 %v1720, 28
      %v2465 = vpop.permute.xlu0 %2464
      %2466 = vrot.lane.b32.xlu0 %v1729, 28
      %v2467 = vpop.permute.xlu0 %2466
      %2468 = vrot.lane.b32.xlu0 %v1738, 28
      %v2469 = vpop.permute.xlu0 %2468
      %2470 = vrot.lane.b32.xlu0 %v1747, 28
      %v2471 = vpop.permute.xlu0 %2470
      %2472 = vrot.lane.b32.xlu0 %v1756, 28
      %v2473 = vpop.permute.xlu0 %2472
      %2474 = vrot.lane.b32.xlu0 %v1765, 28
      %v2475 = vpop.permute.xlu0 %2474
      %2476 = vrot.lane.b32.xlu0 %v1774, 28
      %v2477 = vpop.permute.xlu0 %2476
      %2478 = vrot.lane.b32.xlu0 %v1783, 28
      %v2479 = vpop.permute.xlu0 %2478
      %2480 = vrot.lane.b32.xlu0 %v1792, 28
      %v2481 = vpop.permute.xlu0 %2480
      %2482 = vrot.lane.b32.xlu0 %v1801, 28
      %v2483 = vpop.permute.xlu0 %2482
      %2484 = vrot.lane.b32.xlu0 %v1810, 28
      %v2485 = vpop.permute.xlu0 %2484
      %2486 = vrot.lane.b32.xlu0 %v1819, 28
      %v2487 = vpop.permute.xlu0 %2486
      %2488 = vrot.lane.b32.xlu0 %v1828, 28
      %v2489 = vpop.permute.xlu0 %2488
      %2490 = vrot.lane.b32.xlu0 %v1837, 28
      %v2491 = vpop.permute.xlu0 %2490
      %2492 = vrot.lane.b32.xlu0 %v1846, 28
      %v2493 = vpop.permute.xlu0 %2492
      %2494 = vrot.lane.b32.xlu0 %v1855, 28
      %v2495 = vpop.permute.xlu0 %2494
      %2496 = vrot.lane.b32.xlu0 %v1864, 28
      %v2497 = vpop.permute.xlu0 %2496
      %2498 = vrot.lane.b32.xlu0 %v1873, 28
      %v2499 = vpop.permute.xlu0 %2498
      %2500 = vrot.lane.b32.xlu0 %v1882, 28
      %v2501 = vpop.permute.xlu0 %2500
      %2502 = vrot.lane.b32.xlu0 %v1891, 28
      %v2503 = vpop.permute.xlu0 %2502
      %2504 = vrot.lane.b32.xlu0 %v1900, 28
      %v2505 = vpop.permute.xlu0 %2504
      %2506 = vrot.lane.b32.xlu0 %v1909, 28
      %v2507 = vpop.permute.xlu0 %2506
      %2508 = vrot.lane.b32.xlu0 %v2201, 28
      %v2509 = vpop.permute.xlu0 %2508
      %2510 = vrot.lane.b32.xlu0 %v2210, 28
      %v2511 = vpop.permute.xlu0 %2510
      %2512 = vrot.lane.b32.xlu0 %v2442, 28
      %v2513 = vpop.permute.xlu0 %2512
      %2514 = vrot.lane.b32.xlu0 %v2451, 28
      %v2515 = vpop.permute.xlu0 %2514
      %2516 = vrot.lane.b32.xlu0 %v2450, 28
      %v2517 = vpop.permute.xlu0 %2516
      %v2519 = vunpack.c.l.b16 %v1426
      %v2520 = vpack.c.b16 %v2519, %v2519
      %v2521 = vrot.slane %v2432, 5
      %v2522 = vsel %vm1979, %v2282, %v2521
      %v2523 = vrot.slane %v2433, 5
      %v2524 = vsel %vm1979, %v2521, %v2523
      %v2525 = vrot.slane %v2520, 5
      %v2526 = vsel %vm1979, %v2523, %v2525
      %2527 = vrot.lane.b32.xlu0 %v1987, 32
      %v2528 = vpop.permute.xlu0 %2527
      %2529 = vrot.lane.b32.xlu0 %v1990, 32
      %v2530 = vpop.permute.xlu0 %2529
      %2531 = vrot.lane.b32.xlu0 %v1992, 32
      %v2532 = vpop.permute.xlu0 %2531
      %2533 = vrot.lane.b32.xlu0 %v1994, 32
      %v2534 = vpop.permute.xlu0 %2533
      %2535 = vrot.lane.b32.xlu0 %v1996, 32
      %v2536 = vpop.permute.xlu0 %2535
      %2537 = vrot.lane.b32.xlu0 %v1998, 32
      %v2538 = vpop.permute.xlu0 %2537
      %2539 = vrot.lane.b32.xlu0 %v2000, 32
      %v2540 = vpop.permute.xlu0 %2539
      %2541 = vrot.lane.b32.xlu0 %v2002, 32
      %v2542 = vpop.permute.xlu0 %2541
      %2543 = vrot.lane.b32.xlu0 %v2004, 32
      %v2544 = vpop.permute.xlu0 %2543
      %2545 = vrot.lane.b32.xlu0 %v2006, 32
      %v2546 = vpop.permute.xlu0 %2545
      %2547 = vrot.lane.b32.xlu0 %v2008, 32
      %v2548 = vpop.permute.xlu0 %2547
      %2549 = vrot.lane.b32.xlu0 %v2010, 32
      %v2550 = vpop.permute.xlu0 %2549
      %2551 = vrot.lane.b32.xlu0 %v2012, 32
      %v2552 = vpop.permute.xlu0 %2551
      %2553 = vrot.lane.b32.xlu0 %v2014, 32
      %v2554 = vpop.permute.xlu0 %2553
      %2555 = vrot.lane.b32.xlu0 %v2016, 32
      %v2556 = vpop.permute.xlu0 %2555
      %2557 = vrot.lane.b32.xlu0 %v2018, 32
      %v2558 = vpop.permute.xlu0 %2557
      %2559 = vrot.lane.b32.xlu0 %v2020, 32
      %v2560 = vpop.permute.xlu0 %2559
      %2561 = vrot.lane.b32.xlu0 %v2022, 32
      %v2562 = vpop.permute.xlu0 %2561
      %2563 = vrot.lane.b32.xlu0 %v2024, 32
      %v2564 = vpop.permute.xlu0 %2563
      %2565 = vrot.lane.b32.xlu0 %v2026, 32
      %v2566 = vpop.permute.xlu0 %2565
      %2567 = vrot.lane.b32.xlu0 %v2028, 32
      %v2568 = vpop.permute.xlu0 %2567
      %2569 = vrot.lane.b32.xlu0 %v2030, 32
      %v2570 = vpop.permute.xlu0 %2569
      %2571 = vrot.lane.b32.xlu0 %v2032, 32
      %v2572 = vpop.permute.xlu0 %2571
      %2573 = vrot.lane.b32.xlu0 %v2034, 32
      %v2574 = vpop.permute.xlu0 %2573
      %2575 = vrot.lane.b32.xlu0 %v2036, 32
      %v2576 = vpop.permute.xlu0 %2575
      %2577 = vrot.lane.b32.xlu0 %v2038, 32
      %v2578 = vpop.permute.xlu0 %2577
      %2579 = vrot.lane.b32.xlu0 %v2040, 32
      %v2580 = vpop.permute.xlu0 %2579
      %2581 = vrot.lane.b32.xlu0 %v2042, 32
      %v2582 = vpop.permute.xlu0 %2581
      %2583 = vrot.lane.b32.xlu0 %v2281, 32
      %v2584 = vpop.permute.xlu0 %2583
      %2585 = vrot.lane.b32.xlu0 %v2283, 32
      %v2586 = vpop.permute.xlu0 %2585
      %2587 = vrot.lane.b32.xlu0 %v2522, 32
      %v2588 = vpop.permute.xlu0 %2587
      %2589 = vrot.lane.b32.xlu0 %v2524, 32
      %v2590 = vpop.permute.xlu0 %2589
      %2591 = vrot.lane.b32.xlu0 %v2526, 32
      %v2592 = vpop.permute.xlu0 %2591
      %vm2593 = vcmask 31744
      %v2596 = vsel %vm2593, %v1557, %v1911
      %v2599 = vsel %vm2593, %v1558, %v1913
      %v2602 = vsel %vm2593, %v1559, %v1915
      %v2605 = vsel %vm2593, %v1560, %v1917
      %v2608 = vsel %vm2593, %v1561, %v1919
      %v2611 = vsel %vm2593, %v1562, %v1921
      %v2614 = vsel %vm2593, %v1563, %v1923
      %v2617 = vsel %vm2593, %v1564, %v1925
      %v2620 = vsel %vm2593, %v1565, %v1927
      %v2623 = vsel %vm2593, %v1566, %v1929
      %v2626 = vsel %vm2593, %v1567, %v1931
      %v2629 = vsel %vm2593, %v1568, %v1933
      %v2632 = vsel %vm2593, %v1569, %v1935
      %v2635 = vsel %vm2593, %v1570, %v1937
      %v2638 = vsel %vm2593, %v1571, %v1939
      %v2641 = vsel %vm2593, %v1572, %v1941
      %v2644 = vsel %vm2593, %v1573, %v1943
      %v2647 = vsel %vm2593, %v1574, %v1945
      %v2650 = vsel %vm2593, %v1575, %v1947
      %v2653 = vsel %vm2593, %v1576, %v1949
      %v2656 = vsel %vm2593, %v1577, %v1951
      %v2659 = vsel %vm2593, %v1578, %v1953
      %v2662 = vsel %vm2593, %v1579, %v1955
      %v2665 = vsel %vm2593, %v1580, %v1957
      %v2668 = vsel %vm2593, %v1581, %v1959
      %v2671 = vsel %vm2593, %v1582, %v1961
      %v2674 = vsel %vm2593, %v1583, %v1963
      %v2677 = vsel %vm2593, %v1584, %v1965
      %v2680 = vsel %vm2593, %v1585, %v1967
      %v2683 = vsel %vm2593, %v1586, %v1969
      %v2686 = vsel %vm2593, %v1587, %v1971
      %v2689 = vsel %vm2593, %v1588, %v1973
      %v2692 = vsel %vm2593, %v1589, %v1975
      %vm2693 = vcmask 64512
      %v2695 = vsel %vm2693, %v2596, %v2046
      %v2697 = vsel %vm2693, %v2599, %v2048
      %v2699 = vsel %vm2693, %v2602, %v2050
      %v2701 = vsel %vm2693, %v2605, %v2052
      %v2703 = vsel %vm2693, %v2608, %v2054
      %v2705 = vsel %vm2693, %v2611, %v2056
      %v2707 = vsel %vm2693, %v2614, %v2058
      %v2709 = vsel %vm2693, %v2617, %v2060
      %v2711 = vsel %vm2693, %v2620, %v2062
      %v2713 = vsel %vm2693, %v2623, %v2064
      %v2715 = vsel %vm2693, %v2626, %v2066
      %v2717 = vsel %vm2693, %v2629, %v2068
      %v2719 = vsel %vm2693, %v2632, %v2070
      %v2721 = vsel %vm2693, %v2635, %v2072
      %v2723 = vsel %vm2693, %v2638, %v2074
      %v2725 = vsel %vm2693, %v2641, %v2076
      %v2727 = vsel %vm2693, %v2644, %v2078
      %v2729 = vsel %vm2693, %v2647, %v2080
      %v2731 = vsel %vm2693, %v2650, %v2082
      %v2733 = vsel %vm2693, %v2653, %v2084
      %v2735 = vsel %vm2693, %v2656, %v2086
      %v2737 = vsel %vm2693, %v2659, %v2088
      %v2739 = vsel %vm2693, %v2662, %v2090
      %v2741 = vsel %vm2693, %v2665, %v2092
      %v2743 = vsel %vm2693, %v2668, %v2094
      %v2745 = vsel %vm2693, %v2671, %v2096
      %v2747 = vsel %vm2693, %v2674, %v2098
      %v2749 = vsel %vm2693, %v2677, %v2100
      %v2751 = vsel %vm2693, %v2680, %v2102
      %v2753 = vsel %vm2693, %v2683, %v2104
      %v2755 = vsel %vm2693, %v2686, %v2106
      %v2757 = vsel %vm2693, %v2689, %v2108
      %v2759 = vsel %vm2693, %v2692, %v2110
      %vm2760 = vcmask 97280
      %v2762 = vsel %vm2760, %v2695, %v2126
      %v2764 = vsel %vm2760, %v2697, %v2128
      %v2766 = vsel %vm2760, %v2699, %v2130
      %v2768 = vsel %vm2760, %v2701, %v2132
      %v2770 = vsel %vm2760, %v2703, %v2134
      %v2772 = vsel %vm2760, %v2705, %v2136
      %v2774 = vsel %vm2760, %v2707, %v2138
      %v2776 = vsel %vm2760, %v2709, %v2140
      %v2778 = vsel %vm2760, %v2711, %v2142
      %v2780 = vsel %vm2760, %v2713, %v2144
      %v2782 = vsel %vm2760, %v2715, %v2146
      %v2784 = vsel %vm2760, %v2717, %v2148
      %v2786 = vsel %vm2760, %v2719, %v2150
      %v2788 = vsel %vm2760, %v2721, %v2152
      %v2790 = vsel %vm2760, %v2723, %v2154
      %v2792 = vsel %vm2760, %v2725, %v2156
      %v2794 = vsel %vm2760, %v2727, %v2158
      %v2796 = vsel %vm2760, %v2729, %v2160
      %v2798 = vsel %vm2760, %v2731, %v2162
      %v2800 = vsel %vm2760, %v2733, %v2164
      %v2802 = vsel %vm2760, %v2735, %v2166
      %v2804 = vsel %vm2760, %v2737, %v2168
      %v2806 = vsel %vm2760, %v2739, %v2170
      %v2808 = vsel %vm2760, %v2741, %v2172
      %v2810 = vsel %vm2760, %v2743, %v2174
      %v2812 = vsel %vm2760, %v2745, %v2176
      %v2814 = vsel %vm2760, %v2747, %v2178
      %v2816 = vsel %vm2760, %v2749, %v2180
      %v2818 = vsel %vm2760, %v2751, %v2182
      %v2820 = vsel %vm2760, %v2753, %v2184
      %v2822 = vsel %vm2760, %v2755, %v2186
      %v2824 = vsel %vm2760, %v2757, %v2188
      %v2826 = vsel %vm2760, %v2759, %v2190
      %vm2827 = vcmask 130048
      %v2829 = vsel %vm2827, %v2762, %v2212
      %v2831 = vsel %vm2827, %v2764, %v2214
      %v2833 = vsel %vm2827, %v2766, %v2216
      %v2835 = vsel %vm2827, %v2768, %v2218
      %v2837 = vsel %vm2827, %v2770, %v2220
      %v2839 = vsel %vm2827, %v2772, %v2222
      %v2841 = vsel %vm2827, %v2774, %v2224
      %v2843 = vsel %vm2827, %v2776, %v2226
      %v2845 = vsel %vm2827, %v2778, %v2228
      %v2847 = vsel %vm2827, %v2780, %v2230
      %v2849 = vsel %vm2827, %v2782, %v2232
      %v2851 = vsel %vm2827, %v2784, %v2234
      %v2853 = vsel %vm2827, %v2786, %v2236
      %v2855 = vsel %vm2827, %v2788, %v2238
      %v2857 = vsel %vm2827, %v2790, %v2240
      %v2859 = vsel %vm2827, %v2792, %v2242
      %v2861 = vsel %vm2827, %v2794, %v2244
      %v2863 = vsel %vm2827, %v2796, %v2246
      %v2865 = vsel %vm2827, %v2798, %v2248
      %v2867 = vsel %vm2827, %v2800, %v2250
      %v2869 = vsel %vm2827, %v2802, %v2252
      %v2871 = vsel %vm2827, %v2804, %v2254
      %v2873 = vsel %vm2827, %v2806, %v2256
      %v2875 = vsel %vm2827, %v2808, %v2258
      %v2877 = vsel %vm2827, %v2810, %v2260
      %v2879 = vsel %vm2827, %v2812, %v2262
      %v2881 = vsel %vm2827, %v2814, %v2264
      %v2883 = vsel %vm2827, %v2816, %v2266
      %v2885 = vsel %vm2827, %v2818, %v2268
      %v2887 = vsel %vm2827, %v2820, %v2270
      %v2889 = vsel %vm2827, %v2822, %v2272
      %v2891 = vsel %vm2827, %v2824, %v2274
      %v2893 = vsel %vm2827, %v2826, %v2276
      %vm2894 = vcmask 162816
      %v2896 = vsel %vm2894, %v2829, %v2287
      %v2898 = vsel %vm2894, %v2831, %v2289
      %v2900 = vsel %vm2894, %v2833, %v2291
      %v2902 = vsel %vm2894, %v2835, %v2293
      %v2904 = vsel %vm2894, %v2837, %v2295
      %v2906 = vsel %vm2894, %v2839, %v2297
      %v2908 = vsel %vm2894, %v2841, %v2299
      %v2910 = vsel %vm2894, %v2843, %v2301
      %v2912 = vsel %vm2894, %v2845, %v2303
      %v2914 = vsel %vm2894, %v2847, %v2305
      %v2916 = vsel %vm2894, %v2849, %v2307
      %v2918 = vsel %vm2894, %v2851, %v2309
      %v2920 = vsel %vm2894, %v2853, %v2311
      %v2922 = vsel %vm2894, %v2855, %v2313
      %v2924 = vsel %vm2894, %v2857, %v2315
      %v2926 = vsel %vm2894, %v2859, %v2317
      %v2928 = vsel %vm2894, %v2861, %v2319
      %v2930 = vsel %vm2894, %v2863, %v2321
      %v2932 = vsel %vm2894, %v2865, %v2323
      %v2934 = vsel %vm2894, %v2867, %v2325
      %v2936 = vsel %vm2894, %v2869, %v2327
      %v2938 = vsel %vm2894, %v2871, %v2329
      %v2940 = vsel %vm2894, %v2873, %v2331
      %v2942 = vsel %vm2894, %v2875, %v2333
      %v2944 = vsel %vm2894, %v2877, %v2335
      %v2946 = vsel %vm2894, %v2879, %v2337
      %v2948 = vsel %vm2894, %v2881, %v2339
      %v2950 = vsel %vm2894, %v2883, %v2341
      %v2952 = vsel %vm2894, %v2885, %v2343
      %v2954 = vsel %vm2894, %v2887, %v2345
      %v2956 = vsel %vm2894, %v2889, %v2347
      %v2958 = vsel %vm2894, %v2891, %v2349
      %v2960 = vsel %vm2894, %v2893, %v2351
      %vm2961 = vcmask 195584
      %v2963 = vsel %vm2961, %v2896, %v2367
      %v2965 = vsel %vm2961, %v2898, %v2369
      %v2967 = vsel %vm2961, %v2900, %v2371
      %v2969 = vsel %vm2961, %v2902, %v2373
      %v2971 = vsel %vm2961, %v2904, %v2375
      %v2973 = vsel %vm2961, %v2906, %v2377
      %v2975 = vsel %vm2961, %v2908, %v2379
      %v2977 = vsel %vm2961, %v2910, %v2381
      %v2979 = vsel %vm2961, %v2912, %v2383
      %v2981 = vsel %vm2961, %v2914, %v2385
      %v2983 = vsel %vm2961, %v2916, %v2387
      %v2985 = vsel %vm2961, %v2918, %v2389
      %v2987 = vsel %vm2961, %v2920, %v2391
      %v2989 = vsel %vm2961, %v2922, %v2393
      %v2991 = vsel %vm2961, %v2924, %v2395
      %v2993 = vsel %vm2961, %v2926, %v2397
      %v2995 = vsel %vm2961, %v2928, %v2399
      %v2997 = vsel %vm2961, %v2930, %v2401
      %v2999 = vsel %vm2961, %v2932, %v2403
      %v3001 = vsel %vm2961, %v2934, %v2405
      %v3003 = vsel %vm2961, %v2936, %v2407
      %v3005 = vsel %vm2961, %v2938, %v2409
      %v3007 = vsel %vm2961, %v2940, %v2411
      %v3009 = vsel %vm2961, %v2942, %v2413
      %v3011 = vsel %vm2961, %v2944, %v2415
      %v3013 = vsel %vm2961, %v2946, %v2417
      %v3015 = vsel %vm2961, %v2948, %v2419
      %v3017 = vsel %vm2961, %v2950, %v2421
      %v3019 = vsel %vm2961, %v2952, %v2423
      %v3021 = vsel %vm2961, %v2954, %v2425
      %v3023 = vsel %vm2961, %v2956, %v2427
      %v3025 = vsel %vm2961, %v2958, %v2429
      %v3027 = vsel %vm2961, %v2960, %v2431
      %vm3028 = vcmask 228352
      %v3030 = vsel %vm3028, %v2963, %v2453
      %v3032 = vsel %vm3028, %v2965, %v2455
      %v3034 = vsel %vm3028, %v2967, %v2457
      %v3036 = vsel %vm3028, %v2969, %v2459
      %v3038 = vsel %vm3028, %v2971, %v2461
      %v3040 = vsel %vm3028, %v2973, %v2463
      %v3042 = vsel %vm3028, %v2975, %v2465
      %v3044 = vsel %vm3028, %v2977, %v2467
      %v3046 = vsel %vm3028, %v2979, %v2469
      %v3048 = vsel %vm3028, %v2981, %v2471
      %v3050 = vsel %vm3028, %v2983, %v2473
      %v3052 = vsel %vm3028, %v2985, %v2475
      %v3054 = vsel %vm3028, %v2987, %v2477
      %v3056 = vsel %vm3028, %v2989, %v2479
      %v3058 = vsel %vm3028, %v2991, %v2481
      %v3060 = vsel %vm3028, %v2993, %v2483
      %v3062 = vsel %vm3028, %v2995, %v2485
      %v3064 = vsel %vm3028, %v2997, %v2487
      %v3066 = vsel %vm3028, %v2999, %v2489
      %v3068 = vsel %vm3028, %v3001, %v2491
      %v3070 = vsel %vm3028, %v3003, %v2493
      %v3072 = vsel %vm3028, %v3005, %v2495
      %v3074 = vsel %vm3028, %v3007, %v2497
      %v3076 = vsel %vm3028, %v3009, %v2499
      %v3078 = vsel %vm3028, %v3011, %v2501
      %v3080 = vsel %vm3028, %v3013, %v2503
      %v3082 = vsel %vm3028, %v3015, %v2505
      %v3084 = vsel %vm3028, %v3017, %v2507
      %v3086 = vsel %vm3028, %v3019, %v2509
      %v3088 = vsel %vm3028, %v3021, %v2511
      %v3090 = vsel %vm3028, %v3023, %v2513
      %v3092 = vsel %vm3028, %v3025, %v2515
      %v3094 = vsel %vm3028, %v3027, %v2517
      %vm3095 = vcmask 261120
      %v3097 = vsel %vm3095, %v3030, %v2528
      %v3099 = vsel %vm3095, %v3032, %v2530
      %v3101 = vsel %vm3095, %v3034, %v2532
      %v3103 = vsel %vm3095, %v3036, %v2534
      %v3105 = vsel %vm3095, %v3038, %v2536
      %v3107 = vsel %vm3095, %v3040, %v2538
      %v3109 = vsel %vm3095, %v3042, %v2540
      %v3111 = vsel %vm3095, %v3044, %v2542
      %v3113 = vsel %vm3095, %v3046, %v2544
      %v3115 = vsel %vm3095, %v3048, %v2546
      %v3117 = vsel %vm3095, %v3050, %v2548
      %v3119 = vsel %vm3095, %v3052, %v2550
      %v3121 = vsel %vm3095, %v3054, %v2552
      %v3123 = vsel %vm3095, %v3056, %v2554
      %v3125 = vsel %vm3095, %v3058, %v2556
      %v3127 = vsel %vm3095, %v3060, %v2558
      %v3129 = vsel %vm3095, %v3062, %v2560
      %v3131 = vsel %vm3095, %v3064, %v2562
      %v3133 = vsel %vm3095, %v3066, %v2564
      %v3135 = vsel %vm3095, %v3068, %v2566
      %v3137 = vsel %vm3095, %v3070, %v2568
      %v3139 = vsel %vm3095, %v3072, %v2570
      %v3141 = vsel %vm3095, %v3074, %v2572
      %v3143 = vsel %vm3095, %v3076, %v2574
      %v3145 = vsel %vm3095, %v3078, %v2576
      %v3147 = vsel %vm3095, %v3080, %v2578
      %v3149 = vsel %vm3095, %v3082, %v2580
      %v3151 = vsel %vm3095, %v3084, %v2582
      %v3153 = vsel %vm3095, %v3086, %v2584
      %v3155 = vsel %vm3095, %v3088, %v2586
      %v3157 = vsel %vm3095, %v3090, %v2588
      %v3159 = vsel %vm3095, %v3092, %v2590
      %v3161 = vsel %vm3095, %v3094, %v2592
      %v3162 = vld [vmem:[%s1] sm:$0xf]
      %v3163 = vld [vmem:[%s1 + $0x4] sm:$0xf]
      %v3164 = vld [vmem:[%s1 + $0x8] sm:$0xf]
      %v3165 = vld [vmem:[%s1 + $0xc] sm:$0xf]
      %v3166 = vld [vmem:[%s1 + $0x10] sm:$0x3]
      %v3168 = vlaneseq
      %v3169 = vshrl.u32 %v3168, 7
      %v3170 = vsub.s32 0, %v3169
      %v3171 = vrot.slane %v199, %v3170
      %vm3173 = vsmask.f32 4352
      %v3174 = vshrl.u32 %v3097, 16
      %v3176 = vrot.slane %v3174, 3
      %v3177 = vshll.u32 %v3097, 16
      %v3179 = vrot.slane %v3177, 4
      %v3180 = vor.u32 %v3176, %v3179
      %v3181 = vshrl.u32 %v3099, 16
      %v3183 = vrot.slane %v3181, 3
      %v3184 = vshll.u32 %v3099, 16
      %v3186 = vrot.slane %v3184, 4
      %v3187 = vor.u32 %v3183, %v3186
      %v3188 = vsel %vm3173, %v3180, %v3187
      %v3189 = vshrl.u32 %v3101, 16
      %v3191 = vrot.slane %v3189, 3
      %v3192 = vshll.u32 %v3101, 16
      %v3194 = vrot.slane %v3192, 4
      %v3195 = vor.u32 %v3191, %v3194
      %v3196 = vsel %vm3173, %v3187, %v3195
      %v3197 = vshrl.u32 %v3103, 16
      %v3199 = vrot.slane %v3197, 3
      %v3200 = vshll.u32 %v3103, 16
      %v3202 = vrot.slane %v3200, 4
      %v3203 = vor.u32 %v3199, %v3202
      %v3204 = vsel %vm3173, %v3195, %v3203
      %v3205 = vshrl.u32 %v3105, 16
      %v3207 = vrot.slane %v3205, 3
      %v3208 = vshll.u32 %v3105, 16
      %v3210 = vrot.slane %v3208, 4
      %v3211 = vor.u32 %v3207, %v3210
      %v3212 = vsel %vm3173, %v3203, %v3211
      %v3213 = vshrl.u32 %v3107, 16
      %v3215 = vrot.slane %v3213, 3
      %v3216 = vshll.u32 %v3107, 16
      %v3218 = vrot.slane %v3216, 4
      %v3219 = vor.u32 %v3215, %v3218
      %v3220 = vsel %vm3173, %v3211, %v3219
      %v3221 = vshrl.u32 %v3109, 16
      %v3223 = vrot.slane %v3221, 3
      %v3224 = vshll.u32 %v3109, 16
      %v3226 = vrot.slane %v3224, 4
      %v3227 = vor.u32 %v3223, %v3226
      %v3228 = vsel %vm3173, %v3219, %v3227
      %v3229 = vshrl.u32 %v3111, 16
      %v3231 = vrot.slane %v3229, 3
      %v3232 = vshll.u32 %v3111, 16
      %v3234 = vrot.slane %v3232, 4
      %v3235 = vor.u32 %v3231, %v3234
      %v3236 = vsel %vm3173, %v3227, %v3235
      %v3237 = vshrl.u32 %v3113, 16
      %v3239 = vrot.slane %v3237, 3
      %v3240 = vshll.u32 %v3113, 16
      %v3242 = vrot.slane %v3240, 4
      %v3243 = vor.u32 %v3239, %v3242
      %v3244 = vsel %vm3173, %v3235, %v3243
      %v3245 = vshrl.u32 %v3115, 16
      %v3247 = vrot.slane %v3245, 3
      %v3248 = vshll.u32 %v3115, 16
      %v3250 = vrot.slane %v3248, 4
      %v3251 = vor.u32 %v3247, %v3250
      %v3252 = vsel %vm3173, %v3243, %v3251
      %v3253 = vshrl.u32 %v3117, 16
      %v3255 = vrot.slane %v3253, 3
      %v3256 = vshll.u32 %v3117, 16
      %v3258 = vrot.slane %v3256, 4
      %v3259 = vor.u32 %v3255, %v3258
      %v3260 = vsel %vm3173, %v3251, %v3259
      %v3261 = vshrl.u32 %v3119, 16
      %v3263 = vrot.slane %v3261, 3
      %v3264 = vshll.u32 %v3119, 16
      %v3266 = vrot.slane %v3264, 4
      %v3267 = vor.u32 %v3263, %v3266
      %v3268 = vsel %vm3173, %v3259, %v3267
      %v3269 = vshrl.u32 %v3121, 16
      %v3271 = vrot.slane %v3269, 3
      %v3272 = vshll.u32 %v3121, 16
      %v3274 = vrot.slane %v3272, 4
      %v3275 = vor.u32 %v3271, %v3274
      %v3276 = vsel %vm3173, %v3267, %v3275
      %v3277 = vshrl.u32 %v3123, 16
      %v3279 = vrot.slane %v3277, 3
      %v3280 = vshll.u32 %v3123, 16
      %v3282 = vrot.slane %v3280, 4
      %v3283 = vor.u32 %v3279, %v3282
      %v3284 = vsel %vm3173, %v3275, %v3283
      %v3285 = vshrl.u32 %v3125, 16
      %v3287 = vrot.slane %v3285, 3
      %v3288 = vshll.u32 %v3125, 16
      %v3290 = vrot.slane %v3288, 4
      %v3291 = vor.u32 %v3287, %v3290
      %v3292 = vsel %vm3173, %v3283, %v3291
      %v3293 = vshrl.u32 %v3127, 16
      %v3295 = vrot.slane %v3293, 3
      %v3296 = vshll.u32 %v3127, 16
      %v3298 = vrot.slane %v3296, 4
      %v3299 = vor.u32 %v3295, %v3298
      %v3300 = vsel %vm3173, %v3291, %v3299
      %v3301 = vshrl.u32 %v3129, 16
      %v3303 = vrot.slane %v3301, 3
      %v3304 = vshll.u32 %v3129, 16
      %v3306 = vrot.slane %v3304, 4
      %v3307 = vor.u32 %v3303, %v3306
      %v3308 = vsel %vm3173, %v3299, %v3307
      %v3309 = vshrl.u32 %v3131, 16
      %v3311 = vrot.slane %v3309, 3
      %v3312 = vshll.u32 %v3131, 16
      %v3314 = vrot.slane %v3312, 4
      %v3315 = vor.u32 %v3311, %v3314
      %v3316 = vsel %vm3173, %v3307, %v3315
      %v3317 = vshrl.u32 %v3133, 16
      %v3319 = vrot.slane %v3317, 3
      %v3320 = vshll.u32 %v3133, 16
      %v3322 = vrot.slane %v3320, 4
      %v3323 = vor.u32 %v3319, %v3322
      %v3324 = vsel %vm3173, %v3315, %v3323
      %v3325 = vshrl.u32 %v3135, 16
      %v3327 = vrot.slane %v3325, 3
      %v3328 = vshll.u32 %v3135, 16
      %v3330 = vrot.slane %v3328, 4
      %v3331 = vor.u32 %v3327, %v3330
      %v3332 = vsel %vm3173, %v3323, %v3331
      %v3333 = vshrl.u32 %v3137, 16
      %v3335 = vrot.slane %v3333, 3
      %v3336 = vshll.u32 %v3137, 16
      %v3338 = vrot.slane %v3336, 4
      %v3339 = vor.u32 %v3335, %v3338
      %v3340 = vsel %vm3173, %v3331, %v3339
      %v3341 = vshrl.u32 %v3139, 16
      %v3343 = vrot.slane %v3341, 3
      %v3344 = vshll.u32 %v3139, 16
      %v3346 = vrot.slane %v3344, 4
      %v3347 = vor.u32 %v3343, %v3346
      %v3348 = vsel %vm3173, %v3339, %v3347
      %v3349 = vshrl.u32 %v3141, 16
      %v3351 = vrot.slane %v3349, 3
      %v3352 = vshll.u32 %v3141, 16
      %v3354 = vrot.slane %v3352, 4
      %v3355 = vor.u32 %v3351, %v3354
      %v3356 = vsel %vm3173, %v3347, %v3355
      %v3357 = vshrl.u32 %v3143, 16
      %v3359 = vrot.slane %v3357, 3
      %v3360 = vshll.u32 %v3143, 16
      %v3362 = vrot.slane %v3360, 4
      %v3363 = vor.u32 %v3359, %v3362
      %v3364 = vsel %vm3173, %v3355, %v3363
      %v3365 = vshrl.u32 %v3145, 16
      %v3367 = vrot.slane %v3365, 3
      %v3368 = vshll.u32 %v3145, 16
      %v3370 = vrot.slane %v3368, 4
      %v3371 = vor.u32 %v3367, %v3370
      %v3372 = vsel %vm3173, %v3363, %v3371
      %v3373 = vshrl.u32 %v3147, 16
      %v3375 = vrot.slane %v3373, 3
      %v3376 = vshll.u32 %v3147, 16
      %v3378 = vrot.slane %v3376, 4
      %v3379 = vor.u32 %v3375, %v3378
      %v3380 = vsel %vm3173, %v3371, %v3379
      %v3381 = vshrl.u32 %v3149, 16
      %v3383 = vrot.slane %v3381, 3
      %v3384 = vshll.u32 %v3149, 16
      %v3386 = vrot.slane %v3384, 4
      %v3387 = vor.u32 %v3383, %v3386
      %v3388 = vsel %vm3173, %v3379, %v3387
      %v3389 = vshrl.u32 %v3151, 16
      %v3391 = vrot.slane %v3389, 3
      %v3392 = vshll.u32 %v3151, 16
      %v3394 = vrot.slane %v3392, 4
      %v3395 = vor.u32 %v3391, %v3394
      %v3396 = vsel %vm3173, %v3387, %v3395
      %v3397 = vshrl.u32 %v3153, 16
      %v3399 = vrot.slane %v3397, 3
      %v3400 = vshll.u32 %v3153, 16
      %v3402 = vrot.slane %v3400, 4
      %v3403 = vor.u32 %v3399, %v3402
      %v3404 = vsel %vm3173, %v3395, %v3403
      %v3405 = vshrl.u32 %v3155, 16
      %v3407 = vrot.slane %v3405, 3
      %v3408 = vshll.u32 %v3155, 16
      %v3410 = vrot.slane %v3408, 4
      %v3411 = vor.u32 %v3407, %v3410
      %v3412 = vsel %vm3173, %v3403, %v3411
      %v3413 = vshrl.u32 %v3157, 16
      %v3415 = vrot.slane %v3413, 3
      %v3416 = vshll.u32 %v3157, 16
      %v3418 = vrot.slane %v3416, 4
      %v3419 = vor.u32 %v3415, %v3418
      %v3420 = vsel %vm3173, %v3411, %v3419
      %v3421 = vshrl.u32 %v3159, 16
      %v3423 = vrot.slane %v3421, 3
      %v3424 = vshll.u32 %v3159, 16
      %v3426 = vrot.slane %v3424, 4
      %v3427 = vor.u32 %v3423, %v3426
      %v3428 = vsel %vm3173, %v3419, %v3427
      %v3429 = vshrl.u32 %v3161, 16
      %v3431 = vrot.slane %v3429, 3
      %v3432 = vshll.u32 %v3161, 16
      %v3434 = vrot.slane %v3432, 4
      %v3435 = vor.u32 %v3431, %v3434
      %v3436 = vsel %vm3173, %v3427, %v3435
      %v3442 = vunpack.c.l.b16 %v3162
      %v3443 = vunpack.c.l.b16 %v3163
      %v3444 = vunpack.c.l.b16 %v3164
      %v3445 = vunpack.c.l.b16 %v3165
      %v3446 = vunpack.c.l.b16 %v3166
      %v3447 = vpack.c.b16 %v3443, %v3442
      %v3448 = vpack.c.b16 %v3445, %v3444
      %v3449 = vpack.c.b16 %v3446, %v3446
      %vm3452 = vcmask 293888
      %v3454 = vsel %vm3452, %v3188, 0
      %v3457 = vsel %vm3452, %v3196, 0
      %v3460 = vsel %vm3452, %v3204, 0
      %v3463 = vsel %vm3452, %v3212, 0
      %v3466 = vsel %vm3452, %v3220, 0
      %v3469 = vsel %vm3452, %v3228, 0
      %v3472 = vsel %vm3452, %v3236, 0
      %v3475 = vsel %vm3452, %v3244, 0
      %v3478 = vsel %vm3452, %v3252, 0
      %v3481 = vsel %vm3452, %v3260, 0
      %v3484 = vsel %vm3452, %v3268, 0
      %v3487 = vsel %vm3452, %v3276, 0
      %v3490 = vsel %vm3452, %v3284, 0
      %v3493 = vsel %vm3452, %v3292, 0
      %v3496 = vsel %vm3452, %v3300, 0
      %v3499 = vsel %vm3452, %v3308, 0
      %v3502 = vsel %vm3452, %v3316, 0
      %v3505 = vsel %vm3452, %v3324, 0
      %v3508 = vsel %vm3452, %v3332, 0
      %v3511 = vsel %vm3452, %v3340, 0
      %v3514 = vsel %vm3452, %v3348, 0
      %v3517 = vsel %vm3452, %v3356, 0
      %v3520 = vsel %vm3452, %v3364, 0
      %v3523 = vsel %vm3452, %v3372, 0
      %v3526 = vsel %vm3452, %v3380, 0
      %v3529 = vsel %vm3452, %v3388, 0
      %v3532 = vsel %vm3452, %v3396, 0
      %v3535 = vsel %vm3452, %v3404, 0
      %v3538 = vsel %vm3452, %v3412, 0
      %v3541 = vsel %vm3452, %v3420, 0
      %v3544 = vsel %vm3452, %v3428, 0
      %v3547 = vsel %vm3452, %v3436, 0
      %vm3549 = vcmask 1041408
      %v3551 = vsel %vm3549, %v3449, 0
      %3553 = vmatprep.subr.bf16.mxu0 0
      %3554 = vmatpush1.bf16.msra.mxu0 0
      %3555 = vmatprep.subr.bf16.mxu0 0
      %3556 = vmatpush1.bf16.msra.mxu0 0
      %3557 = vmatprep.subr.bf16.mxu0 0
      %3558 = vmatpush1.bf16.msra.mxu0 0
      %3559 = vmatprep.subr.bf16.mxu0 0
      %3560 = vmatpush1.bf16.msra.mxu0 0
      %3561 = vmatprep.subr.bf16.mxu0 0
      %3562 = vmatpush1.bf16.msra.mxu0 0
      %3563 = vmatprep.subr.bf16.mxu0 0
      %3564 = vmatpush1.bf16.msra.mxu0 %v3551
      %3565 = vmatprep.subr.bf16.mxu0 0
      %3566 = vmatpush1.bf16.msra.mxu0 %v3448
      %3567 = vmatprep.subr.bf16.mxu0 0
      %3568 = vmatpush1.bf16.msra.mxu0 %v3447
      %3569 = vmatprep.subr.bf16.mxu0 0
      %3570 = vmatpush2.bf16.msra.mxu0 0
      %3571 = vmatprep.subr.bf16.mxu0 0
      %3572 = vmatpush2.bf16.msra.mxu0 0
      %3573 = vmatprep.subr.bf16.mxu0 0
      %3574 = vmatpush2.bf16.msra.mxu0 0
      %3575 = vmatprep.subr.bf16.mxu0 0
      %3576 = vmatpush2.bf16.msra.mxu0 0
      %3577 = vmatprep.subr.bf16.mxu0 0
      %3578 = vmatpush2.bf16.msra.mxu0 0
      %3579 = vmatprep.subr.bf16.mxu0 0
      %3580 = vmatpush2.bf16.msra.mxu0 0
      %3581 = vmatprep.subr.bf16.mxu0 0
      %3582 = vmatpush2.bf16.msra.mxu0 0
      %3583 = vmatprep.subr.bf16.mxu0 0
      %3584 = vmatpush2.bf16.msra.mxu0 0
      %3585 = vmatprep.mubr.bf16.mxu0 0
      %3586 = vmatmul.mubr.bf16.gmra.mxu0 %v3454
      %v3587 = vpop.f32.mrf.mxu0
      %v3588 = vadd.f32 %v3171, %v3587
      %v3589 = vpop.f32.mrf.mxu0
      %v3590 = vpop.f32.mrf.mxu0
      %v3591 = vadd.f32 %v3171, %v3590
      %v3592 = vpop.f32.mrf.mxu0
      %3593 = vmatprep.mubr.bf16.mxu0 0
      %3594 = vmatmul.mubr.bf16.gmra.mxu0 %v3457
      %v3595 = vpop.f32.mrf.mxu0
      %v3596 = vadd.f32 %v3171, %v3595
      %v3597 = vpop.f32.mrf.mxu0
      %v3598 = vpop.f32.mrf.mxu0
      %v3599 = vadd.f32 %v3171, %v3598
      %v3600 = vpop.f32.mrf.mxu0
      %3601 = vmatprep.mubr.bf16.mxu0 0
      %3602 = vmatmul.mubr.bf16.gmra.mxu0 %v3460
      %v3603 = vpop.f32.mrf.mxu0
      %v3604 = vadd.f32 %v3171, %v3603
      %v3605 = vpop.f32.mrf.mxu0
      %v3606 = vpop.f32.mrf.mxu0
      %v3607 = vadd.f32 %v3171, %v3606
      %v3608 = vpop.f32.mrf.mxu0
      %3609 = vmatprep.mubr.bf16.mxu0 0
      %3610 = vmatmul.mubr.bf16.gmra.mxu0 %v3463
      %v3611 = vpop.f32.mrf.mxu0
      %v3612 = vadd.f32 %v3171, %v3611
      %v3613 = vpop.f32.mrf.mxu0
      %v3614 = vpop.f32.mrf.mxu0
      %v3615 = vadd.f32 %v3171, %v3614
      %v3616 = vpop.f32.mrf.mxu0
      %3617 = vmatprep.mubr.bf16.mxu0 0
      %3618 = vmatmul.mubr.bf16.gmra.mxu0 %v3466
      %v3619 = vpop.f32.mrf.mxu0
      %v3620 = vadd.f32 %v3171, %v3619
      %v3621 = vpop.f32.mrf.mxu0
      %v3622 = vpop.f32.mrf.mxu0
      %v3623 = vadd.f32 %v3171, %v3622
      %v3624 = vpop.f32.mrf.mxu0
      %3625 = vmatprep.mubr.bf16.mxu0 0
      %3626 = vmatmul.mubr.bf16.gmra.mxu0 %v3469
      %v3627 = vpop.f32.mrf.mxu0
      %v3628 = vadd.f32 %v3171, %v3627
      %v3629 = vpop.f32.mrf.mxu0
      %v3630 = vpop.f32.mrf.mxu0
      %v3631 = vadd.f32 %v3171, %v3630
      %v3632 = vpop.f32.mrf.mxu0
      %3633 = vmatprep.mubr.bf16.mxu0 0
      %3634 = vmatmul.mubr.bf16.gmra.mxu0 %v3472
      %v3635 = vpop.f32.mrf.mxu0
      %v3636 = vadd.f32 %v3171, %v3635
      %v3637 = vpop.f32.mrf.mxu0
      %v3638 = vpop.f32.mrf.mxu0
      %v3639 = vadd.f32 %v3171, %v3638
      %v3640 = vpop.f32.mrf.mxu0
      %3641 = vmatprep.mubr.bf16.mxu0 0
      %3642 = vmatmul.mubr.bf16.gmra.mxu0 %v3475
      %v3643 = vpop.f32.mrf.mxu0
      %v3644 = vadd.f32 %v3171, %v3643
      %v3645 = vpop.f32.mrf.mxu0
      %v3646 = vpop.f32.mrf.mxu0
      %v3647 = vadd.f32 %v3171, %v3646
      %v3648 = vpop.f32.mrf.mxu0
      %3649 = vmatprep.mubr.bf16.mxu0 0
      %3650 = vmatmul.mubr.bf16.gmra.mxu0 %v3478
      %v3651 = vpop.f32.mrf.mxu0
      %v3652 = vadd.f32 %v3171, %v3651
      %v3653 = vpop.f32.mrf.mxu0
      %v3654 = vpop.f32.mrf.mxu0
      %v3655 = vadd.f32 %v3171, %v3654
      %v3656 = vpop.f32.mrf.mxu0
      %3657 = vmatprep.mubr.bf16.mxu0 0
      %3658 = vmatmul.mubr.bf16.gmra.mxu0 %v3481
      %v3659 = vpop.f32.mrf.mxu0
      %v3660 = vadd.f32 %v3171, %v3659
      %v3661 = vpop.f32.mrf.mxu0
      %v3662 = vpop.f32.mrf.mxu0
      %v3663 = vadd.f32 %v3171, %v3662
      %v3664 = vpop.f32.mrf.mxu0
      %3665 = vmatprep.mubr.bf16.mxu0 0
      %3666 = vmatmul.mubr.bf16.gmra.mxu0 %v3484
      %v3667 = vpop.f32.mrf.mxu0
      %v3668 = vadd.f32 %v3171, %v3667
      %v3669 = vpop.f32.mrf.mxu0
      %v3670 = vpop.f32.mrf.mxu0
      %v3671 = vadd.f32 %v3171, %v3670
      %v3672 = vpop.f32.mrf.mxu0
      %3673 = vmatprep.mubr.bf16.mxu0 0
      %3674 = vmatmul.mubr.bf16.gmra.mxu0 %v3487
      %v3675 = vpop.f32.mrf.mxu0
      %v3676 = vadd.f32 %v3171, %v3675
      %v3677 = vpop.f32.mrf.mxu0
      %v3678 = vpop.f32.mrf.mxu0
      %v3679 = vadd.f32 %v3171, %v3678
      %v3680 = vpop.f32.mrf.mxu0
      %3681 = vmatprep.mubr.bf16.mxu0 0
      %3682 = vmatmul.mubr.bf16.gmra.mxu0 %v3490
      %v3683 = vpop.f32.mrf.mxu0
      %v3684 = vadd.f32 %v3171, %v3683
      %v3685 = vpop.f32.mrf.mxu0
      %v3686 = vpop.f32.mrf.mxu0
      %v3687 = vadd.f32 %v3171, %v3686
      %v3688 = vpop.f32.mrf.mxu0
      %3689 = vmatprep.mubr.bf16.mxu0 0
      %3690 = vmatmul.mubr.bf16.gmra.mxu0 %v3493
      %v3691 = vpop.f32.mrf.mxu0
      %v3692 = vadd.f32 %v3171, %v3691
      %v3693 = vpop.f32.mrf.mxu0
      %v3694 = vpop.f32.mrf.mxu0
      %v3695 = vadd.f32 %v3171, %v3694
      %v3696 = vpop.f32.mrf.mxu0
      %3697 = vmatprep.mubr.bf16.mxu0 0
      %3698 = vmatmul.mubr.bf16.gmra.mxu0 %v3496
      %v3699 = vpop.f32.mrf.mxu0
      %v3700 = vadd.f32 %v3171, %v3699
      %v3701 = vpop.f32.mrf.mxu0
      %v3702 = vpop.f32.mrf.mxu0
      %v3703 = vadd.f32 %v3171, %v3702
      %v3704 = vpop.f32.mrf.mxu0
      %3705 = vmatprep.mubr.bf16.mxu0 0
      %3706 = vmatmul.mubr.bf16.gmra.mxu0 %v3499
      %v3707 = vpop.f32.mrf.mxu0
      %v3708 = vadd.f32 %v3171, %v3707
      %v3709 = vpop.f32.mrf.mxu0
      %v3710 = vpop.f32.mrf.mxu0
      %v3711 = vadd.f32 %v3171, %v3710
      %v3712 = vpop.f32.mrf.mxu0
      %3713 = vmatprep.mubr.bf16.mxu0 0
      %3714 = vmatmul.mubr.bf16.gmra.mxu0 %v3502
      %v3715 = vpop.f32.mrf.mxu0
      %v3716 = vadd.f32 %v3171, %v3715
      %v3717 = vpop.f32.mrf.mxu0
      %v3718 = vpop.f32.mrf.mxu0
      %v3719 = vadd.f32 %v3171, %v3718
      %v3720 = vpop.f32.mrf.mxu0
      %3721 = vmatprep.mubr.bf16.mxu0 0
      %3722 = vmatmul.mubr.bf16.gmra.mxu0 %v3505
      %v3723 = vpop.f32.mrf.mxu0
      %v3724 = vadd.f32 %v3171, %v3723
      %v3725 = vpop.f32.mrf.mxu0
      %v3726 = vpop.f32.mrf.mxu0
      %v3727 = vadd.f32 %v3171, %v3726
      %v3728 = vpop.f32.mrf.mxu0
      %3729 = vmatprep.mubr.bf16.mxu0 0
      %3730 = vmatmul.mubr.bf16.gmra.mxu0 %v3508
      %v3731 = vpop.f32.mrf.mxu0
      %v3732 = vadd.f32 %v3171, %v3731
      %v3733 = vpop.f32.mrf.mxu0
      %v3734 = vpop.f32.mrf.mxu0
      %v3735 = vadd.f32 %v3171, %v3734
      %v3736 = vpop.f32.mrf.mxu0
      %3737 = vmatprep.mubr.bf16.mxu0 0
      %3738 = vmatmul.mubr.bf16.gmra.mxu0 %v3511
      %v3739 = vpop.f32.mrf.mxu0
      %v3740 = vadd.f32 %v3171, %v3739
      %v3741 = vpop.f32.mrf.mxu0
      %v3742 = vpop.f32.mrf.mxu0
      %v3743 = vadd.f32 %v3171, %v3742
      %v3744 = vpop.f32.mrf.mxu0
      %3745 = vmatprep.mubr.bf16.mxu0 0
      %3746 = vmatmul.mubr.bf16.gmra.mxu0 %v3514
      %v3747 = vpop.f32.mrf.mxu0
      %v3748 = vadd.f32 %v3171, %v3747
      %v3749 = vpop.f32.mrf.mxu0
      %v3750 = vpop.f32.mrf.mxu0
      %v3751 = vadd.f32 %v3171, %v3750
      %v3752 = vpop.f32.mrf.mxu0
      %3753 = vmatprep.mubr.bf16.mxu0 0
      %3754 = vmatmul.mubr.bf16.gmra.mxu0 %v3517
      %v3755 = vpop.f32.mrf.mxu0
      %v3756 = vadd.f32 %v3171, %v3755
      %v3757 = vpop.f32.mrf.mxu0
      %v3758 = vpop.f32.mrf.mxu0
      %v3759 = vadd.f32 %v3171, %v3758
      %v3760 = vpop.f32.mrf.mxu0
      %3761 = vmatprep.mubr.bf16.mxu0 0
      %3762 = vmatmul.mubr.bf16.gmra.mxu0 %v3520
      %v3763 = vpop.f32.mrf.mxu0
      %v3764 = vadd.f32 %v3171, %v3763
      %v3765 = vpop.f32.mrf.mxu0
      %v3766 = vpop.f32.mrf.mxu0
      %v3767 = vadd.f32 %v3171, %v3766
      %v3768 = vpop.f32.mrf.mxu0
      %3769 = vmatprep.mubr.bf16.mxu0 0
      %3770 = vmatmul.mubr.bf16.gmra.mxu0 %v3523
      %v3771 = vpop.f32.mrf.mxu0
      %v3772 = vadd.f32 %v3171, %v3771
      %v3773 = vpop.f32.mrf.mxu0
      %v3774 = vpop.f32.mrf.mxu0
      %v3775 = vadd.f32 %v3171, %v3774
      %v3776 = vpop.f32.mrf.mxu0
      %3777 = vmatprep.mubr.bf16.mxu0 0
      %3778 = vmatmul.mubr.bf16.gmra.mxu0 %v3526
      %v3779 = vpop.f32.mrf.mxu0
      %v3780 = vadd.f32 %v3171, %v3779
      %v3781 = vpop.f32.mrf.mxu0
      %v3782 = vpop.f32.mrf.mxu0
      %v3783 = vadd.f32 %v3171, %v3782
      %v3784 = vpop.f32.mrf.mxu0
      %3785 = vmatprep.mubr.bf16.mxu0 0
      %3786 = vmatmul.mubr.bf16.gmra.mxu0 %v3529
      %v3787 = vpop.f32.mrf.mxu0
      %v3788 = vadd.f32 %v3171, %v3787
      %v3789 = vpop.f32.mrf.mxu0
      %v3790 = vpop.f32.mrf.mxu0
      %v3791 = vadd.f32 %v3171, %v3790
      %v3792 = vpop.f32.mrf.mxu0
      %3793 = vmatprep.mubr.bf16.mxu0 0
      %3794 = vmatmul.mubr.bf16.gmra.mxu0 %v3532
      %v3795 = vpop.f32.mrf.mxu0
      %v3796 = vadd.f32 %v3171, %v3795
      %v3797 = vpop.f32.mrf.mxu0
      %v3798 = vpop.f32.mrf.mxu0
      %v3799 = vadd.f32 %v3171, %v3798
      %v3800 = vpop.f32.mrf.mxu0
      %3801 = vmatprep.mubr.bf16.mxu0 0
      %3802 = vmatmul.mubr.bf16.gmra.mxu0 %v3535
      %v3803 = vpop.f32.mrf.mxu0
      %v3804 = vadd.f32 %v3171, %v3803
      %v3805 = vpop.f32.mrf.mxu0
      %v3806 = vpop.f32.mrf.mxu0
      %v3807 = vadd.f32 %v3171, %v3806
      %v3808 = vpop.f32.mrf.mxu0
      %3809 = vmatprep.mubr.bf16.mxu0 0
      %3810 = vmatmul.mubr.bf16.gmra.mxu0 %v3538
      %v3811 = vpop.f32.mrf.mxu0
      %v3812 = vadd.f32 %v3171, %v3811
      %v3813 = vpop.f32.mrf.mxu0
      %v3814 = vpop.f32.mrf.mxu0
      %v3815 = vadd.f32 %v3171, %v3814
      %v3816 = vpop.f32.mrf.mxu0
      %3817 = vmatprep.mubr.bf16.mxu0 0
      %3818 = vmatmul.mubr.bf16.gmra.mxu0 %v3541
      %v3819 = vpop.f32.mrf.mxu0
      %v3820 = vadd.f32 %v3171, %v3819
      %v3821 = vpop.f32.mrf.mxu0
      %v3822 = vpop.f32.mrf.mxu0
      %v3823 = vadd.f32 %v3171, %v3822
      %v3824 = vpop.f32.mrf.mxu0
      %3825 = vmatprep.mubr.bf16.mxu0 0
      %3826 = vmatmul.mubr.bf16.gmra.mxu0 %v3544
      %v3827 = vpop.f32.mrf.mxu0
      %v3828 = vadd.f32 %v3171, %v3827
      %v3829 = vpop.f32.mrf.mxu0
      %v3830 = vpop.f32.mrf.mxu0
      %v3831 = vadd.f32 %v3171, %v3830
      %v3832 = vpop.f32.mrf.mxu0
      %3833 = vmatprep.mubr.bf16.mxu0 0
      %3834 = vmatmul.mubr.bf16.gmra.mxu0 %v3547
      %v3835 = vpop.f32.mrf.mxu0
      %v3836 = vadd.f32 %v3171, %v3835
      %v3837 = vpop.f32.mrf.mxu0
      %v3838 = vpop.f32.mrf.mxu0
      %v3839 = vadd.f32 %v3171, %v3838
      %v3840 = vpop.f32.mrf.mxu0
      %3841 = vdwg.mxu0
      %v3842 = vmax.f32 %v3588, 0.0
      %v3843 = vmax.f32 %v3591, 0.0
      %v3844 = vmax.f32 %v3596, 0.0
      %v3845 = vmax.f32 %v3599, 0.0
      %v3846 = vmax.f32 %v3604, 0.0
      %v3847 = vmax.f32 %v3607, 0.0
      %v3848 = vmax.f32 %v3612, 0.0
      %v3849 = vmax.f32 %v3615, 0.0
      %v3850 = vmax.f32 %v3620, 0.0
      %v3851 = vmax.f32 %v3623, 0.0
      %v3852 = vmax.f32 %v3628, 0.0
      %v3853 = vmax.f32 %v3631, 0.0
      %v3854 = vmax.f32 %v3636, 0.0
      %v3855 = vmax.f32 %v3639, 0.0
      %v3856 = vmax.f32 %v3644, 0.0
      %v3857 = vmax.f32 %v3647, 0.0
      %v3858 = vmax.f32 %v3652, 0.0
      %v3859 = vmax.f32 %v3655, 0.0
      %v3860 = vmax.f32 %v3660, 0.0
      %v3861 = vmax.f32 %v3663, 0.0
      %v3862 = vmax.f32 %v3668, 0.0
      %v3863 = vmax.f32 %v3671, 0.0
      %v3864 = vmax.f32 %v3676, 0.0
      %v3865 = vmax.f32 %v3679, 0.0
      %v3866 = vmax.f32 %v3684, 0.0
      %v3867 = vmax.f32 %v3687, 0.0
      %v3868 = vmax.f32 %v3692, 0.0
      %v3869 = vmax.f32 %v3695, 0.0
      %v3870 = vmax.f32 %v3700, 0.0
      %v3871 = vmax.f32 %v3703, 0.0
      %v3872 = vmax.f32 %v3708, 0.0
      %v3873 = vmax.f32 %v3711, 0.0
      %v3874 = vmax.f32 %v3716, 0.0
      %v3875 = vmax.f32 %v3719, 0.0
      %v3876 = vmax.f32 %v3724, 0.0
      %v3877 = vmax.f32 %v3727, 0.0
      %v3878 = vmax.f32 %v3732, 0.0
      %v3879 = vmax.f32 %v3735, 0.0
      %v3880 = vmax.f32 %v3740, 0.0
      %v3881 = vmax.f32 %v3743, 0.0
      %v3882 = vmax.f32 %v3748, 0.0
      %v3883 = vmax.f32 %v3751, 0.0
      %v3884 = vmax.f32 %v3756, 0.0
      %v3885 = vmax.f32 %v3759, 0.0
      %v3886 = vmax.f32 %v3764, 0.0
      %v3887 = vmax.f32 %v3767, 0.0
      %v3888 = vmax.f32 %v3772, 0.0
      %v3889 = vmax.f32 %v3775, 0.0
      %v3890 = vmax.f32 %v3780, 0.0
      %v3891 = vmax.f32 %v3783, 0.0
      %v3892 = vmax.f32 %v3788, 0.0
      %v3893 = vmax.f32 %v3791, 0.0
      %v3894 = vmax.f32 %v3796, 0.0
      %v3895 = vmax.f32 %v3799, 0.0
      %v3896 = vmax.f32 %v3804, 0.0
      %v3897 = vmax.f32 %v3807, 0.0
      %v3898 = vmax.f32 %v3812, 0.0
      %v3899 = vmax.f32 %v3815, 0.0
      %v3900 = vmax.f32 %v3820, 0.0
      %v3901 = vmax.f32 %v3823, 0.0
      %v3902 = vmax.f32 %v3828, 0.0
      %v3903 = vmax.f32 %v3831, 0.0
      %v3904 = vmax.f32 %v3836, 0.0
      %v3905 = vmax.f32 %v3839, 0.0
      %v3906 = vsel %vm1033, 1, 0
      %v3907 = vsel %vm1034, 1, 0
      %v3908 = vsel %vm1035, 1, 0
      %v3909 = vsel %vm1036, 1, 0
      %v3910 = vsel %vm1037, 1, 0
      %v3911 = vsel %vm1038, 1, 0
      %v3912 = vsel %vm1039, 1, 0
      %v3913 = vsel %vm1040, 1, 0
      %v3914 = vsel %vm1041, 1, 0
      %v3915 = vsel %vm1042, 1, 0
      %v3916 = vsel %vm1043, 1, 0
      %v3917 = vsel %vm1044, 1, 0
      %v3918 = vsel %vm1045, 1, 0
      %v3919 = vsel %vm1046, 1, 0
      %v3920 = vsel %vm1047, 1, 0
      %v3921 = vsel %vm1048, 1, 0
      %v3922 = vsel %vm1049, 1, 0
      %v3923 = vsel %vm1050, 1, 0
      %v3924 = vsel %vm1051, 1, 0
      %v3925 = vsel %vm1052, 1, 0
      %v3926 = vsel %vm1053, 1, 0
      %v3927 = vsel %vm1054, 1, 0
      %v3928 = vsel %vm1055, 1, 0
      %v3929 = vsel %vm1056, 1, 0
      %v3930 = vsel %vm1057, 1, 0
      %v3931 = vsel %vm1058, 1, 0
      %v3932 = vsel %vm1059, 1, 0
      %v3933 = vsel %vm1060, 1, 0
      %v3934 = vsel %vm1061, 1, 0
      %v3935 = vsel %vm1062, 1, 0
      %v3936 = vsel %vm1063, 1, 0
      %v3937 = vsel %vm1064, 1, 0
      %v3938 = vsel %vm1065, 1, 0
      %v3939 = vsel %vm1066, 1, 0
      %v3940 = vsel %vm1067, 1, 0
      %v3941 = vsel %vm1068, 1, 0
      %v3942 = vsel %vm1069, 1, 0
      %v3943 = vsel %vm1070, 1, 0
      %v3944 = vsel %vm1071, 1, 0
      %v3945 = vsel %vm1072, 1, 0
      %v3946 = vsel %vm1073, 1, 0
      %v3947 = vsel %vm1074, 1, 0
      %v3948 = vsel %vm1075, 1, 0
      %v3949 = vsel %vm1076, 1, 0
      %v3950 = vsel %vm1077, 1, 0
      %v3951 = vsel %vm1078, 1, 0
      %v3952 = vsel %vm1079, 1, 0
      %v3953 = vsel %vm1080, 1, 0
      %v3954 = vsel %vm1081, 1, 0
      %v3955 = vsel %vm1082, 1, 0
      %v3956 = vsel %vm1083, 1, 0
      %v3957 = vsel %vm1084, 1, 0
      %v3958 = vsel %vm1085, 1, 0
      %v3959 = vsel %vm1086, 1, 0
      %v3960 = vsel %vm1087, 1, 0
      %v3961 = vsel %vm1088, 1, 0
      %v3962 = vsel %vm1089, 1, 0
      %v3963 = vsel %vm1090, 1, 0
      %v3964 = vsel %vm1091, 1, 0
      %v3965 = vsel %vm1092, 1, 0
      %v3966 = vsel %vm1093, 1, 0
      %v3967 = vsel %vm1094, 1, 0
      %v3968 = vsel %vm1095, 1, 0
      %v3969 = vsel %vm1096, 1, 0
      %vm3970 = vcmp.eq.s32.totalorder %v3906, 1
      %vm3971 = vcmp.eq.s32.totalorder %v3907, 1
      %vm3972 = vcmp.eq.s32.totalorder %v3908, 1
      %vm3973 = vcmp.eq.s32.totalorder %v3909, 1
      %vm3974 = vcmp.eq.s32.totalorder %v3910, 1
      %vm3975 = vcmp.eq.s32.totalorder %v3911, 1
      %vm3976 = vcmp.eq.s32.totalorder %v3912, 1
      %vm3977 = vcmp.eq.s32.totalorder %v3913, 1
      %vm3978 = vcmp.eq.s32.totalorder %v3914, 1
      %vm3979 = vcmp.eq.s32.totalorder %v3915, 1
      %vm3980 = vcmp.eq.s32.totalorder %v3916, 1
      %vm3981 = vcmp.eq.s32.totalorder %v3917, 1
      %vm3982 = vcmp.eq.s32.totalorder %v3918, 1
      %vm3983 = vcmp.eq.s32.totalorder %v3919, 1
      %vm3984 = vcmp.eq.s32.totalorder %v3920, 1
      %vm3985 = vcmp.eq.s32.totalorder %v3921, 1
      %vm3986 = vcmp.eq.s32.totalorder %v3922, 1
      %vm3987 = vcmp.eq.s32.totalorder %v3923, 1
      %vm3988 = vcmp.eq.s32.totalorder %v3924, 1
      %vm3989 = vcmp.eq.s32.totalorder %v3925, 1
      %vm3990 = vcmp.eq.s32.totalorder %v3926, 1
      %vm3991 = vcmp.eq.s32.totalorder %v3927, 1
      %vm3992 = vcmp.eq.s32.totalorder %v3928, 1
      %vm3993 = vcmp.eq.s32.totalorder %v3929, 1
      %vm3994 = vcmp.eq.s32.totalorder %v3930, 1
      %vm3995 = vcmp.eq.s32.totalorder %v3931, 1
      %vm3996 = vcmp.eq.s32.totalorder %v3932, 1
      %vm3997 = vcmp.eq.s32.totalorder %v3933, 1
      %vm3998 = vcmp.eq.s32.totalorder %v3934, 1
      %vm3999 = vcmp.eq.s32.totalorder %v3935, 1
      %vm4000 = vcmp.eq.s32.totalorder %v3936, 1
      %vm4001 = vcmp.eq.s32.totalorder %v3937, 1
      %vm4002 = vcmp.eq.s32.totalorder %v3938, 1
      %vm4003 = vcmp.eq.s32.totalorder %v3939, 1
      %vm4004 = vcmp.eq.s32.totalorder %v3940, 1
      %vm4005 = vcmp.eq.s32.totalorder %v3941, 1
      %vm4006 = vcmp.eq.s32.totalorder %v3942, 1
      %vm4007 = vcmp.eq.s32.totalorder %v3943, 1
      %vm4008 = vcmp.eq.s32.totalorder %v3944, 1
      %vm4009 = vcmp.eq.s32.totalorder %v3945, 1
      %vm4010 = vcmp.eq.s32.totalorder %v3946, 1
      %vm4011 = vcmp.eq.s32.totalorder %v3947, 1
      %vm4012 = vcmp.eq.s32.totalorder %v3948, 1
      %vm4013 = vcmp.eq.s32.totalorder %v3949, 1
      %vm4014 = vcmp.eq.s32.totalorder %v3950, 1
      %vm4015 = vcmp.eq.s32.totalorder %v3951, 1
      %vm4016 = vcmp.eq.s32.totalorder %v3952, 1
      %vm4017 = vcmp.eq.s32.totalorder %v3953, 1
      %vm4018 = vcmp.eq.s32.totalorder %v3954, 1
      %vm4019 = vcmp.eq.s32.totalorder %v3955, 1
      %vm4020 = vcmp.eq.s32.totalorder %v3956, 1
      %vm4021 = vcmp.eq.s32.totalorder %v3957, 1
      %vm4022 = vcmp.eq.s32.totalorder %v3958, 1
      %vm4023 = vcmp.eq.s32.totalorder %v3959, 1
      %vm4024 = vcmp.eq.s32.totalorder %v3960, 1
      %vm4025 = vcmp.eq.s32.totalorder %v3961, 1
      %vm4026 = vcmp.eq.s32.totalorder %v3962, 1
      %vm4027 = vcmp.eq.s32.totalorder %v3963, 1
      %vm4028 = vcmp.eq.s32.totalorder %v3964, 1
      %vm4029 = vcmp.eq.s32.totalorder %v3965, 1
      %vm4030 = vcmp.eq.s32.totalorder %v3966, 1
      %vm4031 = vcmp.eq.s32.totalorder %v3967, 1
      %vm4032 = vcmp.eq.s32.totalorder %v3968, 1
      %vm4033 = vcmp.eq.s32.totalorder %v3969, 1
      %v4034 = vsel %vm3970, %v3842, 0.0
      %v4035 = vsel %vm3971, %v3843, 0.0
      %v4036 = vsel %vm3972, %v3844, 0.0
      %v4037 = vsel %vm3973, %v3845, 0.0
      %v4038 = vsel %vm3974, %v3846, 0.0
      %v4039 = vsel %vm3975, %v3847, 0.0
      %v4040 = vsel %vm3976, %v3848, 0.0
      %v4041 = vsel %vm3977, %v3849, 0.0
      %v4042 = vsel %vm3978, %v3850, 0.0
      %v4043 = vsel %vm3979, %v3851, 0.0
      %v4044 = vsel %vm3980, %v3852, 0.0
      %v4045 = vsel %vm3981, %v3853, 0.0
      %v4046 = vsel %vm3982, %v3854, 0.0
      %v4047 = vsel %vm3983, %v3855, 0.0
      %v4048 = vsel %vm3984, %v3856, 0.0
      %v4049 = vsel %vm3985, %v3857, 0.0
      %v4050 = vsel %vm3986, %v3858, 0.0
      %v4051 = vsel %vm3987, %v3859, 0.0
      %v4052 = vsel %vm3988, %v3860, 0.0
      %v4053 = vsel %vm3989, %v3861, 0.0
      %v4054 = vsel %vm3990, %v3862, 0.0
      %v4055 = vsel %vm3991, %v3863, 0.0
      %v4056 = vsel %vm3992, %v3864, 0.0
      %v4057 = vsel %vm3993, %v3865, 0.0
      %v4058 = vsel %vm3994, %v3866, 0.0
      %v4059 = vsel %vm3995, %v3867, 0.0
      %v4060 = vsel %vm3996, %v3868, 0.0
      %v4061 = vsel %vm3997, %v3869, 0.0
      %v4062 = vsel %vm3998, %v3870, 0.0
      %v4063 = vsel %vm3999, %v3871, 0.0
      %v4064 = vsel %vm4000, %v3872, 0.0
      %v4065 = vsel %vm4001, %v3873, 0.0
      %v4066 = vsel %vm4002, %v3874, 0.0
      %v4067 = vsel %vm4003, %v3875, 0.0
      %v4068 = vsel %vm4004, %v3876, 0.0
      %v4069 = vsel %vm4005, %v3877, 0.0
      %v4070 = vsel %vm4006, %v3878, 0.0
      %v4071 = vsel %vm4007, %v3879, 0.0
      %v4072 = vsel %vm4008, %v3880, 0.0
      %v4073 = vsel %vm4009, %v3881, 0.0
      %v4074 = vsel %vm4010, %v3882, 0.0
      %v4075 = vsel %vm4011, %v3883, 0.0
      %v4076 = vsel %vm4012, %v3884, 0.0
      %v4077 = vsel %vm4013, %v3885, 0.0
      %v4078 = vsel %vm4014, %v3886, 0.0
      %v4079 = vsel %vm4015, %v3887, 0.0
      %v4080 = vsel %vm4016, %v3888, 0.0
      %v4081 = vsel %vm4017, %v3889, 0.0
      %v4082 = vsel %vm4018, %v3890, 0.0
      %v4083 = vsel %vm4019, %v3891, 0.0
      %v4084 = vsel %vm4020, %v3892, 0.0
      %v4085 = vsel %vm4021, %v3893, 0.0
      %v4086 = vsel %vm4022, %v3894, 0.0
      %v4087 = vsel %vm4023, %v3895, 0.0
      %v4088 = vsel %vm4024, %v3896, 0.0
      %v4089 = vsel %vm4025, %v3897, 0.0
      %v4090 = vsel %vm4026, %v3898, 0.0
      %v4091 = vsel %vm4027, %v3899, 0.0
      %v4092 = vsel %vm4028, %v3900, 0.0
      %v4093 = vsel %vm4029, %v3901, 0.0
      %v4094 = vsel %vm4030, %v3902, 0.0
      %v4095 = vsel %vm4031, %v3903, 0.0
      %v4096 = vsel %vm4032, %v3904, 0.0
      %v4097 = vsel %vm4033, %v3905, 0.0
      %v4098 = vpack.c.bf16 %v4035, %v4034
      %v4099 = vpack.c.bf16 %v4037, %v4036
      %v4100 = vpack.c.bf16 %v4039, %v4038
      %v4101 = vpack.c.bf16 %v4041, %v4040
      %v4102 = vpack.c.bf16 %v4043, %v4042
      %v4103 = vpack.c.bf16 %v4045, %v4044
      %v4104 = vpack.c.bf16 %v4047, %v4046
      %v4105 = vpack.c.bf16 %v4049, %v4048
      %v4106 = vpack.c.bf16 %v4051, %v4050
      %v4107 = vpack.c.bf16 %v4053, %v4052
      %v4108 = vpack.c.bf16 %v4055, %v4054
      %v4109 = vpack.c.bf16 %v4057, %v4056
      %v4110 = vpack.c.bf16 %v4059, %v4058
      %v4111 = vpack.c.bf16 %v4061, %v4060
      %v4112 = vpack.c.bf16 %v4063, %v4062
      %v4113 = vpack.c.bf16 %v4065, %v4064
      %v4114 = vpack.c.bf16 %v4067, %v4066
      %v4115 = vpack.c.bf16 %v4069, %v4068
      %v4116 = vpack.c.bf16 %v4071, %v4070
      %v4117 = vpack.c.bf16 %v4073, %v4072
      %v4118 = vpack.c.bf16 %v4075, %v4074
      %v4119 = vpack.c.bf16 %v4077, %v4076
      %v4120 = vpack.c.bf16 %v4079, %v4078
      %v4121 = vpack.c.bf16 %v4081, %v4080
      %v4122 = vpack.c.bf16 %v4083, %v4082
      %v4123 = vpack.c.bf16 %v4085, %v4084
      %v4124 = vpack.c.bf16 %v4087, %v4086
      %v4125 = vpack.c.bf16 %v4089, %v4088
      %v4126 = vpack.c.bf16 %v4091, %v4090
      %v4127 = vpack.c.bf16 %v4093, %v4092
      %v4128 = vpack.c.bf16 %v4095, %v4094
      %v4129 = vpack.c.bf16 %v4097, %v4096
      %v4162 = vunpack.c.l.b16 %v4098
      %v4163 = vunpack.c.h.b16 %v4098
      %v4164 = vunpack.c.l.b16 %v4099
      %v4165 = vunpack.c.h.b16 %v4099
      %v4166 = vunpack.c.l.b16 %v4100
      %v4167 = vunpack.c.h.b16 %v4100
      %v4168 = vunpack.c.l.b16 %v4101
      %v4169 = vunpack.c.h.b16 %v4101
      %v4170 = vunpack.c.l.b16 %v4102
      %v4171 = vunpack.c.h.b16 %v4102
      %v4172 = vunpack.c.l.b16 %v4103
      %v4173 = vunpack.c.h.b16 %v4103
      %v4174 = vunpack.c.l.b16 %v4104
      %v4175 = vunpack.c.h.b16 %v4104
      %v4176 = vunpack.c.l.b16 %v4105
      %v4177 = vunpack.c.h.b16 %v4105
      %v4178 = vunpack.c.l.b16 %v4106
      %v4179 = vunpack.c.h.b16 %v4106
      %v4180 = vunpack.c.l.b16 %v4107
      %v4181 = vunpack.c.h.b16 %v4107
      %v4182 = vunpack.c.l.b16 %v4108
      %v4183 = vunpack.c.h.b16 %v4108
      %v4184 = vunpack.c.l.b16 %v4109
      %v4185 = vunpack.c.h.b16 %v4109
      %v4186 = vunpack.c.l.b16 %v4110
      %v4187 = vunpack.c.h.b16 %v4110
      %v4188 = vunpack.c.l.b16 %v4111
      %v4189 = vunpack.c.h.b16 %v4111
      %v4190 = vunpack.c.l.b16 %v4112
      %v4191 = vunpack.c.h.b16 %v4112
      %v4192 = vunpack.c.l.b16 %v4113
      %v4193 = vunpack.c.h.b16 %v4113
      %v4194 = vunpack.c.l.b16 %v4114
      %v4195 = vunpack.c.h.b16 %v4114
      %v4196 = vunpack.c.l.b16 %v4115
      %v4197 = vunpack.c.h.b16 %v4115
      %v4198 = vunpack.c.l.b16 %v4116
      %v4199 = vunpack.c.h.b16 %v4116
      %v4200 = vunpack.c.l.b16 %v4117
      %v4201 = vunpack.c.h.b16 %v4117
      %v4202 = vunpack.c.l.b16 %v4118
      %v4203 = vunpack.c.h.b16 %v4118
      %v4204 = vunpack.c.l.b16 %v4119
      %v4205 = vunpack.c.h.b16 %v4119
      %v4206 = vunpack.c.l.b16 %v4120
      %v4207 = vunpack.c.h.b16 %v4120
      %v4208 = vunpack.c.l.b16 %v4121
      %v4209 = vunpack.c.h.b16 %v4121
      %v4210 = vunpack.c.l.b16 %v4122
      %v4211 = vunpack.c.h.b16 %v4122
      %v4212 = vunpack.c.l.b16 %v4123
      %v4213 = vunpack.c.h.b16 %v4123
      %v4214 = vunpack.c.l.b16 %v4124
      %v4215 = vunpack.c.h.b16 %v4124
      %v4216 = vunpack.c.l.b16 %v4125
      %v4217 = vunpack.c.h.b16 %v4125
      %v4218 = vunpack.c.l.b16 %v4126
      %v4219 = vunpack.c.h.b16 %v4126
      %v4220 = vunpack.c.l.b16 %v4127
      %v4221 = vunpack.c.h.b16 %v4127
      %v4222 = vunpack.c.l.b16 %v4128
      %v4223 = vunpack.c.h.b16 %v4128
      %v4224 = vunpack.c.l.b16 %v4129
      %v4225 = vunpack.c.h.b16 %v4129
      %v4226 = vpack.c.b16 %v4162, %v4162
      %v4227 = vpack.c.b16 %v4163, %v4163
      %v4228 = vpack.c.b16 %v4164, %v4164
      %v4229 = vpack.c.b16 %v4165, %v4165
      %v4230 = vpack.c.b16 %v4166, %v4166
      %v4231 = vpack.c.b16 %v4167, %v4167
      %v4232 = vpack.c.b16 %v4168, %v4168
      %v4233 = vpack.c.b16 %v4169, %v4169
      %v4234 = vpack.c.b16 %v4170, %v4170
      %v4235 = vpack.c.b16 %v4171, %v4171
      %v4236 = vpack.c.b16 %v4172, %v4172
      %v4237 = vpack.c.b16 %v4173, %v4173
      %v4238 = vpack.c.b16 %v4174, %v4174
      %v4239 = vpack.c.b16 %v4175, %v4175
      %v4240 = vpack.c.b16 %v4176, %v4176
      %v4241 = vpack.c.b16 %v4177, %v4177
      %v4242 = vpack.c.b16 %v4178, %v4178
      %v4243 = vpack.c.b16 %v4179, %v4179
      %v4244 = vpack.c.b16 %v4180, %v4180
      %v4245 = vpack.c.b16 %v4181, %v4181
      %v4246 = vpack.c.b16 %v4182, %v4182
      %v4247 = vpack.c.b16 %v4183, %v4183
      %v4248 = vpack.c.b16 %v4184, %v4184
      %v4249 = vpack.c.b16 %v4185, %v4185
      %v4250 = vpack.c.b16 %v4186, %v4186
      %v4251 = vpack.c.b16 %v4187, %v4187
      %v4252 = vpack.c.b16 %v4188, %v4188
      %v4253 = vpack.c.b16 %v4189, %v4189
      %v4254 = vpack.c.b16 %v4190, %v4190
      %v4255 = vpack.c.b16 %v4191, %v4191
      %v4256 = vpack.c.b16 %v4192, %v4192
      %v4257 = vpack.c.b16 %v4193, %v4193
      %v4258 = vpack.c.b16 %v4194, %v4194
      %v4259 = vpack.c.b16 %v4195, %v4195
      %v4260 = vpack.c.b16 %v4196, %v4196
      %v4261 = vpack.c.b16 %v4197, %v4197
      %v4262 = vpack.c.b16 %v4198, %v4198
      %v4263 = vpack.c.b16 %v4199, %v4199
      %v4264 = vpack.c.b16 %v4200, %v4200
      %v4265 = vpack.c.b16 %v4201, %v4201
      %v4266 = vpack.c.b16 %v4202, %v4202
      %v4267 = vpack.c.b16 %v4203, %v4203
      %v4268 = vpack.c.b16 %v4204, %v4204
      %v4269 = vpack.c.b16 %v4205, %v4205
      %v4270 = vpack.c.b16 %v4206, %v4206
      %v4271 = vpack.c.b16 %v4207, %v4207
      %v4272 = vpack.c.b16 %v4208, %v4208
      %v4273 = vpack.c.b16 %v4209, %v4209
      %v4274 = vpack.c.b16 %v4210, %v4210
      %v4275 = vpack.c.b16 %v4211, %v4211
      %v4276 = vpack.c.b16 %v4212, %v4212
      %v4277 = vpack.c.b16 %v4213, %v4213
      %v4278 = vpack.c.b16 %v4214, %v4214
      %v4279 = vpack.c.b16 %v4215, %v4215
      %v4280 = vpack.c.b16 %v4216, %v4216
      %v4281 = vpack.c.b16 %v4217, %v4217
      %v4282 = vpack.c.b16 %v4218, %v4218
      %v4283 = vpack.c.b16 %v4219, %v4219
      %v4284 = vpack.c.b16 %v4220, %v4220
      %v4285 = vpack.c.b16 %v4221, %v4221
      %v4286 = vpack.c.b16 %v4222, %v4222
      %v4287 = vpack.c.b16 %v4223, %v4223
      %v4288 = vpack.c.b16 %v4224, %v4224
      %v4289 = vpack.c.b16 %v4225, %v4225
      %4354 = vst.msk [vmem:[#allocation2 + $0x18] sm:$0xf] %vm1097, %v4226
      %4355 = vst.msk [vmem:[#allocation2 + $0x1c] sm:$0xf] %vm1097, %v4227
      %4356 = vst.msk [vmem:[#allocation2 + $0x20] sm:$0xf] %vm1097, %v4228
      %4357 = vst.msk [vmem:[#allocation2 + $0x24] sm:$0xf] %vm1097, %v4229
      %4358 = vst.msk [vmem:[#allocation2 + $0x28] sm:$0xf] %vm1097, %v4230
      %4359 = vst.msk [vmem:[#allocation2 + $0x2c] sm:$0xf] %vm1097, %v4231
      %4360 = vst.msk [vmem:[#allocation2 + $0x30] sm:$0xf] %vm1097, %v4232
      %4361 = vst.msk [vmem:[#allocation2 + $0x34] sm:$0xf] %vm1097, %v4233
      %4362 = vst.msk [vmem:[#allocation2 + $0x38] sm:$0xf] %vm1097, %v4234
      %4363 = vst.msk [vmem:[#allocation2 + $0x3c] sm:$0xf] %vm1097, %v4235
      %4364 = vst.msk [vmem:[#allocation2 + $0x40] sm:$0xf] %vm1097, %v4236
      %4365 = vst.msk [vmem:[#allocation2 + $0x44] sm:$0xf] %vm1097, %v4237
      %4366 = vst.msk [vmem:[#allocation2 + $0x48] sm:$0xf] %vm1097, %v4238
      %4367 = vst.msk [vmem:[#allocation2 + $0x4c] sm:$0xf] %vm1097, %v4239
      %4368 = vst.msk [vmem:[#allocation2 + $0x50] sm:$0xf] %vm1097, %v4240
      %4369 = vst.msk [vmem:[#allocation2 + $0x54] sm:$0xf] %vm1097, %v4241
      %4370 = vst.msk [vmem:[#allocation2 + $0x58] sm:$0xf] %vm1097, %v4242
      %4371 = vst.msk [vmem:[#allocation2 + $0x5c] sm:$0xf] %vm1097, %v4243
      %4372 = vst.msk [vmem:[#allocation2 + $0x60] sm:$0xf] %vm1097, %v4244
      %4373 = vst.msk [vmem:[#allocation2 + $0x64] sm:$0xf] %vm1097, %v4245
      %4374 = vst.msk [vmem:[#allocation2 + $0x68] sm:$0xf] %vm1097, %v4246
      %4375 = vst.msk [vmem:[#allocation2 + $0x6c] sm:$0xf] %vm1097, %v4247
      %4376 = vst.msk [vmem:[#allocation2 + $0x70] sm:$0xf] %vm1097, %v4248
      %4377 = vst.msk [vmem:[#allocation2 + $0x74] sm:$0xf] %vm1097, %v4249
      %4378 = vst.msk [vmem:[#allocation2 + $0x78] sm:$0xf] %vm1097, %v4250
      %4379 = vst.msk [vmem:[#allocation2 + $0x7c] sm:$0xf] %vm1097, %v4251
      %4380 = vst.msk [vmem:[#allocation2 + $0x80] sm:$0xf] %vm1097, %v4252
      %4381 = vst.msk [vmem:[#allocation2 + $0x84] sm:$0xf] %vm1097, %v4253
      %4382 = vst.msk [vmem:[#allocation2 + $0x88] sm:$0xf] %vm1097, %v4254
      %4383 = vst.msk [vmem:[#allocation2 + $0x8c] sm:$0xf] %vm1097, %v4255
      %4384 = vst.msk [vmem:[#allocation2 + $0x90] sm:$0xf] %vm1097, %v4256
      %4385 = vst.msk [vmem:[#allocation2 + $0x94] sm:$0xf] %vm1097, %v4257
      %4386 = vst.msk [vmem:[#allocation2 + $0x98] sm:$0xf] %vm1097, %v4258
      %4387 = vst.msk [vmem:[#allocation2 + $0x9c] sm:$0xf] %vm1097, %v4259
      %4388 = vst.msk [vmem:[#allocation2 + $0xa0] sm:$0xf] %vm1097, %v4260
      %4389 = vst.msk [vmem:[#allocation2 + $0xa4] sm:$0xf] %vm1097, %v4261
      %4390 = vst.msk [vmem:[#allocation2 + $0xa8] sm:$0xf] %vm1097, %v4262
      %4391 = vst.msk [vmem:[#allocation2 + $0xac] sm:$0xf] %vm1097, %v4263
      %4392 = vst.msk [vmem:[#allocation2 + $0xb0] sm:$0xf] %vm1097, %v4264
      %4393 = vst.msk [vmem:[#allocation2 + $0xb4] sm:$0xf] %vm1097, %v4265
      %4394 = vst.msk [vmem:[#allocation2 + $0xb8] sm:$0xf] %vm1097, %v4266
      %4395 = vst.msk [vmem:[#allocation2 + $0xbc] sm:$0xf] %vm1097, %v4267
      %4396 = vst.msk [vmem:[#allocation2 + $0xc0] sm:$0xf] %vm1097, %v4268
      %4397 = vst.msk [vmem:[#allocation2 + $0xc4] sm:$0xf] %vm1097, %v4269
      %4398 = vst.msk [vmem:[#allocation2 + $0xc8] sm:$0xf] %vm1097, %v4270
      %4399 = vst.msk [vmem:[#allocation2 + $0xcc] sm:$0xf] %vm1097, %v4271
      %4400 = vst.msk [vmem:[#allocation2 + $0xd0] sm:$0xf] %vm1097, %v4272
      %4401 = vst.msk [vmem:[#allocation2 + $0xd4] sm:$0xf] %vm1097, %v4273
      %4402 = vst.msk [vmem:[#allocation2 + $0xd8] sm:$0xf] %vm1097, %v4274
      %4403 = vst.msk [vmem:[#allocation2 + $0xdc] sm:$0xf] %vm1097, %v4275
      %4404 = vst.msk [vmem:[#allocation2 + $0xe0] sm:$0xf] %vm1097, %v4276
      %4405 = vst.msk [vmem:[#allocation2 + $0xe4] sm:$0xf] %vm1097, %v4277
      %4406 = vst.msk [vmem:[#allocation2 + $0xe8] sm:$0xf] %vm1097, %v4278
      %4407 = vst.msk [vmem:[#allocation2 + $0xec] sm:$0xf] %vm1097, %v4279
      %4408 = vst.msk [vmem:[#allocation2 + $0xf0] sm:$0xf] %vm1097, %v4280
      %4409 = vst.msk [vmem:[#allocation2 + $0xf4] sm:$0xf] %vm1097, %v4281
      %4410 = vst.msk [vmem:[#allocation2 + $0xf8] sm:$0xf] %vm1097, %v4282
      %4411 = vst.msk [vmem:[#allocation2 + $0xfc] sm:$0xf] %vm1097, %v4283
      %4412 = vst.msk [vmem:[#allocation2 + $0x100] sm:$0xf] %vm1097, %v4284
      %4413 = vst.msk [vmem:[#allocation2 + $0x104] sm:$0xf] %vm1097, %v4285
      %4414 = vst.msk [vmem:[#allocation2 + $0x108] sm:$0xf] %vm1097, %v4286
      %4415 = vst.msk [vmem:[#allocation2 + $0x10c] sm:$0xf] %vm1097, %v4287
      %4416 = vst.msk [vmem:[#allocation2 + $0x110] sm:$0xf] %vm1097, %v4288
      %4417 = vst.msk [vmem:[#allocation2 + $0x114] sm:$0xf] %vm1097, %v4289
      %v4418 = vld [vmem:[#allocation2 + $0x4] sm:$0x8]
      %v4419 = vld [vmem:[#allocation2 + $0x8] sm:$0xf]
      %v4420 = vld [vmem:[#allocation2 + $0xc] sm:$0xf]
      %v4421 = vld [vmem:[#allocation2 + $0x10] sm:$0xf]
      %v4422 = vld [vmem:[#allocation2 + $0x14] sm:$0xf]
      %v4423 = vld [vmem:[#allocation2 + $0x18] sm:$0xf]
      %v4424 = vld [vmem:[#allocation2 + $0x1c] sm:$0xf]
      %v4425 = vld [vmem:[#allocation2 + $0x20] sm:$0xf]
      %v4426 = vld [vmem:[#allocation2 + $0x24] sm:$0xf]
      %v4427 = vld [vmem:[#allocation2 + $0x28] sm:$0xf]
      %v4428 = vld [vmem:[#allocation2 + $0x2c] sm:$0xf]
      %v4429 = vld [vmem:[#allocation2 + $0x30] sm:$0xf]
      %v4430 = vld [vmem:[#allocation2 + $0x34] sm:$0xf]
      %v4431 = vld [vmem:[#allocation2 + $0x38] sm:$0xf]
      %v4432 = vld [vmem:[#allocation2 + $0x3c] sm:$0xf]
      %v4433 = vld [vmem:[#allocation2 + $0x40] sm:$0xf]
      %v4434 = vld [vmem:[#allocation2 + $0x44] sm:$0xf]
      %v4435 = vld [vmem:[#allocation2 + $0x48] sm:$0xf]
      %v4436 = vld [vmem:[#allocation2 + $0x4c] sm:$0xf]
      %v4437 = vld [vmem:[#allocation2 + $0x50] sm:$0xf]
      %v4438 = vld [vmem:[#allocation2 + $0x54] sm:$0xf]
      %v4439 = vld [vmem:[#allocation2 + $0x58] sm:$0xf]
      %v4440 = vld [vmem:[#allocation2 + $0x5c] sm:$0xf]
      %v4441 = vld [vmem:[#allocation2 + $0x60] sm:$0xf]
      %v4442 = vld [vmem:[#allocation2 + $0x64] sm:$0xf]
      %v4443 = vld [vmem:[#allocation2 + $0x68] sm:$0xf]
      %v4444 = vld [vmem:[#allocation2 + $0x6c] sm:$0xf]
      %v4445 = vld [vmem:[#allocation2 + $0x70] sm:$0xf]
      %v4446 = vld [vmem:[#allocation2 + $0x74] sm:$0xf]
      %v4447 = vld [vmem:[#allocation2 + $0x78] sm:$0xf]
      %v4448 = vld [vmem:[#allocation2 + $0x7c] sm:$0xf]
      %v4449 = vld [vmem:[#allocation2 + $0x80] sm:$0xf]
      %v4450 = vld [vmem:[#allocation2 + $0x84] sm:$0xf]
      %v4451 = vld [vmem:[#allocation2 + $0x88] sm:$0xf]
      %v4452 = vld [vmem:[#allocation2 + $0x8c] sm:$0xf]
      %v4453 = vld [vmem:[#allocation2 + $0x90] sm:$0xf]
      %v4454 = vld [vmem:[#allocation2 + $0x94] sm:$0xf]
      %v4455 = vld [vmem:[#allocation2 + $0x98] sm:$0xf]
      %v4456 = vld [vmem:[#allocation2 + $0x9c] sm:$0xf]
      %v4457 = vld [vmem:[#allocation2 + $0xa0] sm:$0xf]
      %v4458 = vld [vmem:[#allocation2 + $0xa4] sm:$0xf]
      %v4459 = vld [vmem:[#allocation2 + $0xa8] sm:$0xf]
      %v4460 = vld [vmem:[#allocation2 + $0xac] sm:$0xf]
      %v4461 = vld [vmem:[#allocation2 + $0xb0] sm:$0xf]
      %v4462 = vld [vmem:[#allocation2 + $0xb4] sm:$0xf]
      %v4463 = vld [vmem:[#allocation2 + $0xb8] sm:$0xf]
      %v4464 = vld [vmem:[#allocation2 + $0xbc] sm:$0xf]
      %v4465 = vld [vmem:[#allocation2 + $0xc0] sm:$0xf]
      %v4466 = vld [vmem:[#allocation2 + $0xc4] sm:$0xf]
      %v4467 = vld [vmem:[#allocation2 + $0xc8] sm:$0xf]
      %v4468 = vld [vmem:[#allocation2 + $0xcc] sm:$0xf]
      %v4469 = vld [vmem:[#allocation2 + $0xd0] sm:$0xf]
      %v4470 = vld [vmem:[#allocation2 + $0xd4] sm:$0xf]
      %v4471 = vld [vmem:[#allocation2 + $0xd8] sm:$0xf]
      %v4472 = vld [vmem:[#allocation2 + $0xdc] sm:$0xf]
      %v4473 = vld [vmem:[#allocation2 + $0xe0] sm:$0xf]
      %v4474 = vld [vmem:[#allocation2 + $0xe4] sm:$0xf]
      %v4475 = vld [vmem:[#allocation2 + $0xe8] sm:$0xf]
      %v4476 = vld [vmem:[#allocation2 + $0xec] sm:$0xf]
      %v4477 = vld [vmem:[#allocation2 + $0xf0] sm:$0xf]
      %v4478 = vld [vmem:[#allocation2 + $0xf4] sm:$0xf]
      %v4479 = vld [vmem:[#allocation2 + $0xf8] sm:$0xf]
      %v4480 = vld [vmem:[#allocation2 + $0xfc] sm:$0xf]
      %v4481 = vld [vmem:[#allocation2 + $0x100] sm:$0xf]
      %v4482 = vld [vmem:[#allocation2 + $0x104] sm:$0xf]
      %v4483 = vld [vmem:[#allocation2 + $0x108] sm:$0x1]
      %v4484 = vld [vmem:[#allocation2 + $0x14] sm:$0x8]
      %v4485 = vld [vmem:[#allocation2 + $0x108] sm:$0xf]
      %v4486 = vld [vmem:[#allocation2 + $0x10c] sm:$0xf]
      %v4487 = vld [vmem:[#allocation2 + $0x110] sm:$0xf]
      %v4488 = vld [vmem:[#allocation2 + $0x114] sm:$0xf]
      %v4489 = vld [vmem:[#allocation2 + $0x118] sm:$0x1]
      %v4490 = vld [vmem:[#allocation2 + $0x24] sm:$0x8]
      %v4491 = vld [vmem:[#allocation2 + $0x118] sm:$0xf]
      %v4492 = vld [vmem:[#allocation2 + $0x11c] sm:$0xf]
      %v4493 = vld [vmem:[#allocation2 + $0x120] sm:$0xf]
      %v4494 = vld [vmem:[#allocation2 + $0x124] sm:$0xf]
      %v4495 = vld [vmem:[#allocation2 + $0x128] sm:$0x1]
      %v4561 = vunpack.c.l.b16 %v4418
      %v4562 = vunpack.c.l.b16 %v4419
      %v4563 = vunpack.c.l.b16 %v4420
      %v4564 = vunpack.c.l.b16 %v4421
      %v4565 = vunpack.c.l.b16 %v4422
      %v4566 = vunpack.c.l.b16 %v4423
      %v4567 = vunpack.c.l.b16 %v4424
      %v4568 = vunpack.c.l.b16 %v4425
      %v4569 = vunpack.c.l.b16 %v4426
      %v4570 = vunpack.c.l.b16 %v4427
      %v4571 = vunpack.c.l.b16 %v4428
      %v4572 = vunpack.c.l.b16 %v4429
      %v4573 = vunpack.c.l.b16 %v4430
      %v4574 = vunpack.c.l.b16 %v4431
      %v4575 = vunpack.c.l.b16 %v4432
      %v4576 = vunpack.c.l.b16 %v4433
      %v4577 = vunpack.c.l.b16 %v4434
      %v4578 = vunpack.c.l.b16 %v4435
      %v4579 = vunpack.c.l.b16 %v4436
      %v4580 = vunpack.c.l.b16 %v4437
      %v4581 = vunpack.c.l.b16 %v4438
      %v4582 = vunpack.c.l.b16 %v4439
      %v4583 = vunpack.c.l.b16 %v4440
      %v4584 = vunpack.c.l.b16 %v4441
      %v4585 = vunpack.c.l.b16 %v4442
      %v4586 = vunpack.c.l.b16 %v4443
      %v4587 = vunpack.c.l.b16 %v4444
      %v4588 = vunpack.c.l.b16 %v4445
      %v4589 = vunpack.c.l.b16 %v4446
      %v4590 = vunpack.c.l.b16 %v4447
      %v4591 = vunpack.c.l.b16 %v4448
      %v4592 = vunpack.c.l.b16 %v4449
      %v4593 = vunpack.c.l.b16 %v4450
      %v4594 = vunpack.c.l.b16 %v4451
      %v4595 = vunpack.c.l.b16 %v4452
      %v4596 = vunpack.c.l.b16 %v4453
      %v4597 = vunpack.c.l.b16 %v4454
      %v4598 = vunpack.c.l.b16 %v4455
      %v4599 = vunpack.c.l.b16 %v4456
      %v4600 = vunpack.c.l.b16 %v4457
      %v4601 = vunpack.c.l.b16 %v4458
      %v4602 = vunpack.c.l.b16 %v4459
      %v4603 = vunpack.c.l.b16 %v4460
      %v4604 = vunpack.c.l.b16 %v4461
      %v4605 = vunpack.c.l.b16 %v4462
      %v4606 = vunpack.c.l.b16 %v4463
      %v4607 = vunpack.c.l.b16 %v4464
      %v4608 = vunpack.c.l.b16 %v4465
      %v4609 = vunpack.c.l.b16 %v4466
      %v4610 = vunpack.c.l.b16 %v4467
      %v4611 = vunpack.c.l.b16 %v4468
      %v4612 = vunpack.c.l.b16 %v4469
      %v4613 = vunpack.c.l.b16 %v4470
      %v4614 = vunpack.c.l.b16 %v4471
      %v4615 = vunpack.c.l.b16 %v4472
      %v4616 = vunpack.c.l.b16 %v4473
      %v4617 = vunpack.c.l.b16 %v4474
      %v4618 = vunpack.c.l.b16 %v4475
      %v4619 = vunpack.c.l.b16 %v4476
      %v4620 = vunpack.c.l.b16 %v4477
      %v4621 = vunpack.c.l.b16 %v4478
      %v4622 = vunpack.c.l.b16 %v4479
      %v4623 = vunpack.c.l.b16 %v4480
      %v4624 = vunpack.c.l.b16 %v4481
      %v4625 = vunpack.c.l.b16 %v4482
      %v4626 = vpack.c.b16 %v4562, %v4561
      %v4627 = vpack.c.b16 %v4564, %v4563
      %v4628 = vpack.c.b16 %v4566, %v4565
      %v4629 = vpack.c.b16 %v4568, %v4567
      %v4630 = vpack.c.b16 %v4570, %v4569
      %v4631 = vpack.c.b16 %v4572, %v4571
      %v4632 = vpack.c.b16 %v4574, %v4573
      %v4633 = vpack.c.b16 %v4576, %v4575
      %v4634 = vpack.c.b16 %v4578, %v4577
      %v4635 = vpack.c.b16 %v4580, %v4579
      %v4636 = vpack.c.b16 %v4582, %v4581
      %v4637 = vpack.c.b16 %v4584, %v4583
      %v4638 = vpack.c.b16 %v4586, %v4585
      %v4639 = vpack.c.b16 %v4588, %v4587
      %v4640 = vpack.c.b16 %v4590, %v4589
      %v4641 = vpack.c.b16 %v4592, %v4591
      %v4642 = vpack.c.b16 %v4594, %v4593
      %v4643 = vpack.c.b16 %v4596, %v4595
      %v4644 = vpack.c.b16 %v4598, %v4597
      %v4645 = vpack.c.b16 %v4600, %v4599
      %v4646 = vpack.c.b16 %v4602, %v4601
      %v4647 = vpack.c.b16 %v4604, %v4603
      %v4648 = vpack.c.b16 %v4606, %v4605
      %v4649 = vpack.c.b16 %v4608, %v4607
      %v4650 = vpack.c.b16 %v4610, %v4609
      %v4651 = vpack.c.b16 %v4612, %v4611
      %v4652 = vpack.c.b16 %v4614, %v4613
      %v4653 = vpack.c.b16 %v4616, %v4615
      %v4654 = vpack.c.b16 %v4618, %v4617
      %v4655 = vpack.c.b16 %v4620, %v4619
      %v4656 = vpack.c.b16 %v4622, %v4621
      %v4657 = vpack.c.b16 %v4624, %v4623
      %v4658 = vpack.c.b16 %v4625, %v4625
      %v4659 = vpack.c.b16 %v4563, %v4562
      %v4660 = vpack.c.b16 %v4565, %v4564
      %v4661 = vpack.c.b16 %v4567, %v4566
      %v4662 = vpack.c.b16 %v4569, %v4568
      %v4663 = vpack.c.b16 %v4571, %v4570
      %v4664 = vpack.c.b16 %v4573, %v4572
      %v4665 = vpack.c.b16 %v4575, %v4574
      %v4666 = vpack.c.b16 %v4577, %v4576
      %v4667 = vpack.c.b16 %v4579, %v4578
      %v4668 = vpack.c.b16 %v4581, %v4580
      %v4669 = vpack.c.b16 %v4583, %v4582
      %v4670 = vpack.c.b16 %v4585, %v4584
      %v4671 = vpack.c.b16 %v4587, %v4586
      %v4672 = vpack.c.b16 %v4589, %v4588
      %v4673 = vpack.c.b16 %v4591, %v4590
      %v4674 = vpack.c.b16 %v4593, %v4592
      %v4675 = vpack.c.b16 %v4595, %v4594
      %v4676 = vpack.c.b16 %v4597, %v4596
      %v4677 = vpack.c.b16 %v4599, %v4598
      %v4678 = vpack.c.b16 %v4601, %v4600
      %v4679 = vpack.c.b16 %v4603, %v4602
      %v4680 = vpack.c.b16 %v4605, %v4604
      %v4681 = vpack.c.b16 %v4607, %v4606
      %v4682 = vpack.c.b16 %v4609, %v4608
      %v4683 = vpack.c.b16 %v4611, %v4610
      %v4684 = vpack.c.b16 %v4613, %v4612
      %v4685 = vpack.c.b16 %v4615, %v4614
      %v4686 = vpack.c.b16 %v4617, %v4616
      %v4687 = vpack.c.b16 %v4619, %v4618
      %v4688 = vpack.c.b16 %v4621, %v4620
      %v4689 = vpack.c.b16 %v4623, %v4622
      %v4690 = vpack.c.b16 %v4625, %v4624
      %v4692 = vshrl.u32 %v4659, 16
      %v4694 = vrot.slane %v4692, 4
      %v4695 = vshll.u32 %v4659, 16
      %v4697 = vrot.slane %v4695, 5
      %v4698 = vor.u32 %v4694, %v4697
      %v4700 = vshrl.u32 %v4660, 16
      %v4702 = vrot.slane %v4700, 4
      %v4703 = vshll.u32 %v4660, 16
      %v4705 = vrot.slane %v4703, 5
      %v4706 = vor.u32 %v4702, %v4705
      %v4707 = vsel %vm1622, %v4698, %v4706
      %v4709 = vshrl.u32 %v4661, 16
      %v4711 = vrot.slane %v4709, 4
      %v4712 = vshll.u32 %v4661, 16
      %v4714 = vrot.slane %v4712, 5
      %v4715 = vor.u32 %v4711, %v4714
      %v4716 = vsel %vm1622, %v4706, %v4715
      %v4718 = vshrl.u32 %v4662, 16
      %v4720 = vrot.slane %v4718, 4
      %v4721 = vshll.u32 %v4662, 16
      %v4723 = vrot.slane %v4721, 5
      %v4724 = vor.u32 %v4720, %v4723
      %v4725 = vsel %vm1622, %v4715, %v4724
      %v4727 = vshrl.u32 %v4663, 16
      %v4729 = vrot.slane %v4727, 4
      %v4730 = vshll.u32 %v4663, 16
      %v4732 = vrot.slane %v4730, 5
      %v4733 = vor.u32 %v4729, %v4732
      %v4734 = vsel %vm1622, %v4724, %v4733
      %v4736 = vshrl.u32 %v4664, 16
      %v4738 = vrot.slane %v4736, 4
      %v4739 = vshll.u32 %v4664, 16
      %v4741 = vrot.slane %v4739, 5
      %v4742 = vor.u32 %v4738, %v4741
      %v4743 = vsel %vm1622, %v4733, %v4742
      %v4745 = vshrl.u32 %v4665, 16
      %v4747 = vrot.slane %v4745, 4
      %v4748 = vshll.u32 %v4665, 16
      %v4750 = vrot.slane %v4748, 5
      %v4751 = vor.u32 %v4747, %v4750
      %v4752 = vsel %vm1622, %v4742, %v4751
      %v4754 = vshrl.u32 %v4666, 16
      %v4756 = vrot.slane %v4754, 4
      %v4757 = vshll.u32 %v4666, 16
      %v4759 = vrot.slane %v4757, 5
      %v4760 = vor.u32 %v4756, %v4759
      %v4761 = vsel %vm1622, %v4751, %v4760
      %v4763 = vshrl.u32 %v4667, 16
      %v4765 = vrot.slane %v4763, 4
      %v4766 = vshll.u32 %v4667, 16
      %v4768 = vrot.slane %v4766, 5
      %v4769 = vor.u32 %v4765, %v4768
      %v4770 = vsel %vm1622, %v4760, %v4769
      %v4772 = vshrl.u32 %v4668, 16
      %v4774 = vrot.slane %v4772, 4
      %v4775 = vshll.u32 %v4668, 16
      %v4777 = vrot.slane %v4775, 5
      %v4778 = vor.u32 %v4774, %v4777
      %v4779 = vsel %vm1622, %v4769, %v4778
      %v4781 = vshrl.u32 %v4669, 16
      %v4783 = vrot.slane %v4781, 4
      %v4784 = vshll.u32 %v4669, 16
      %v4786 = vrot.slane %v4784, 5
      %v4787 = vor.u32 %v4783, %v4786
      %v4788 = vsel %vm1622, %v4778, %v4787
      %v4790 = vshrl.u32 %v4670, 16
      %v4792 = vrot.slane %v4790, 4
      %v4793 = vshll.u32 %v4670, 16
      %v4795 = vrot.slane %v4793, 5
      %v4796 = vor.u32 %v4792, %v4795
      %v4797 = vsel %vm1622, %v4787, %v4796
      %v4799 = vshrl.u32 %v4671, 16
      %v4801 = vrot.slane %v4799, 4
      %v4802 = vshll.u32 %v4671, 16
      %v4804 = vrot.slane %v4802, 5
      %v4805 = vor.u32 %v4801, %v4804
      %v4806 = vsel %vm1622, %v4796, %v4805
      %v4808 = vshrl.u32 %v4672, 16
      %v4810 = vrot.slane %v4808, 4
      %v4811 = vshll.u32 %v4672, 16
      %v4813 = vrot.slane %v4811, 5
      %v4814 = vor.u32 %v4810, %v4813
      %v4815 = vsel %vm1622, %v4805, %v4814
      %v4817 = vshrl.u32 %v4673, 16
      %v4819 = vrot.slane %v4817, 4
      %v4820 = vshll.u32 %v4673, 16
      %v4822 = vrot.slane %v4820, 5
      %v4823 = vor.u32 %v4819, %v4822
      %v4824 = vsel %vm1622, %v4814, %v4823
      %v4826 = vshrl.u32 %v4674, 16
      %v4828 = vrot.slane %v4826, 4
      %v4829 = vshll.u32 %v4674, 16
      %v4831 = vrot.slane %v4829, 5
      %v4832 = vor.u32 %v4828, %v4831
      %v4833 = vsel %vm1622, %v4823, %v4832
      %v4835 = vshrl.u32 %v4675, 16
      %v4837 = vrot.slane %v4835, 4
      %v4838 = vshll.u32 %v4675, 16
      %v4840 = vrot.slane %v4838, 5
      %v4841 = vor.u32 %v4837, %v4840
      %v4842 = vsel %vm1622, %v4832, %v4841
      %v4844 = vshrl.u32 %v4676, 16
      %v4846 = vrot.slane %v4844, 4
      %v4847 = vshll.u32 %v4676, 16
      %v4849 = vrot.slane %v4847, 5
      %v4850 = vor.u32 %v4846, %v4849
      %v4851 = vsel %vm1622, %v4841, %v4850
      %v4853 = vshrl.u32 %v4677, 16
      %v4855 = vrot.slane %v4853, 4
      %v4856 = vshll.u32 %v4677, 16
      %v4858 = vrot.slane %v4856, 5
      %v4859 = vor.u32 %v4855, %v4858
      %v4860 = vsel %vm1622, %v4850, %v4859
      %v4862 = vshrl.u32 %v4678, 16
      %v4864 = vrot.slane %v4862, 4
      %v4865 = vshll.u32 %v4678, 16
      %v4867 = vrot.slane %v4865, 5
      %v4868 = vor.u32 %v4864, %v4867
      %v4869 = vsel %vm1622, %v4859, %v4868
      %v4871 = vshrl.u32 %v4679, 16
      %v4873 = vrot.slane %v4871, 4
      %v4874 = vshll.u32 %v4679, 16
      %v4876 = vrot.slane %v4874, 5
      %v4877 = vor.u32 %v4873, %v4876
      %v4878 = vsel %vm1622, %v4868, %v4877
      %v4880 = vshrl.u32 %v4680, 16
      %v4882 = vrot.slane %v4880, 4
      %v4883 = vshll.u32 %v4680, 16
      %v4885 = vrot.slane %v4883, 5
      %v4886 = vor.u32 %v4882, %v4885
      %v4887 = vsel %vm1622, %v4877, %v4886
      %v4889 = vshrl.u32 %v4681, 16
      %v4891 = vrot.slane %v4889, 4
      %v4892 = vshll.u32 %v4681, 16
      %v4894 = vrot.slane %v4892, 5
      %v4895 = vor.u32 %v4891, %v4894
      %v4896 = vsel %vm1622, %v4886, %v4895
      %v4898 = vshrl.u32 %v4682, 16
      %v4900 = vrot.slane %v4898, 4
      %v4901 = vshll.u32 %v4682, 16
      %v4903 = vrot.slane %v4901, 5
      %v4904 = vor.u32 %v4900, %v4903
      %v4905 = vsel %vm1622, %v4895, %v4904
      %v4907 = vshrl.u32 %v4683, 16
      %v4909 = vrot.slane %v4907, 4
      %v4910 = vshll.u32 %v4683, 16
      %v4912 = vrot.slane %v4910, 5
      %v4913 = vor.u32 %v4909, %v4912
      %v4914 = vsel %vm1622, %v4904, %v4913
      %v4916 = vshrl.u32 %v4684, 16
      %v4918 = vrot.slane %v4916, 4
      %v4919 = vshll.u32 %v4684, 16
      %v4921 = vrot.slane %v4919, 5
      %v4922 = vor.u32 %v4918, %v4921
      %v4923 = vsel %vm1622, %v4913, %v4922
      %v4925 = vshrl.u32 %v4685, 16
      %v4927 = vrot.slane %v4925, 4
      %v4928 = vshll.u32 %v4685, 16
      %v4930 = vrot.slane %v4928, 5
      %v4931 = vor.u32 %v4927, %v4930
      %v4932 = vsel %vm1622, %v4922, %v4931
      %v4934 = vshrl.u32 %v4686, 16
      %v4936 = vrot.slane %v4934, 4
      %v4937 = vshll.u32 %v4686, 16
      %v4939 = vrot.slane %v4937, 5
      %v4940 = vor.u32 %v4936, %v4939
      %v4941 = vsel %vm1622, %v4931, %v4940
      %v4943 = vshrl.u32 %v4687, 16
      %v4945 = vrot.slane %v4943, 4
      %v4946 = vshll.u32 %v4687, 16
      %v4948 = vrot.slane %v4946, 5
      %v4949 = vor.u32 %v4945, %v4948
      %v4950 = vsel %vm1622, %v4940, %v4949
      %v4952 = vshrl.u32 %v4688, 16
      %v4954 = vrot.slane %v4952, 4
      %v4955 = vshll.u32 %v4688, 16
      %v4957 = vrot.slane %v4955, 5
      %v4958 = vor.u32 %v4954, %v4957
      %v4959 = vsel %vm1622, %v4949, %v4958
      %v4961 = vshrl.u32 %v4689, 16
      %v4963 = vrot.slane %v4961, 4
      %v4964 = vshll.u32 %v4689, 16
      %v4966 = vrot.slane %v4964, 5
      %v4967 = vor.u32 %v4963, %v4966
      %v4968 = vsel %vm1622, %v4958, %v4967
      %v4970 = vshrl.u32 %v4690, 16
      %v4972 = vrot.slane %v4970, 4
      %v4973 = vshll.u32 %v4690, 16
      %v4975 = vrot.slane %v4973, 5
      %v4976 = vor.u32 %v4972, %v4975
      %v4977 = vsel %vm1622, %v4967, %v4976
      %4978 = vrot.lane.b32.xlu0 %v4698, 4
      %v4979 = vpop.permute.xlu0 %4978
      %4980 = vrot.lane.b32.xlu0 %v4707, 4
      %v4981 = vpop.permute.xlu0 %4980
      %4982 = vrot.lane.b32.xlu0 %v4716, 4
      %v4983 = vpop.permute.xlu0 %4982
      %4984 = vrot.lane.b32.xlu0 %v4725, 4
      %v4985 = vpop.permute.xlu0 %4984
      %4986 = vrot.lane.b32.xlu0 %v4734, 4
      %v4987 = vpop.permute.xlu0 %4986
      %4988 = vrot.lane.b32.xlu0 %v4743, 4
      %v4989 = vpop.permute.xlu0 %4988
      %4990 = vrot.lane.b32.xlu0 %v4752, 4
      %v4991 = vpop.permute.xlu0 %4990
      %4992 = vrot.lane.b32.xlu0 %v4761, 4
      %v4993 = vpop.permute.xlu0 %4992
      %4994 = vrot.lane.b32.xlu0 %v4770, 4
      %v4995 = vpop.permute.xlu0 %4994
      %4996 = vrot.lane.b32.xlu0 %v4779, 4
      %v4997 = vpop.permute.xlu0 %4996
      %4998 = vrot.lane.b32.xlu0 %v4788, 4
      %v4999 = vpop.permute.xlu0 %4998
      %5000 = vrot.lane.b32.xlu0 %v4797, 4
      %v5001 = vpop.permute.xlu0 %5000
      %5002 = vrot.lane.b32.xlu0 %v4806, 4
      %v5003 = vpop.permute.xlu0 %5002
      %5004 = vrot.lane.b32.xlu0 %v4815, 4
      %v5005 = vpop.permute.xlu0 %5004
      %5006 = vrot.lane.b32.xlu0 %v4824, 4
      %v5007 = vpop.permute.xlu0 %5006
      %5008 = vrot.lane.b32.xlu0 %v4833, 4
      %v5009 = vpop.permute.xlu0 %5008
      %5010 = vrot.lane.b32.xlu0 %v4842, 4
      %v5011 = vpop.permute.xlu0 %5010
      %5012 = vrot.lane.b32.xlu0 %v4851, 4
      %v5013 = vpop.permute.xlu0 %5012
      %5014 = vrot.lane.b32.xlu0 %v4860, 4
      %v5015 = vpop.permute.xlu0 %5014
      %5016 = vrot.lane.b32.xlu0 %v4869, 4
      %v5017 = vpop.permute.xlu0 %5016
      %5018 = vrot.lane.b32.xlu0 %v4878, 4
      %v5019 = vpop.permute.xlu0 %5018
      %5020 = vrot.lane.b32.xlu0 %v4887, 4
      %v5021 = vpop.permute.xlu0 %5020
      %5022 = vrot.lane.b32.xlu0 %v4896, 4
      %v5023 = vpop.permute.xlu0 %5022
      %5024 = vrot.lane.b32.xlu0 %v4905, 4
      %v5025 = vpop.permute.xlu0 %5024
      %5026 = vrot.lane.b32.xlu0 %v4914, 4
      %v5027 = vpop.permute.xlu0 %5026
      %5028 = vrot.lane.b32.xlu0 %v4923, 4
      %v5029 = vpop.permute.xlu0 %5028
      %5030 = vrot.lane.b32.xlu0 %v4932, 4
      %v5031 = vpop.permute.xlu0 %5030
      %5032 = vrot.lane.b32.xlu0 %v4941, 4
      %v5033 = vpop.permute.xlu0 %5032
      %5034 = vrot.lane.b32.xlu0 %v4950, 4
      %v5035 = vpop.permute.xlu0 %5034
      %5036 = vrot.lane.b32.xlu0 %v4959, 4
      %v5037 = vpop.permute.xlu0 %5036
      %5038 = vrot.lane.b32.xlu0 %v4968, 4
      %v5039 = vpop.permute.xlu0 %5038
      %5040 = vrot.lane.b32.xlu0 %v4977, 4
      %v5041 = vpop.permute.xlu0 %5040
      %5042 = vrot.lane.b32.xlu0 %v4976, 4
      %v5043 = vpop.permute.xlu0 %5042
      %v5045 = vunpack.c.l.b16 %v4483
      %v5046 = vpack.c.b16 %v5045, %v5045
      %v5047 = vrot.slane %v4659, 5
      %v5048 = vrot.slane %v4660, 5
      %v5049 = vsel %vm1979, %v5047, %v5048
      %v5050 = vrot.slane %v4661, 5
      %v5051 = vsel %vm1979, %v5048, %v5050
      %v5052 = vrot.slane %v4662, 5
      %v5053 = vsel %vm1979, %v5050, %v5052
      %v5054 = vrot.slane %v4663, 5
      %v5055 = vsel %vm1979, %v5052, %v5054
      %v5056 = vrot.slane %v4664, 5
      %v5057 = vsel %vm1979, %v5054, %v5056
      %v5058 = vrot.slane %v4665, 5
      %v5059 = vsel %vm1979, %v5056, %v5058
      %v5060 = vrot.slane %v4666, 5
      %v5061 = vsel %vm1979, %v5058, %v5060
      %v5062 = vrot.slane %v4667, 5
      %v5063 = vsel %vm1979, %v5060, %v5062
      %v5064 = vrot.slane %v4668, 5
      %v5065 = vsel %vm1979, %v5062, %v5064
      %v5066 = vrot.slane %v4669, 5
      %v5067 = vsel %vm1979, %v5064, %v5066
      %v5068 = vrot.slane %v4670, 5
      %v5069 = vsel %vm1979, %v5066, %v5068
      %v5070 = vrot.slane %v4671, 5
      %v5071 = vsel %vm1979, %v5068, %v5070
      %v5072 = vrot.slane %v4672, 5
      %v5073 = vsel %vm1979, %v5070, %v5072
      %v5074 = vrot.slane %v4673, 5
      %v5075 = vsel %vm1979, %v5072, %v5074
      %v5076 = vrot.slane %v4674, 5
      %v5077 = vsel %vm1979, %v5074, %v5076
      %v5078 = vrot.slane %v4675, 5
      %v5079 = vsel %vm1979, %v5076, %v5078
      %v5080 = vrot.slane %v4676, 5
      %v5081 = vsel %vm1979, %v5078, %v5080
      %v5082 = vrot.slane %v4677, 5
      %v5083 = vsel %vm1979, %v5080, %v5082
      %v5084 = vrot.slane %v4678, 5
      %v5085 = vsel %vm1979, %v5082, %v5084
      %v5086 = vrot.slane %v4679, 5
      %v5087 = vsel %vm1979, %v5084, %v5086
      %v5088 = vrot.slane %v4680, 5
      %v5089 = vsel %vm1979, %v5086, %v5088
      %v5090 = vrot.slane %v4681, 5
      %v5091 = vsel %vm1979, %v5088, %v5090
      %v5092 = vrot.slane %v4682, 5
      %v5093 = vsel %vm1979, %v5090, %v5092
      %v5094 = vrot.slane %v4683, 5
      %v5095 = vsel %vm1979, %v5092, %v5094
      %v5096 = vrot.slane %v4684, 5
      %v5097 = vsel %vm1979, %v5094, %v5096
      %v5098 = vrot.slane %v4685, 5
      %v5099 = vsel %vm1979, %v5096, %v5098
      %v5100 = vrot.slane %v4686, 5
      %v5101 = vsel %vm1979, %v5098, %v5100
      %v5102 = vrot.slane %v4687, 5
      %v5103 = vsel %vm1979, %v5100, %v5102
      %v5104 = vrot.slane %v4688, 5
      %v5105 = vsel %vm1979, %v5102, %v5104
      %v5106 = vrot.slane %v4689, 5
      %v5107 = vsel %vm1979, %v5104, %v5106
      %v5108 = vrot.slane %v4690, 5
      %v5109 = vsel %vm1979, %v5106, %v5108
      %v5110 = vrot.slane %v5046, 5
      %v5111 = vsel %vm1979, %v5108, %v5110
      %5112 = vrot.lane.b32.xlu0 %v5047, 8
      %v5113 = vpop.permute.xlu0 %5112
      %5114 = vrot.lane.b32.xlu0 %v5049, 8
      %v5115 = vpop.permute.xlu0 %5114
      %5116 = vrot.lane.b32.xlu0 %v5051, 8
      %v5117 = vpop.permute.xlu0 %5116
      %5118 = vrot.lane.b32.xlu0 %v5053, 8
      %v5119 = vpop.permute.xlu0 %5118
      %5120 = vrot.lane.b32.xlu0 %v5055, 8
      %v5121 = vpop.permute.xlu0 %5120
      %5122 = vrot.lane.b32.xlu0 %v5057, 8
      %v5123 = vpop.permute.xlu0 %5122
      %5124 = vrot.lane.b32.xlu0 %v5059, 8
      %v5125 = vpop.permute.xlu0 %5124
      %5126 = vrot.lane.b32.xlu0 %v5061, 8
      %v5127 = vpop.permute.xlu0 %5126
      %5128 = vrot.lane.b32.xlu0 %v5063, 8
      %v5129 = vpop.permute.xlu0 %5128
      %5130 = vrot.lane.b32.xlu0 %v5065, 8
      %v5131 = vpop.permute.xlu0 %5130
      %5132 = vrot.lane.b32.xlu0 %v5067, 8
      %v5133 = vpop.permute.xlu0 %5132
      %5134 = vrot.lane.b32.xlu0 %v5069, 8
      %v5135 = vpop.permute.xlu0 %5134
      %5136 = vrot.lane.b32.xlu0 %v5071, 8
      %v5137 = vpop.permute.xlu0 %5136
      %5138 = vrot.lane.b32.xlu0 %v5073, 8
      %v5139 = vpop.permute.xlu0 %5138
      %5140 = vrot.lane.b32.xlu0 %v5075, 8
      %v5141 = vpop.permute.xlu0 %5140
      %5142 = vrot.lane.b32.xlu0 %v5077, 8
      %v5143 = vpop.permute.xlu0 %5142
      %5144 = vrot.lane.b32.xlu0 %v5079, 8
      %v5145 = vpop.permute.xlu0 %5144
      %5146 = vrot.lane.b32.xlu0 %v5081, 8
      %v5147 = vpop.permute.xlu0 %5146
      %5148 = vrot.lane.b32.xlu0 %v5083, 8
      %v5149 = vpop.permute.xlu0 %5148
      %5150 = vrot.lane.b32.xlu0 %v5085, 8
      %v5151 = vpop.permute.xlu0 %5150
      %5152 = vrot.lane.b32.xlu0 %v5087, 8
      %v5153 = vpop.permute.xlu0 %5152
      %5154 = vrot.lane.b32.xlu0 %v5089, 8
      %v5155 = vpop.permute.xlu0 %5154
      %5156 = vrot.lane.b32.xlu0 %v5091, 8
      %v5157 = vpop.permute.xlu0 %5156
      %5158 = vrot.lane.b32.xlu0 %v5093, 8
      %v5159 = vpop.permute.xlu0 %5158
      %5160 = vrot.lane.b32.xlu0 %v5095, 8
      %v5161 = vpop.permute.xlu0 %5160
      %5162 = vrot.lane.b32.xlu0 %v5097, 8
      %v5163 = vpop.permute.xlu0 %5162
      %5164 = vrot.lane.b32.xlu0 %v5099, 8
      %v5165 = vpop.permute.xlu0 %5164
      %5166 = vrot.lane.b32.xlu0 %v5101, 8
      %v5167 = vpop.permute.xlu0 %5166
      %5168 = vrot.lane.b32.xlu0 %v5103, 8
      %v5169 = vpop.permute.xlu0 %5168
      %5170 = vrot.lane.b32.xlu0 %v5105, 8
      %v5171 = vpop.permute.xlu0 %5170
      %5172 = vrot.lane.b32.xlu0 %v5107, 8
      %v5173 = vpop.permute.xlu0 %5172
      %5174 = vrot.lane.b32.xlu0 %v5109, 8
      %v5175 = vpop.permute.xlu0 %5174
      %5176 = vrot.lane.b32.xlu0 %v5111, 8
      %v5177 = vpop.permute.xlu0 %5176
      %v5183 = vunpack.c.l.b16 %v4484
      %v5184 = vunpack.c.l.b16 %v4485
      %v5185 = vunpack.c.l.b16 %v4486
      %v5186 = vunpack.c.l.b16 %v4487
      %v5187 = vunpack.c.l.b16 %v4488
      %v5188 = vpack.c.b16 %v4566, %v5183
      %v5189 = vpack.c.b16 %v5184, %v4625
      %v5190 = vpack.c.b16 %v5186, %v5185
      %v5191 = vpack.c.b16 %v5187, %v5187
      %5192 = vrot.lane.b32.xlu0 %v5188, 12
      %v5193 = vpop.permute.xlu0 %5192
      %5194 = vrot.lane.b32.xlu0 %v4629, 12
      %v5195 = vpop.permute.xlu0 %5194
      %5196 = vrot.lane.b32.xlu0 %v4630, 12
      %v5197 = vpop.permute.xlu0 %5196
      %5198 = vrot.lane.b32.xlu0 %v4631, 12
      %v5199 = vpop.permute.xlu0 %5198
      %5200 = vrot.lane.b32.xlu0 %v4632, 12
      %v5201 = vpop.permute.xlu0 %5200
      %5202 = vrot.lane.b32.xlu0 %v4633, 12
      %v5203 = vpop.permute.xlu0 %5202
      %5204 = vrot.lane.b32.xlu0 %v4634, 12
      %v5205 = vpop.permute.xlu0 %5204
      %5206 = vrot.lane.b32.xlu0 %v4635, 12
      %v5207 = vpop.permute.xlu0 %5206
      %5208 = vrot.lane.b32.xlu0 %v4636, 12
      %v5209 = vpop.permute.xlu0 %5208
      %5210 = vrot.lane.b32.xlu0 %v4637, 12
      %v5211 = vpop.permute.xlu0 %5210
      %5212 = vrot.lane.b32.xlu0 %v4638, 12
      %v5213 = vpop.permute.xlu0 %5212
      %5214 = vrot.lane.b32.xlu0 %v4639, 12
      %v5215 = vpop.permute.xlu0 %5214
      %5216 = vrot.lane.b32.xlu0 %v4640, 12
      %v5217 = vpop.permute.xlu0 %5216
      %5218 = vrot.lane.b32.xlu0 %v4641, 12
      %v5219 = vpop.permute.xlu0 %5218
      %5220 = vrot.lane.b32.xlu0 %v4642, 12
      %v5221 = vpop.permute.xlu0 %5220
      %5222 = vrot.lane.b32.xlu0 %v4643, 12
      %v5223 = vpop.permute.xlu0 %5222
      %5224 = vrot.lane.b32.xlu0 %v4644, 12
      %v5225 = vpop.permute.xlu0 %5224
      %5226 = vrot.lane.b32.xlu0 %v4645, 12
      %v5227 = vpop.permute.xlu0 %5226
      %5228 = vrot.lane.b32.xlu0 %v4646, 12
      %v5229 = vpop.permute.xlu0 %5228
      %5230 = vrot.lane.b32.xlu0 %v4647, 12
      %v5231 = vpop.permute.xlu0 %5230
      %5232 = vrot.lane.b32.xlu0 %v4648, 12
      %v5233 = vpop.permute.xlu0 %5232
      %5234 = vrot.lane.b32.xlu0 %v4649, 12
      %v5235 = vpop.permute.xlu0 %5234
      %5236 = vrot.lane.b32.xlu0 %v4650, 12
      %v5237 = vpop.permute.xlu0 %5236
      %5238 = vrot.lane.b32.xlu0 %v4651, 12
      %v5239 = vpop.permute.xlu0 %5238
      %5240 = vrot.lane.b32.xlu0 %v4652, 12
      %v5241 = vpop.permute.xlu0 %5240
      %5242 = vrot.lane.b32.xlu0 %v4653, 12
      %v5243 = vpop.permute.xlu0 %5242
      %5244 = vrot.lane.b32.xlu0 %v4654, 12
      %v5245 = vpop.permute.xlu0 %5244
      %5246 = vrot.lane.b32.xlu0 %v4655, 12
      %v5247 = vpop.permute.xlu0 %5246
      %5248 = vrot.lane.b32.xlu0 %v4656, 12
      %v5249 = vpop.permute.xlu0 %5248
      %5250 = vrot.lane.b32.xlu0 %v4657, 12
      %v5251 = vpop.permute.xlu0 %5250
      %5252 = vrot.lane.b32.xlu0 %v5189, 12
      %v5253 = vpop.permute.xlu0 %5252
      %5254 = vrot.lane.b32.xlu0 %v5190, 12
      %v5255 = vpop.permute.xlu0 %5254
      %5256 = vrot.lane.b32.xlu0 %v5191, 12
      %v5257 = vpop.permute.xlu0 %5256
      %v5258 = vpack.c.b16 %v5185, %v5184
      %v5259 = vpack.c.b16 %v5187, %v5186
      %v5261 = vshrl.u32 %v5258, 16
      %v5263 = vrot.slane %v5261, 4
      %v5264 = vshll.u32 %v5258, 16
      %v5266 = vrot.slane %v5264, 5
      %v5267 = vor.u32 %v5263, %v5266
      %v5268 = vsel %vm1622, %v4976, %v5267
      %v5270 = vshrl.u32 %v5259, 16
      %v5272 = vrot.slane %v5270, 4
      %v5273 = vshll.u32 %v5259, 16
      %v5275 = vrot.slane %v5273, 5
      %v5276 = vor.u32 %v5272, %v5275
      %v5277 = vsel %vm1622, %v5267, %v5276
      %5278 = vrot.lane.b32.xlu0 %v4715, 16
      %v5279 = vpop.permute.xlu0 %5278
      %5280 = vrot.lane.b32.xlu0 %v4725, 16
      %v5281 = vpop.permute.xlu0 %5280
      %5282 = vrot.lane.b32.xlu0 %v4734, 16
      %v5283 = vpop.permute.xlu0 %5282
      %5284 = vrot.lane.b32.xlu0 %v4743, 16
      %v5285 = vpop.permute.xlu0 %5284
      %5286 = vrot.lane.b32.xlu0 %v4752, 16
      %v5287 = vpop.permute.xlu0 %5286
      %5288 = vrot.lane.b32.xlu0 %v4761, 16
      %v5289 = vpop.permute.xlu0 %5288
      %5290 = vrot.lane.b32.xlu0 %v4770, 16
      %v5291 = vpop.permute.xlu0 %5290
      %5292 = vrot.lane.b32.xlu0 %v4779, 16
      %v5293 = vpop.permute.xlu0 %5292
      %5294 = vrot.lane.b32.xlu0 %v4788, 16
      %v5295 = vpop.permute.xlu0 %5294
      %5296 = vrot.lane.b32.xlu0 %v4797, 16
      %v5297 = vpop.permute.xlu0 %5296
      %5298 = vrot.lane.b32.xlu0 %v4806, 16
      %v5299 = vpop.permute.xlu0 %5298
      %5300 = vrot.lane.b32.xlu0 %v4815, 16
      %v5301 = vpop.permute.xlu0 %5300
      %5302 = vrot.lane.b32.xlu0 %v4824, 16
      %v5303 = vpop.permute.xlu0 %5302
      %5304 = vrot.lane.b32.xlu0 %v4833, 16
      %v5305 = vpop.permute.xlu0 %5304
      %5306 = vrot.lane.b32.xlu0 %v4842, 16
      %v5307 = vpop.permute.xlu0 %5306
      %5308 = vrot.lane.b32.xlu0 %v4851, 16
      %v5309 = vpop.permute.xlu0 %5308
      %5310 = vrot.lane.b32.xlu0 %v4860, 16
      %v5311 = vpop.permute.xlu0 %5310
      %5312 = vrot.lane.b32.xlu0 %v4869, 16
      %v5313 = vpop.permute.xlu0 %5312
      %5314 = vrot.lane.b32.xlu0 %v4878, 16
      %v5315 = vpop.permute.xlu0 %5314
      %5316 = vrot.lane.b32.xlu0 %v4887, 16
      %v5317 = vpop.permute.xlu0 %5316
      %5318 = vrot.lane.b32.xlu0 %v4896, 16
      %v5319 = vpop.permute.xlu0 %5318
      %5320 = vrot.lane.b32.xlu0 %v4905, 16
      %v5321 = vpop.permute.xlu0 %5320
      %5322 = vrot.lane.b32.xlu0 %v4914, 16
      %v5323 = vpop.permute.xlu0 %5322
      %5324 = vrot.lane.b32.xlu0 %v4923, 16
      %v5325 = vpop.permute.xlu0 %5324
      %5326 = vrot.lane.b32.xlu0 %v4932, 16
      %v5327 = vpop.permute.xlu0 %5326
      %5328 = vrot.lane.b32.xlu0 %v4941, 16
      %v5329 = vpop.permute.xlu0 %5328
      %5330 = vrot.lane.b32.xlu0 %v4950, 16
      %v5331 = vpop.permute.xlu0 %5330
      %5332 = vrot.lane.b32.xlu0 %v4959, 16
      %v5333 = vpop.permute.xlu0 %5332
      %5334 = vrot.lane.b32.xlu0 %v4968, 16
      %v5335 = vpop.permute.xlu0 %5334
      %5336 = vrot.lane.b32.xlu0 %v4977, 16
      %v5337 = vpop.permute.xlu0 %5336
      %5338 = vrot.lane.b32.xlu0 %v5268, 16
      %v5339 = vpop.permute.xlu0 %5338
      %5340 = vrot.lane.b32.xlu0 %v5277, 16
      %v5341 = vpop.permute.xlu0 %5340
      %5342 = vrot.lane.b32.xlu0 %v5276, 16
      %v5343 = vpop.permute.xlu0 %5342
      %v5345 = vunpack.c.l.b16 %v4489
      %v5346 = vpack.c.b16 %v5345, %v5345
      %v5347 = vrot.slane %v5258, 5
      %v5348 = vsel %vm1979, %v5108, %v5347
      %v5349 = vrot.slane %v5259, 5
      %v5350 = vsel %vm1979, %v5347, %v5349
      %v5351 = vrot.slane %v5346, 5
      %v5352 = vsel %vm1979, %v5349, %v5351
      %5353 = vrot.lane.b32.xlu0 %v5050, 20
      %v5354 = vpop.permute.xlu0 %5353
      %5355 = vrot.lane.b32.xlu0 %v5053, 20
      %v5356 = vpop.permute.xlu0 %5355
      %5357 = vrot.lane.b32.xlu0 %v5055, 20
      %v5358 = vpop.permute.xlu0 %5357
      %5359 = vrot.lane.b32.xlu0 %v5057, 20
      %v5360 = vpop.permute.xlu0 %5359
      %5361 = vrot.lane.b32.xlu0 %v5059, 20
      %v5362 = vpop.permute.xlu0 %5361
      %5363 = vrot.lane.b32.xlu0 %v5061, 20
      %v5364 = vpop.permute.xlu0 %5363
      %5365 = vrot.lane.b32.xlu0 %v5063, 20
      %v5366 = vpop.permute.xlu0 %5365
      %5367 = vrot.lane.b32.xlu0 %v5065, 20
      %v5368 = vpop.permute.xlu0 %5367
      %5369 = vrot.lane.b32.xlu0 %v5067, 20
      %v5370 = vpop.permute.xlu0 %5369
      %5371 = vrot.lane.b32.xlu0 %v5069, 20
      %v5372 = vpop.permute.xlu0 %5371
      %5373 = vrot.lane.b32.xlu0 %v5071, 20
      %v5374 = vpop.permute.xlu0 %5373
      %5375 = vrot.lane.b32.xlu0 %v5073, 20
      %v5376 = vpop.permute.xlu0 %5375
      %5377 = vrot.lane.b32.xlu0 %v5075, 20
      %v5378 = vpop.permute.xlu0 %5377
      %5379 = vrot.lane.b32.xlu0 %v5077, 20
      %v5380 = vpop.permute.xlu0 %5379
      %5381 = vrot.lane.b32.xlu0 %v5079, 20
      %v5382 = vpop.permute.xlu0 %5381
      %5383 = vrot.lane.b32.xlu0 %v5081, 20
      %v5384 = vpop.permute.xlu0 %5383
      %5385 = vrot.lane.b32.xlu0 %v5083, 20
      %v5386 = vpop.permute.xlu0 %5385
      %5387 = vrot.lane.b32.xlu0 %v5085, 20
      %v5388 = vpop.permute.xlu0 %5387
      %5389 = vrot.lane.b32.xlu0 %v5087, 20
      %v5390 = vpop.permute.xlu0 %5389
      %5391 = vrot.lane.b32.xlu0 %v5089, 20
      %v5392 = vpop.permute.xlu0 %5391
      %5393 = vrot.lane.b32.xlu0 %v5091, 20
      %v5394 = vpop.permute.xlu0 %5393
      %5395 = vrot.lane.b32.xlu0 %v5093, 20
      %v5396 = vpop.permute.xlu0 %5395
      %5397 = vrot.lane.b32.xlu0 %v5095, 20
      %v5398 = vpop.permute.xlu0 %5397
      %5399 = vrot.lane.b32.xlu0 %v5097, 20
      %v5400 = vpop.permute.xlu0 %5399
      %5401 = vrot.lane.b32.xlu0 %v5099, 20
      %v5402 = vpop.permute.xlu0 %5401
      %5403 = vrot.lane.b32.xlu0 %v5101, 20
      %v5404 = vpop.permute.xlu0 %5403
      %5405 = vrot.lane.b32.xlu0 %v5103, 20
      %v5406 = vpop.permute.xlu0 %5405
      %5407 = vrot.lane.b32.xlu0 %v5105, 20
      %v5408 = vpop.permute.xlu0 %5407
      %5409 = vrot.lane.b32.xlu0 %v5107, 20
      %v5410 = vpop.permute.xlu0 %5409
      %5411 = vrot.lane.b32.xlu0 %v5109, 20
      %v5412 = vpop.permute.xlu0 %5411
      %5413 = vrot.lane.b32.xlu0 %v5348, 20
      %v5414 = vpop.permute.xlu0 %5413
      %5415 = vrot.lane.b32.xlu0 %v5350, 20
      %v5416 = vpop.permute.xlu0 %5415
      %5417 = vrot.lane.b32.xlu0 %v5352, 20
      %v5418 = vpop.permute.xlu0 %5417
      %v5424 = vunpack.c.l.b16 %v4490
      %v5425 = vunpack.c.l.b16 %v4491
      %v5426 = vunpack.c.l.b16 %v4492
      %v5427 = vunpack.c.l.b16 %v4493
      %v5428 = vunpack.c.l.b16 %v4494
      %v5429 = vpack.c.b16 %v4570, %v5424
      %v5430 = vpack.c.b16 %v5425, %v5187
      %v5431 = vpack.c.b16 %v5427, %v5426
      %v5432 = vpack.c.b16 %v5428, %v5428
      %5433 = vrot.lane.b32.xlu0 %v5429, 24
      %v5434 = vpop.permute.xlu0 %5433
      %5435 = vrot.lane.b32.xlu0 %v4631, 24
      %v5436 = vpop.permute.xlu0 %5435
      %5437 = vrot.lane.b32.xlu0 %v4632, 24
      %v5438 = vpop.permute.xlu0 %5437
      %5439 = vrot.lane.b32.xlu0 %v4633, 24
      %v5440 = vpop.permute.xlu0 %5439
      %5441 = vrot.lane.b32.xlu0 %v4634, 24
      %v5442 = vpop.permute.xlu0 %5441
      %5443 = vrot.lane.b32.xlu0 %v4635, 24
      %v5444 = vpop.permute.xlu0 %5443
      %5445 = vrot.lane.b32.xlu0 %v4636, 24
      %v5446 = vpop.permute.xlu0 %5445
      %5447 = vrot.lane.b32.xlu0 %v4637, 24
      %v5448 = vpop.permute.xlu0 %5447
      %5449 = vrot.lane.b32.xlu0 %v4638, 24
      %v5450 = vpop.permute.xlu0 %5449
      %5451 = vrot.lane.b32.xlu0 %v4639, 24
      %v5452 = vpop.permute.xlu0 %5451
      %5453 = vrot.lane.b32.xlu0 %v4640, 24
      %v5454 = vpop.permute.xlu0 %5453
      %5455 = vrot.lane.b32.xlu0 %v4641, 24
      %v5456 = vpop.permute.xlu0 %5455
      %5457 = vrot.lane.b32.xlu0 %v4642, 24
      %v5458 = vpop.permute.xlu0 %5457
      %5459 = vrot.lane.b32.xlu0 %v4643, 24
      %v5460 = vpop.permute.xlu0 %5459
      %5461 = vrot.lane.b32.xlu0 %v4644, 24
      %v5462 = vpop.permute.xlu0 %5461
      %5463 = vrot.lane.b32.xlu0 %v4645, 24
      %v5464 = vpop.permute.xlu0 %5463
      %5465 = vrot.lane.b32.xlu0 %v4646, 24
      %v5466 = vpop.permute.xlu0 %5465
      %5467 = vrot.lane.b32.xlu0 %v4647, 24
      %v5468 = vpop.permute.xlu0 %5467
      %5469 = vrot.lane.b32.xlu0 %v4648, 24
      %v5470 = vpop.permute.xlu0 %5469
      %5471 = vrot.lane.b32.xlu0 %v4649, 24
      %v5472 = vpop.permute.xlu0 %5471
      %5473 = vrot.lane.b32.xlu0 %v4650, 24
      %v5474 = vpop.permute.xlu0 %5473
      %5475 = vrot.lane.b32.xlu0 %v4651, 24
      %v5476 = vpop.permute.xlu0 %5475
      %5477 = vrot.lane.b32.xlu0 %v4652, 24
      %v5478 = vpop.permute.xlu0 %5477
      %5479 = vrot.lane.b32.xlu0 %v4653, 24
      %v5480 = vpop.permute.xlu0 %5479
      %5481 = vrot.lane.b32.xlu0 %v4654, 24
      %v5482 = vpop.permute.xlu0 %5481
      %5483 = vrot.lane.b32.xlu0 %v4655, 24
      %v5484 = vpop.permute.xlu0 %5483
      %5485 = vrot.lane.b32.xlu0 %v4656, 24
      %v5486 = vpop.permute.xlu0 %5485
      %5487 = vrot.lane.b32.xlu0 %v4657, 24
      %v5488 = vpop.permute.xlu0 %5487
      %5489 = vrot.lane.b32.xlu0 %v5189, 24
      %v5490 = vpop.permute.xlu0 %5489
      %5491 = vrot.lane.b32.xlu0 %v5190, 24
      %v5492 = vpop.permute.xlu0 %5491
      %5493 = vrot.lane.b32.xlu0 %v5430, 24
      %v5494 = vpop.permute.xlu0 %5493
      %5495 = vrot.lane.b32.xlu0 %v5431, 24
      %v5496 = vpop.permute.xlu0 %5495
      %5497 = vrot.lane.b32.xlu0 %v5432, 24
      %v5498 = vpop.permute.xlu0 %5497
      %v5499 = vpack.c.b16 %v5426, %v5425
      %v5500 = vpack.c.b16 %v5428, %v5427
      %v5502 = vshrl.u32 %v5499, 16
      %v5504 = vrot.slane %v5502, 4
      %v5505 = vshll.u32 %v5499, 16
      %v5507 = vrot.slane %v5505, 5
      %v5508 = vor.u32 %v5504, %v5507
      %v5509 = vsel %vm1622, %v5276, %v5508
      %v5511 = vshrl.u32 %v5500, 16
      %v5513 = vrot.slane %v5511, 4
      %v5514 = vshll.u32 %v5500, 16
      %v5516 = vrot.slane %v5514, 5
      %v5517 = vor.u32 %v5513, %v5516
      %v5518 = vsel %vm1622, %v5508, %v5517
      %5519 = vrot.lane.b32.xlu0 %v4733, 28
      %v5520 = vpop.permute.xlu0 %5519
      %5521 = vrot.lane.b32.xlu0 %v4743, 28
      %v5522 = vpop.permute.xlu0 %5521
      %5523 = vrot.lane.b32.xlu0 %v4752, 28
      %v5524 = vpop.permute.xlu0 %5523
      %5525 = vrot.lane.b32.xlu0 %v4761, 28
      %v5526 = vpop.permute.xlu0 %5525
      %5527 = vrot.lane.b32.xlu0 %v4770, 28
      %v5528 = vpop.permute.xlu0 %5527
      %5529 = vrot.lane.b32.xlu0 %v4779, 28
      %v5530 = vpop.permute.xlu0 %5529
      %5531 = vrot.lane.b32.xlu0 %v4788, 28
      %v5532 = vpop.permute.xlu0 %5531
      %5533 = vrot.lane.b32.xlu0 %v4797, 28
      %v5534 = vpop.permute.xlu0 %5533
      %5535 = vrot.lane.b32.xlu0 %v4806, 28
      %v5536 = vpop.permute.xlu0 %5535
      %5537 = vrot.lane.b32.xlu0 %v4815, 28
      %v5538 = vpop.permute.xlu0 %5537
      %5539 = vrot.lane.b32.xlu0 %v4824, 28
      %v5540 = vpop.permute.xlu0 %5539
      %5541 = vrot.lane.b32.xlu0 %v4833, 28
      %v5542 = vpop.permute.xlu0 %5541
      %5543 = vrot.lane.b32.xlu0 %v4842, 28
      %v5544 = vpop.permute.xlu0 %5543
      %5545 = vrot.lane.b32.xlu0 %v4851, 28
      %v5546 = vpop.permute.xlu0 %5545
      %5547 = vrot.lane.b32.xlu0 %v4860, 28
      %v5548 = vpop.permute.xlu0 %5547
      %5549 = vrot.lane.b32.xlu0 %v4869, 28
      %v5550 = vpop.permute.xlu0 %5549
      %5551 = vrot.lane.b32.xlu0 %v4878, 28
      %v5552 = vpop.permute.xlu0 %5551
      %5553 = vrot.lane.b32.xlu0 %v4887, 28
      %v5554 = vpop.permute.xlu0 %5553
      %5555 = vrot.lane.b32.xlu0 %v4896, 28
      %v5556 = vpop.permute.xlu0 %5555
      %5557 = vrot.lane.b32.xlu0 %v4905, 28
      %v5558 = vpop.permute.xlu0 %5557
      %5559 = vrot.lane.b32.xlu0 %v4914, 28
      %v5560 = vpop.permute.xlu0 %5559
      %5561 = vrot.lane.b32.xlu0 %v4923, 28
      %v5562 = vpop.permute.xlu0 %5561
      %5563 = vrot.lane.b32.xlu0 %v4932, 28
      %v5564 = vpop.permute.xlu0 %5563
      %5565 = vrot.lane.b32.xlu0 %v4941, 28
      %v5566 = vpop.permute.xlu0 %5565
      %5567 = vrot.lane.b32.xlu0 %v4950, 28
      %v5568 = vpop.permute.xlu0 %5567
      %5569 = vrot.lane.b32.xlu0 %v4959, 28
      %v5570 = vpop.permute.xlu0 %5569
      %5571 = vrot.lane.b32.xlu0 %v4968, 28
      %v5572 = vpop.permute.xlu0 %5571
      %5573 = vrot.lane.b32.xlu0 %v4977, 28
      %v5574 = vpop.permute.xlu0 %5573
      %5575 = vrot.lane.b32.xlu0 %v5268, 28
      %v5576 = vpop.permute.xlu0 %5575
      %5577 = vrot.lane.b32.xlu0 %v5277, 28
      %v5578 = vpop.permute.xlu0 %5577
      %5579 = vrot.lane.b32.xlu0 %v5509, 28
      %v5580 = vpop.permute.xlu0 %5579
      %5581 = vrot.lane.b32.xlu0 %v5518, 28
      %v5582 = vpop.permute.xlu0 %5581
      %5583 = vrot.lane.b32.xlu0 %v5517, 28
      %v5584 = vpop.permute.xlu0 %5583
      %v5586 = vunpack.c.l.b16 %v4495
      %v5587 = vpack.c.b16 %v5586, %v5586
      %v5588 = vrot.slane %v5499, 5
      %v5589 = vsel %vm1979, %v5349, %v5588
      %v5590 = vrot.slane %v5500, 5
      %v5591 = vsel %vm1979, %v5588, %v5590
      %v5592 = vrot.slane %v5587, 5
      %v5593 = vsel %vm1979, %v5590, %v5592
      %5594 = vrot.lane.b32.xlu0 %v5054, 32
      %v5595 = vpop.permute.xlu0 %5594
      %5596 = vrot.lane.b32.xlu0 %v5057, 32
      %v5597 = vpop.permute.xlu0 %5596
      %5598 = vrot.lane.b32.xlu0 %v5059, 32
      %v5599 = vpop.permute.xlu0 %5598
      %5600 = vrot.lane.b32.xlu0 %v5061, 32
      %v5601 = vpop.permute.xlu0 %5600
      %5602 = vrot.lane.b32.xlu0 %v5063, 32
      %v5603 = vpop.permute.xlu0 %5602
      %5604 = vrot.lane.b32.xlu0 %v5065, 32
      %v5605 = vpop.permute.xlu0 %5604
      %5606 = vrot.lane.b32.xlu0 %v5067, 32
      %v5607 = vpop.permute.xlu0 %5606
      %5608 = vrot.lane.b32.xlu0 %v5069, 32
      %v5609 = vpop.permute.xlu0 %5608
      %5610 = vrot.lane.b32.xlu0 %v5071, 32
      %v5611 = vpop.permute.xlu0 %5610
      %5612 = vrot.lane.b32.xlu0 %v5073, 32
      %v5613 = vpop.permute.xlu0 %5612
      %5614 = vrot.lane.b32.xlu0 %v5075, 32
      %v5615 = vpop.permute.xlu0 %5614
      %5616 = vrot.lane.b32.xlu0 %v5077, 32
      %v5617 = vpop.permute.xlu0 %5616
      %5618 = vrot.lane.b32.xlu0 %v5079, 32
      %v5619 = vpop.permute.xlu0 %5618
      %5620 = vrot.lane.b32.xlu0 %v5081, 32
      %v5621 = vpop.permute.xlu0 %5620
      %5622 = vrot.lane.b32.xlu0 %v5083, 32
      %v5623 = vpop.permute.xlu0 %5622
      %5624 = vrot.lane.b32.xlu0 %v5085, 32
      %v5625 = vpop.permute.xlu0 %5624
      %5626 = vrot.lane.b32.xlu0 %v5087, 32
      %v5627 = vpop.permute.xlu0 %5626
      %5628 = vrot.lane.b32.xlu0 %v5089, 32
      %v5629 = vpop.permute.xlu0 %5628
      %5630 = vrot.lane.b32.xlu0 %v5091, 32
      %v5631 = vpop.permute.xlu0 %5630
      %5632 = vrot.lane.b32.xlu0 %v5093, 32
      %v5633 = vpop.permute.xlu0 %5632
      %5634 = vrot.lane.b32.xlu0 %v5095, 32
      %v5635 = vpop.permute.xlu0 %5634
      %5636 = vrot.lane.b32.xlu0 %v5097, 32
      %v5637 = vpop.permute.xlu0 %5636
      %5638 = vrot.lane.b32.xlu0 %v5099, 32
      %v5639 = vpop.permute.xlu0 %5638
      %5640 = vrot.lane.b32.xlu0 %v5101, 32
      %v5641 = vpop.permute.xlu0 %5640
      %5642 = vrot.lane.b32.xlu0 %v5103, 32
      %v5643 = vpop.permute.xlu0 %5642
      %5644 = vrot.lane.b32.xlu0 %v5105, 32
      %v5645 = vpop.permute.xlu0 %5644
      %5646 = vrot.lane.b32.xlu0 %v5107, 32
      %v5647 = vpop.permute.xlu0 %5646
      %5648 = vrot.lane.b32.xlu0 %v5109, 32
      %v5649 = vpop.permute.xlu0 %5648
      %5650 = vrot.lane.b32.xlu0 %v5348, 32
      %v5651 = vpop.permute.xlu0 %5650
      %5652 = vrot.lane.b32.xlu0 %v5350, 32
      %v5653 = vpop.permute.xlu0 %5652
      %5654 = vrot.lane.b32.xlu0 %v5589, 32
      %v5655 = vpop.permute.xlu0 %5654
      %5656 = vrot.lane.b32.xlu0 %v5591, 32
      %v5657 = vpop.permute.xlu0 %5656
      %5658 = vrot.lane.b32.xlu0 %v5593, 32
      %v5659 = vpop.permute.xlu0 %5658
      %v5662 = vsel %vm2593, %v4626, %v4979
      %v5665 = vsel %vm2593, %v4627, %v4981
      %v5668 = vsel %vm2593, %v4628, %v4983
      %v5671 = vsel %vm2593, %v4629, %v4985
      %v5674 = vsel %vm2593, %v4630, %v4987
      %v5677 = vsel %vm2593, %v4631, %v4989
      %v5680 = vsel %vm2593, %v4632, %v4991
      %v5683 = vsel %vm2593, %v4633, %v4993
      %v5686 = vsel %vm2593, %v4634, %v4995
      %v5689 = vsel %vm2593, %v4635, %v4997
      %v5692 = vsel %vm2593, %v4636, %v4999
      %v5695 = vsel %vm2593, %v4637, %v5001
      %v5698 = vsel %vm2593, %v4638, %v5003
      %v5701 = vsel %vm2593, %v4639, %v5005
      %v5704 = vsel %vm2593, %v4640, %v5007
      %v5707 = vsel %vm2593, %v4641, %v5009
      %v5710 = vsel %vm2593, %v4642, %v5011
      %v5713 = vsel %vm2593, %v4643, %v5013
      %v5716 = vsel %vm2593, %v4644, %v5015
      %v5719 = vsel %vm2593, %v4645, %v5017
      %v5722 = vsel %vm2593, %v4646, %v5019
      %v5725 = vsel %vm2593, %v4647, %v5021
      %v5728 = vsel %vm2593, %v4648, %v5023
      %v5731 = vsel %vm2593, %v4649, %v5025
      %v5734 = vsel %vm2593, %v4650, %v5027
      %v5737 = vsel %vm2593, %v4651, %v5029
      %v5740 = vsel %vm2593, %v4652, %v5031
      %v5743 = vsel %vm2593, %v4653, %v5033
      %v5746 = vsel %vm2593, %v4654, %v5035
      %v5749 = vsel %vm2593, %v4655, %v5037
      %v5752 = vsel %vm2593, %v4656, %v5039
      %v5755 = vsel %vm2593, %v4657, %v5041
      %v5758 = vsel %vm2593, %v4658, %v5043
      %v5760 = vsel %vm2693, %v5662, %v5113
      %v5762 = vsel %vm2693, %v5665, %v5115
      %v5764 = vsel %vm2693, %v5668, %v5117
      %v5766 = vsel %vm2693, %v5671, %v5119
      %v5768 = vsel %vm2693, %v5674, %v5121
      %v5770 = vsel %vm2693, %v5677, %v5123
      %v5772 = vsel %vm2693, %v5680, %v5125
      %v5774 = vsel %vm2693, %v5683, %v5127
      %v5776 = vsel %vm2693, %v5686, %v5129
      %v5778 = vsel %vm2693, %v5689, %v5131
      %v5780 = vsel %vm2693, %v5692, %v5133
      %v5782 = vsel %vm2693, %v5695, %v5135
      %v5784 = vsel %vm2693, %v5698, %v5137
      %v5786 = vsel %vm2693, %v5701, %v5139
      %v5788 = vsel %vm2693, %v5704, %v5141
      %v5790 = vsel %vm2693, %v5707, %v5143
      %v5792 = vsel %vm2693, %v5710, %v5145
      %v5794 = vsel %vm2693, %v5713, %v5147
      %v5796 = vsel %vm2693, %v5716, %v5149
      %v5798 = vsel %vm2693, %v5719, %v5151
      %v5800 = vsel %vm2693, %v5722, %v5153
      %v5802 = vsel %vm2693, %v5725, %v5155
      %v5804 = vsel %vm2693, %v5728, %v5157
      %v5806 = vsel %vm2693, %v5731, %v5159
      %v5808 = vsel %vm2693, %v5734, %v5161
      %v5810 = vsel %vm2693, %v5737, %v5163
      %v5812 = vsel %vm2693, %v5740, %v5165
      %v5814 = vsel %vm2693, %v5743, %v5167
      %v5816 = vsel %vm2693, %v5746, %v5169
      %v5818 = vsel %vm2693, %v5749, %v5171
      %v5820 = vsel %vm2693, %v5752, %v5173
      %v5822 = vsel %vm2693, %v5755, %v5175
      %v5824 = vsel %vm2693, %v5758, %v5177
      %v5826 = vsel %vm2760, %v5760, %v5193
      %v5828 = vsel %vm2760, %v5762, %v5195
      %v5830 = vsel %vm2760, %v5764, %v5197
      %v5832 = vsel %vm2760, %v5766, %v5199
      %v5834 = vsel %vm2760, %v5768, %v5201
      %v5836 = vsel %vm2760, %v5770, %v5203
      %v5838 = vsel %vm2760, %v5772, %v5205
      %v5840 = vsel %vm2760, %v5774, %v5207
      %v5842 = vsel %vm2760, %v5776, %v5209
      %v5844 = vsel %vm2760, %v5778, %v5211
      %v5846 = vsel %vm2760, %v5780, %v5213
      %v5848 = vsel %vm2760, %v5782, %v5215
      %v5850 = vsel %vm2760, %v5784, %v5217
      %v5852 = vsel %vm2760, %v5786, %v5219
      %v5854 = vsel %vm2760, %v5788, %v5221
      %v5856 = vsel %vm2760, %v5790, %v5223
      %v5858 = vsel %vm2760, %v5792, %v5225
      %v5860 = vsel %vm2760, %v5794, %v5227
      %v5862 = vsel %vm2760, %v5796, %v5229
      %v5864 = vsel %vm2760, %v5798, %v5231
      %v5866 = vsel %vm2760, %v5800, %v5233
      %v5868 = vsel %vm2760, %v5802, %v5235
      %v5870 = vsel %vm2760, %v5804, %v5237
      %v5872 = vsel %vm2760, %v5806, %v5239
      %v5874 = vsel %vm2760, %v5808, %v5241
      %v5876 = vsel %vm2760, %v5810, %v5243
      %v5878 = vsel %vm2760, %v5812, %v5245
      %v5880 = vsel %vm2760, %v5814, %v5247
      %v5882 = vsel %vm2760, %v5816, %v5249
      %v5884 = vsel %vm2760, %v5818, %v5251
      %v5886 = vsel %vm2760, %v5820, %v5253
      %v5888 = vsel %vm2760, %v5822, %v5255
      %v5890 = vsel %vm2760, %v5824, %v5257
      %v5892 = vsel %vm2827, %v5826, %v5279
      %v5894 = vsel %vm2827, %v5828, %v5281
      %v5896 = vsel %vm2827, %v5830, %v5283
      %v5898 = vsel %vm2827, %v5832, %v5285
      %v5900 = vsel %vm2827, %v5834, %v5287
      %v5902 = vsel %vm2827, %v5836, %v5289
      %v5904 = vsel %vm2827, %v5838, %v5291
      %v5906 = vsel %vm2827, %v5840, %v5293
      %v5908 = vsel %vm2827, %v5842, %v5295
      %v5910 = vsel %vm2827, %v5844, %v5297
      %v5912 = vsel %vm2827, %v5846, %v5299
      %v5914 = vsel %vm2827, %v5848, %v5301
      %v5916 = vsel %vm2827, %v5850, %v5303
      %v5918 = vsel %vm2827, %v5852, %v5305
      %v5920 = vsel %vm2827, %v5854, %v5307
      %v5922 = vsel %vm2827, %v5856, %v5309
      %v5924 = vsel %vm2827, %v5858, %v5311
      %v5926 = vsel %vm2827, %v5860, %v5313
      %v5928 = vsel %vm2827, %v5862, %v5315
      %v5930 = vsel %vm2827, %v5864, %v5317
      %v5932 = vsel %vm2827, %v5866, %v5319
      %v5934 = vsel %vm2827, %v5868, %v5321
      %v5936 = vsel %vm2827, %v5870, %v5323
      %v5938 = vsel %vm2827, %v5872, %v5325
      %v5940 = vsel %vm2827, %v5874, %v5327
      %v5942 = vsel %vm2827, %v5876, %v5329
      %v5944 = vsel %vm2827, %v5878, %v5331
      %v5946 = vsel %vm2827, %v5880, %v5333
      %v5948 = vsel %vm2827, %v5882, %v5335
      %v5950 = vsel %vm2827, %v5884, %v5337
      %v5952 = vsel %vm2827, %v5886, %v5339
      %v5954 = vsel %vm2827, %v5888, %v5341
      %v5956 = vsel %vm2827, %v5890, %v5343
      %v5958 = vsel %vm2894, %v5892, %v5354
      %v5960 = vsel %vm2894, %v5894, %v5356
      %v5962 = vsel %vm2894, %v5896, %v5358
      %v5964 = vsel %vm2894, %v5898, %v5360
      %v5966 = vsel %vm2894, %v5900, %v5362
      %v5968 = vsel %vm2894, %v5902, %v5364
      %v5970 = vsel %vm2894, %v5904, %v5366
      %v5972 = vsel %vm2894, %v5906, %v5368
      %v5974 = vsel %vm2894, %v5908, %v5370
      %v5976 = vsel %vm2894, %v5910, %v5372
      %v5978 = vsel %vm2894, %v5912, %v5374
      %v5980 = vsel %vm2894, %v5914, %v5376
      %v5982 = vsel %vm2894, %v5916, %v5378
      %v5984 = vsel %vm2894, %v5918, %v5380
      %v5986 = vsel %vm2894, %v5920, %v5382
      %v5988 = vsel %vm2894, %v5922, %v5384
      %v5990 = vsel %vm2894, %v5924, %v5386
      %v5992 = vsel %vm2894, %v5926, %v5388
      %v5994 = vsel %vm2894, %v5928, %v5390
      %v5996 = vsel %vm2894, %v5930, %v5392
      %v5998 = vsel %vm2894, %v5932, %v5394
      %v6000 = vsel %vm2894, %v5934, %v5396
      %v6002 = vsel %vm2894, %v5936, %v5398
      %v6004 = vsel %vm2894, %v5938, %v5400
      %v6006 = vsel %vm2894, %v5940, %v5402
      %v6008 = vsel %vm2894, %v5942, %v5404
      %v6010 = vsel %vm2894, %v5944, %v5406
      %v6012 = vsel %vm2894, %v5946, %v5408
      %v6014 = vsel %vm2894, %v5948, %v5410
      %v6016 = vsel %vm2894, %v5950, %v5412
      %v6018 = vsel %vm2894, %v5952, %v5414
      %v6020 = vsel %vm2894, %v5954, %v5416
      %v6022 = vsel %vm2894, %v5956, %v5418
      %v6024 = vsel %vm2961, %v5958, %v5434
      %v6026 = vsel %vm2961, %v5960, %v5436
      %v6028 = vsel %vm2961, %v5962, %v5438
      %v6030 = vsel %vm2961, %v5964, %v5440
      %v6032 = vsel %vm2961, %v5966, %v5442
      %v6034 = vsel %vm2961, %v5968, %v5444
      %v6036 = vsel %vm2961, %v5970, %v5446
      %v6038 = vsel %vm2961, %v5972, %v5448
      %v6040 = vsel %vm2961, %v5974, %v5450
      %v6042 = vsel %vm2961, %v5976, %v5452
      %v6044 = vsel %vm2961, %v5978, %v5454
      %v6046 = vsel %vm2961, %v5980, %v5456
      %v6048 = vsel %vm2961, %v5982, %v5458
      %v6050 = vsel %vm2961, %v5984, %v5460
      %v6052 = vsel %vm2961, %v5986, %v5462
      %v6054 = vsel %vm2961, %v5988, %v5464
      %v6056 = vsel %vm2961, %v5990, %v5466
      %v6058 = vsel %vm2961, %v5992, %v5468
      %v6060 = vsel %vm2961, %v5994, %v5470
      %v6062 = vsel %vm2961, %v5996, %v5472
      %v6064 = vsel %vm2961, %v5998, %v5474
      %v6066 = vsel %vm2961, %v6000, %v5476
      %v6068 = vsel %vm2961, %v6002, %v5478
      %v6070 = vsel %vm2961, %v6004, %v5480
      %v6072 = vsel %vm2961, %v6006, %v5482
      %v6074 = vsel %vm2961, %v6008, %v5484
      %v6076 = vsel %vm2961, %v6010, %v5486
      %v6078 = vsel %vm2961, %v6012, %v5488
      %v6080 = vsel %vm2961, %v6014, %v5490
      %v6082 = vsel %vm2961, %v6016, %v5492
      %v6084 = vsel %vm2961, %v6018, %v5494
      %v6086 = vsel %vm2961, %v6020, %v5496
      %v6088 = vsel %vm2961, %v6022, %v5498
      %v6090 = vsel %vm3028, %v6024, %v5520
      %v6092 = vsel %vm3028, %v6026, %v5522
      %v6094 = vsel %vm3028, %v6028, %v5524
      %v6096 = vsel %vm3028, %v6030, %v5526
      %v6098 = vsel %vm3028, %v6032, %v5528
      %v6100 = vsel %vm3028, %v6034, %v5530
      %v6102 = vsel %vm3028, %v6036, %v5532
      %v6104 = vsel %vm3028, %v6038, %v5534
      %v6106 = vsel %vm3028, %v6040, %v5536
      %v6108 = vsel %vm3028, %v6042, %v5538
      %v6110 = vsel %vm3028, %v6044, %v5540
      %v6112 = vsel %vm3028, %v6046, %v5542
      %v6114 = vsel %vm3028, %v6048, %v5544
      %v6116 = vsel %vm3028, %v6050, %v5546
      %v6118 = vsel %vm3028, %v6052, %v5548
      %v6120 = vsel %vm3028, %v6054, %v5550
      %v6122 = vsel %vm3028, %v6056, %v5552
      %v6124 = vsel %vm3028, %v6058, %v5554
      %v6126 = vsel %vm3028, %v6060, %v5556
      %v6128 = vsel %vm3028, %v6062, %v5558
      %v6130 = vsel %vm3028, %v6064, %v5560
      %v6132 = vsel %vm3028, %v6066, %v5562
      %v6134 = vsel %vm3028, %v6068, %v5564
      %v6136 = vsel %vm3028, %v6070, %v5566
      %v6138 = vsel %vm3028, %v6072, %v5568
      %v6140 = vsel %vm3028, %v6074, %v5570
      %v6142 = vsel %vm3028, %v6076, %v5572
      %v6144 = vsel %vm3028, %v6078, %v5574
      %v6146 = vsel %vm3028, %v6080, %v5576
      %v6148 = vsel %vm3028, %v6082, %v5578
      %v6150 = vsel %vm3028, %v6084, %v5580
      %v6152 = vsel %vm3028, %v6086, %v5582
      %v6154 = vsel %vm3028, %v6088, %v5584
      %v6156 = vsel %vm3095, %v6090, %v5595
      %v6158 = vsel %vm3095, %v6092, %v5597
      %v6160 = vsel %vm3095, %v6094, %v5599
      %v6162 = vsel %vm3095, %v6096, %v5601
      %v6164 = vsel %vm3095, %v6098, %v5603
      %v6166 = vsel %vm3095, %v6100, %v5605
      %v6168 = vsel %vm3095, %v6102, %v5607
      %v6170 = vsel %vm3095, %v6104, %v5609
      %v6172 = vsel %vm3095, %v6106, %v5611
      %v6174 = vsel %vm3095, %v6108, %v5613
      %v6176 = vsel %vm3095, %v6110, %v5615
      %v6178 = vsel %vm3095, %v6112, %v5617
      %v6180 = vsel %vm3095, %v6114, %v5619
      %v6182 = vsel %vm3095, %v6116, %v5621
      %v6184 = vsel %vm3095, %v6118, %v5623
      %v6186 = vsel %vm3095, %v6120, %v5625
      %v6188 = vsel %vm3095, %v6122, %v5627
      %v6190 = vsel %vm3095, %v6124, %v5629
      %v6192 = vsel %vm3095, %v6126, %v5631
      %v6194 = vsel %vm3095, %v6128, %v5633
      %v6196 = vsel %vm3095, %v6130, %v5635
      %v6198 = vsel %vm3095, %v6132, %v5637
      %v6200 = vsel %vm3095, %v6134, %v5639
      %v6202 = vsel %vm3095, %v6136, %v5641
      %v6204 = vsel %vm3095, %v6138, %v5643
      %v6206 = vsel %vm3095, %v6140, %v5645
      %v6208 = vsel %vm3095, %v6142, %v5647
      %v6210 = vsel %vm3095, %v6144, %v5649
      %v6212 = vsel %vm3095, %v6146, %v5651
      %v6214 = vsel %vm3095, %v6148, %v5653
      %v6216 = vsel %vm3095, %v6150, %v5655
      %v6218 = vsel %vm3095, %v6152, %v5657
      %v6220 = vsel %vm3095, %v6154, %v5659
      %v6221 = vld [vmem:[%s2] sm:$0xf]
      %v6222 = vld [vmem:[%s2 + $0x4] sm:$0xf]
      %v6223 = vld [vmem:[%s2 + $0x8] sm:$0xf]
      %v6224 = vld [vmem:[%s2 + $0xc] sm:$0xf]
      %v6225 = vld [vmem:[%s2 + $0x10] sm:$0x3]
      %v6226 = vshrl.u32 %v6156, 16
      %v6228 = vrot.slane %v6226, 3
      %v6229 = vshll.u32 %v6156, 16
      %v6231 = vrot.slane %v6229, 4
      %v6232 = vor.u32 %v6228, %v6231
      %v6233 = vshrl.u32 %v6158, 16
      %v6235 = vrot.slane %v6233, 3
      %v6236 = vshll.u32 %v6158, 16
      %v6238 = vrot.slane %v6236, 4
      %v6239 = vor.u32 %v6235, %v6238
      %v6240 = vsel %vm3173, %v6232, %v6239
      %v6241 = vshrl.u32 %v6160, 16
      %v6243 = vrot.slane %v6241, 3
      %v6244 = vshll.u32 %v6160, 16
      %v6246 = vrot.slane %v6244, 4
      %v6247 = vor.u32 %v6243, %v6246
      %v6248 = vsel %vm3173, %v6239, %v6247
      %v6249 = vshrl.u32 %v6162, 16
      %v6251 = vrot.slane %v6249, 3
      %v6252 = vshll.u32 %v6162, 16
      %v6254 = vrot.slane %v6252, 4
      %v6255 = vor.u32 %v6251, %v6254
      %v6256 = vsel %vm3173, %v6247, %v6255
      %v6257 = vshrl.u32 %v6164, 16
      %v6259 = vrot.slane %v6257, 3
      %v6260 = vshll.u32 %v6164, 16
      %v6262 = vrot.slane %v6260, 4
      %v6263 = vor.u32 %v6259, %v6262
      %v6264 = vsel %vm3173, %v6255, %v6263
      %v6265 = vshrl.u32 %v6166, 16
      %v6267 = vrot.slane %v6265, 3
      %v6268 = vshll.u32 %v6166, 16
      %v6270 = vrot.slane %v6268, 4
      %v6271 = vor.u32 %v6267, %v6270
      %v6272 = vsel %vm3173, %v6263, %v6271
      %v6273 = vshrl.u32 %v6168, 16
      %v6275 = vrot.slane %v6273, 3
      %v6276 = vshll.u32 %v6168, 16
      %v6278 = vrot.slane %v6276, 4
      %v6279 = vor.u32 %v6275, %v6278
      %v6280 = vsel %vm3173, %v6271, %v6279
      %v6281 = vshrl.u32 %v6170, 16
      %v6283 = vrot.slane %v6281, 3
      %v6284 = vshll.u32 %v6170, 16
      %v6286 = vrot.slane %v6284, 4
      %v6287 = vor.u32 %v6283, %v6286
      %v6288 = vsel %vm3173, %v6279, %v6287
      %v6289 = vshrl.u32 %v6172, 16
      %v6291 = vrot.slane %v6289, 3
      %v6292 = vshll.u32 %v6172, 16
      %v6294 = vrot.slane %v6292, 4
      %v6295 = vor.u32 %v6291, %v6294
      %v6296 = vsel %vm3173, %v6287, %v6295
      %v6297 = vshrl.u32 %v6174, 16
      %v6299 = vrot.slane %v6297, 3
      %v6300 = vshll.u32 %v6174, 16
      %v6302 = vrot.slane %v6300, 4
      %v6303 = vor.u32 %v6299, %v6302
      %v6304 = vsel %vm3173, %v6295, %v6303
      %v6305 = vshrl.u32 %v6176, 16
      %v6307 = vrot.slane %v6305, 3
      %v6308 = vshll.u32 %v6176, 16
      %v6310 = vrot.slane %v6308, 4
      %v6311 = vor.u32 %v6307, %v6310
      %v6312 = vsel %vm3173, %v6303, %v6311
      %v6313 = vshrl.u32 %v6178, 16
      %v6315 = vrot.slane %v6313, 3
      %v6316 = vshll.u32 %v6178, 16
      %v6318 = vrot.slane %v6316, 4
      %v6319 = vor.u32 %v6315, %v6318
      %v6320 = vsel %vm3173, %v6311, %v6319
      %v6321 = vshrl.u32 %v6180, 16
      %v6323 = vrot.slane %v6321, 3
      %v6324 = vshll.u32 %v6180, 16
      %v6326 = vrot.slane %v6324, 4
      %v6327 = vor.u32 %v6323, %v6326
      %v6328 = vsel %vm3173, %v6319, %v6327
      %v6329 = vshrl.u32 %v6182, 16
      %v6331 = vrot.slane %v6329, 3
      %v6332 = vshll.u32 %v6182, 16
      %v6334 = vrot.slane %v6332, 4
      %v6335 = vor.u32 %v6331, %v6334
      %v6336 = vsel %vm3173, %v6327, %v6335
      %v6337 = vshrl.u32 %v6184, 16
      %v6339 = vrot.slane %v6337, 3
      %v6340 = vshll.u32 %v6184, 16
      %v6342 = vrot.slane %v6340, 4
      %v6343 = vor.u32 %v6339, %v6342
      %v6344 = vsel %vm3173, %v6335, %v6343
      %v6345 = vshrl.u32 %v6186, 16
      %v6347 = vrot.slane %v6345, 3
      %v6348 = vshll.u32 %v6186, 16
      %v6350 = vrot.slane %v6348, 4
      %v6351 = vor.u32 %v6347, %v6350
      %v6352 = vsel %vm3173, %v6343, %v6351
      %v6353 = vshrl.u32 %v6188, 16
      %v6355 = vrot.slane %v6353, 3
      %v6356 = vshll.u32 %v6188, 16
      %v6358 = vrot.slane %v6356, 4
      %v6359 = vor.u32 %v6355, %v6358
      %v6360 = vsel %vm3173, %v6351, %v6359
      %v6361 = vshrl.u32 %v6190, 16
      %v6363 = vrot.slane %v6361, 3
      %v6364 = vshll.u32 %v6190, 16
      %v6366 = vrot.slane %v6364, 4
      %v6367 = vor.u32 %v6363, %v6366
      %v6368 = vsel %vm3173, %v6359, %v6367
      %v6369 = vshrl.u32 %v6192, 16
      %v6371 = vrot.slane %v6369, 3
      %v6372 = vshll.u32 %v6192, 16
      %v6374 = vrot.slane %v6372, 4
      %v6375 = vor.u32 %v6371, %v6374
      %v6376 = vsel %vm3173, %v6367, %v6375
      %v6377 = vshrl.u32 %v6194, 16
      %v6379 = vrot.slane %v6377, 3
      %v6380 = vshll.u32 %v6194, 16
      %v6382 = vrot.slane %v6380, 4
      %v6383 = vor.u32 %v6379, %v6382
      %v6384 = vsel %vm3173, %v6375, %v6383
      %v6385 = vshrl.u32 %v6196, 16
      %v6387 = vrot.slane %v6385, 3
      %v6388 = vshll.u32 %v6196, 16
      %v6390 = vrot.slane %v6388, 4
      %v6391 = vor.u32 %v6387, %v6390
      %v6392 = vsel %vm3173, %v6383, %v6391
      %v6393 = vshrl.u32 %v6198, 16
      %v6395 = vrot.slane %v6393, 3
      %v6396 = vshll.u32 %v6198, 16
      %v6398 = vrot.slane %v6396, 4
      %v6399 = vor.u32 %v6395, %v6398
      %v6400 = vsel %vm3173, %v6391, %v6399
      %v6401 = vshrl.u32 %v6200, 16
      %v6403 = vrot.slane %v6401, 3
      %v6404 = vshll.u32 %v6200, 16
      %v6406 = vrot.slane %v6404, 4
      %v6407 = vor.u32 %v6403, %v6406
      %v6408 = vsel %vm3173, %v6399, %v6407
      %v6409 = vshrl.u32 %v6202, 16
      %v6411 = vrot.slane %v6409, 3
      %v6412 = vshll.u32 %v6202, 16
      %v6414 = vrot.slane %v6412, 4
      %v6415 = vor.u32 %v6411, %v6414
      %v6416 = vsel %vm3173, %v6407, %v6415
      %v6417 = vshrl.u32 %v6204, 16
      %v6419 = vrot.slane %v6417, 3
      %v6420 = vshll.u32 %v6204, 16
      %v6422 = vrot.slane %v6420, 4
      %v6423 = vor.u32 %v6419, %v6422
      %v6424 = vsel %vm3173, %v6415, %v6423
      %v6425 = vshrl.u32 %v6206, 16
      %v6427 = vrot.slane %v6425, 3
      %v6428 = vshll.u32 %v6206, 16
      %v6430 = vrot.slane %v6428, 4
      %v6431 = vor.u32 %v6427, %v6430
      %v6432 = vsel %vm3173, %v6423, %v6431
      %v6433 = vshrl.u32 %v6208, 16
      %v6435 = vrot.slane %v6433, 3
      %v6436 = vshll.u32 %v6208, 16
      %v6438 = vrot.slane %v6436, 4
      %v6439 = vor.u32 %v6435, %v6438
      %v6440 = vsel %vm3173, %v6431, %v6439
      %v6441 = vshrl.u32 %v6210, 16
      %v6443 = vrot.slane %v6441, 3
      %v6444 = vshll.u32 %v6210, 16
      %v6446 = vrot.slane %v6444, 4
      %v6447 = vor.u32 %v6443, %v6446
      %v6448 = vsel %vm3173, %v6439, %v6447
      %v6449 = vshrl.u32 %v6212, 16
      %v6451 = vrot.slane %v6449, 3
      %v6452 = vshll.u32 %v6212, 16
      %v6454 = vrot.slane %v6452, 4
      %v6455 = vor.u32 %v6451, %v6454
      %v6456 = vsel %vm3173, %v6447, %v6455
      %v6457 = vshrl.u32 %v6214, 16
      %v6459 = vrot.slane %v6457, 3
      %v6460 = vshll.u32 %v6214, 16
      %v6462 = vrot.slane %v6460, 4
      %v6463 = vor.u32 %v6459, %v6462
      %v6464 = vsel %vm3173, %v6455, %v6463
      %v6465 = vshrl.u32 %v6216, 16
      %v6467 = vrot.slane %v6465, 3
      %v6468 = vshll.u32 %v6216, 16
      %v6470 = vrot.slane %v6468, 4
      %v6471 = vor.u32 %v6467, %v6470
      %v6472 = vsel %vm3173, %v6463, %v6471
      %v6473 = vshrl.u32 %v6218, 16
      %v6475 = vrot.slane %v6473, 3
      %v6476 = vshll.u32 %v6218, 16
      %v6478 = vrot.slane %v6476, 4
      %v6479 = vor.u32 %v6475, %v6478
      %v6480 = vsel %vm3173, %v6471, %v6479
      %v6481 = vshrl.u32 %v6220, 16
      %v6483 = vrot.slane %v6481, 3
      %v6484 = vshll.u32 %v6220, 16
      %v6486 = vrot.slane %v6484, 4
      %v6487 = vor.u32 %v6483, %v6486
      %v6488 = vsel %vm3173, %v6479, %v6487
      %v6494 = vunpack.c.l.b16 %v6221
      %v6495 = vunpack.c.l.b16 %v6222
      %v6496 = vunpack.c.l.b16 %v6223
      %v6497 = vunpack.c.l.b16 %v6224
      %v6498 = vunpack.c.l.b16 %v6225
      %v6499 = vpack.c.b16 %v6495, %v6494
      %v6500 = vpack.c.b16 %v6497, %v6496
      %v6501 = vpack.c.b16 %v6498, %v6498
      %v6505 = vsel %vm3452, %v6240, 0
      %v6508 = vsel %vm3452, %v6248, 0
      %v6511 = vsel %vm3452, %v6256, 0
      %v6514 = vsel %vm3452, %v6264, 0
      %v6517 = vsel %vm3452, %v6272, 0
      %v6520 = vsel %vm3452, %v6280, 0
      %v6523 = vsel %vm3452, %v6288, 0
      %v6526 = vsel %vm3452, %v6296, 0
      %v6529 = vsel %vm3452, %v6304, 0
      %v6532 = vsel %vm3452, %v6312, 0
      %v6535 = vsel %vm3452, %v6320, 0
      %v6538 = vsel %vm3452, %v6328, 0
      %v6541 = vsel %vm3452, %v6336, 0
      %v6544 = vsel %vm3452, %v6344, 0
      %v6547 = vsel %vm3452, %v6352, 0
      %v6550 = vsel %vm3452, %v6360, 0
      %v6553 = vsel %vm3452, %v6368, 0
      %v6556 = vsel %vm3452, %v6376, 0
      %v6559 = vsel %vm3452, %v6384, 0
      %v6562 = vsel %vm3452, %v6392, 0
      %v6565 = vsel %vm3452, %v6400, 0
      %v6568 = vsel %vm3452, %v6408, 0
      %v6571 = vsel %vm3452, %v6416, 0
      %v6574 = vsel %vm3452, %v6424, 0
      %v6577 = vsel %vm3452, %v6432, 0
      %v6580 = vsel %vm3452, %v6440, 0
      %v6583 = vsel %vm3452, %v6448, 0
      %v6586 = vsel %vm3452, %v6456, 0
      %v6589 = vsel %vm3452, %v6464, 0
      %v6592 = vsel %vm3452, %v6472, 0
      %v6595 = vsel %vm3452, %v6480, 0
      %v6598 = vsel %vm3452, %v6488, 0
      %v6601 = vsel %vm3549, %v6501, 0
      %6603 = vmatprep.subr.bf16.mxu0 0
      %6604 = vmatpush1.bf16.msra.mxu0 0
      %6605 = vmatprep.subr.bf16.mxu0 0
      %6606 = vmatpush1.bf16.msra.mxu0 0
      %6607 = vmatprep.subr.bf16.mxu0 0
      %6608 = vmatpush1.bf16.msra.mxu0 0
      %6609 = vmatprep.subr.bf16.mxu0 0
      %6610 = vmatpush1.bf16.msra.mxu0 0
      %6611 = vmatprep.subr.bf16.mxu0 0
      %6612 = vmatpush1.bf16.msra.mxu0 0
      %6613 = vmatprep.subr.bf16.mxu0 0
      %6614 = vmatpush1.bf16.msra.mxu0 %v6601
      %6615 = vmatprep.subr.bf16.mxu0 0
      %6616 = vmatpush1.bf16.msra.mxu0 %v6500
      %6617 = vmatprep.subr.bf16.mxu0 0
      %6618 = vmatpush1.bf16.msra.mxu0 %v6499
      %6619 = vmatprep.subr.bf16.mxu0 0
      %6620 = vmatpush2.bf16.msra.mxu0 0
      %6621 = vmatprep.subr.bf16.mxu0 0
      %6622 = vmatpush2.bf16.msra.mxu0 0
      %6623 = vmatprep.subr.bf16.mxu0 0
      %6624 = vmatpush2.bf16.msra.mxu0 0
      %6625 = vmatprep.subr.bf16.mxu0 0
      %6626 = vmatpush2.bf16.msra.mxu0 0
      %6627 = vmatprep.subr.bf16.mxu0 0
      %6628 = vmatpush2.bf16.msra.mxu0 0
      %6629 = vmatprep.subr.bf16.mxu0 0
      %6630 = vmatpush2.bf16.msra.mxu0 0
      %6631 = vmatprep.subr.bf16.mxu0 0
      %6632 = vmatpush2.bf16.msra.mxu0 0
      %6633 = vmatprep.subr.bf16.mxu0 0
      %6634 = vmatpush2.bf16.msra.mxu0 0
      %6635 = vmatprep.mubr.bf16.mxu0 0
      %6636 = vmatmul.mubr.bf16.gmra.mxu0 %v6505
      %v6637 = vpop.f32.mrf.mxu0
      %v6638 = vadd.f32 %v3171, %v6637
      %v6639 = vpop.f32.mrf.mxu0
      %v6640 = vpop.f32.mrf.mxu0
      %v6641 = vadd.f32 %v3171, %v6640
      %v6642 = vpop.f32.mrf.mxu0
      %6643 = vmatprep.mubr.bf16.mxu0 0
      %6644 = vmatmul.mubr.bf16.gmra.mxu0 %v6508
      %v6645 = vpop.f32.mrf.mxu0
      %v6646 = vpop.f32.mrf.mxu0
      %v6647 = vpop.f32.mrf.mxu0
      %v6648 = vpop.f32.mrf.mxu0
      %6649 = vmatprep.mubr.bf16.mxu0 0
      %6650 = vmatmul.mubr.bf16.gmra.mxu0 %v6511
      %v6651 = vpop.f32.mrf.mxu0
      %v6652 = vadd.f32 %v3171, %v6651
      %v6653 = vpop.f32.mrf.mxu0
      %v6654 = vpop.f32.mrf.mxu0
      %v6655 = vadd.f32 %v3171, %v6654
      %v6656 = vpop.f32.mrf.mxu0
      %6657 = vmatprep.mubr.bf16.mxu0 0
      %6658 = vmatmul.mubr.bf16.gmra.mxu0 %v6514
      %v6659 = vpop.f32.mrf.mxu0
      %v6660 = vpop.f32.mrf.mxu0
      %v6661 = vpop.f32.mrf.mxu0
      %v6662 = vpop.f32.mrf.mxu0
      %6663 = vmatprep.mubr.bf16.mxu0 0
      %6664 = vmatmul.mubr.bf16.gmra.mxu0 %v6517
      %v6665 = vpop.f32.mrf.mxu0
      %v6666 = vadd.f32 %v3171, %v6665
      %v6667 = vpop.f32.mrf.mxu0
      %v6668 = vpop.f32.mrf.mxu0
      %v6669 = vadd.f32 %v3171, %v6668
      %v6670 = vpop.f32.mrf.mxu0
      %6671 = vmatprep.mubr.bf16.mxu0 0
      %6672 = vmatmul.mubr.bf16.gmra.mxu0 %v6520
      %v6673 = vpop.f32.mrf.mxu0
      %v6674 = vpop.f32.mrf.mxu0
      %v6675 = vpop.f32.mrf.mxu0
      %v6676 = vpop.f32.mrf.mxu0
      %6677 = vmatprep.mubr.bf16.mxu0 0
      %6678 = vmatmul.mubr.bf16.gmra.mxu0 %v6523
      %v6679 = vpop.f32.mrf.mxu0
      %v6680 = vadd.f32 %v3171, %v6679
      %v6681 = vpop.f32.mrf.mxu0
      %v6682 = vpop.f32.mrf.mxu0
      %v6683 = vadd.f32 %v3171, %v6682
      %v6684 = vpop.f32.mrf.mxu0
      %6685 = vmatprep.mubr.bf16.mxu0 0
      %6686 = vmatmul.mubr.bf16.gmra.mxu0 %v6526
      %v6687 = vpop.f32.mrf.mxu0
      %v6688 = vpop.f32.mrf.mxu0
      %v6689 = vpop.f32.mrf.mxu0
      %v6690 = vpop.f32.mrf.mxu0
      %6691 = vmatprep.mubr.bf16.mxu0 0
      %6692 = vmatmul.mubr.bf16.gmra.mxu0 %v6529
      %v6693 = vpop.f32.mrf.mxu0
      %v6694 = vadd.f32 %v3171, %v6693
      %v6695 = vpop.f32.mrf.mxu0
      %v6696 = vpop.f32.mrf.mxu0
      %v6697 = vadd.f32 %v3171, %v6696
      %v6698 = vpop.f32.mrf.mxu0
      %6699 = vmatprep.mubr.bf16.mxu0 0
      %6700 = vmatmul.mubr.bf16.gmra.mxu0 %v6532
      %v6701 = vpop.f32.mrf.mxu0
      %v6702 = vpop.f32.mrf.mxu0
      %v6703 = vpop.f32.mrf.mxu0
      %v6704 = vpop.f32.mrf.mxu0
      %6705 = vmatprep.mubr.bf16.mxu0 0
      %6706 = vmatmul.mubr.bf16.gmra.mxu0 %v6535
      %v6707 = vpop.f32.mrf.mxu0
      %v6708 = vadd.f32 %v3171, %v6707
      %v6709 = vpop.f32.mrf.mxu0
      %v6710 = vpop.f32.mrf.mxu0
      %v6711 = vadd.f32 %v3171, %v6710
      %v6712 = vpop.f32.mrf.mxu0
      %6713 = vmatprep.mubr.bf16.mxu0 0
      %6714 = vmatmul.mubr.bf16.gmra.mxu0 %v6538
      %v6715 = vpop.f32.mrf.mxu0
      %v6716 = vpop.f32.mrf.mxu0
      %v6717 = vpop.f32.mrf.mxu0
      %v6718 = vpop.f32.mrf.mxu0
      %6719 = vmatprep.mubr.bf16.mxu0 0
      %6720 = vmatmul.mubr.bf16.gmra.mxu0 %v6541
      %v6721 = vpop.f32.mrf.mxu0
      %v6722 = vadd.f32 %v3171, %v6721
      %v6723 = vpop.f32.mrf.mxu0
      %v6724 = vpop.f32.mrf.mxu0
      %v6725 = vadd.f32 %v3171, %v6724
      %v6726 = vpop.f32.mrf.mxu0
      %6727 = vmatprep.mubr.bf16.mxu0 0
      %6728 = vmatmul.mubr.bf16.gmra.mxu0 %v6544
      %v6729 = vpop.f32.mrf.mxu0
      %v6730 = vpop.f32.mrf.mxu0
      %v6731 = vpop.f32.mrf.mxu0
      %v6732 = vpop.f32.mrf.mxu0
      %6733 = vmatprep.mubr.bf16.mxu0 0
      %6734 = vmatmul.mubr.bf16.gmra.mxu0 %v6547
      %v6735 = vpop.f32.mrf.mxu0
      %v6736 = vadd.f32 %v3171, %v6735
      %v6737 = vpop.f32.mrf.mxu0
      %v6738 = vpop.f32.mrf.mxu0
      %v6739 = vadd.f32 %v3171, %v6738
      %v6740 = vpop.f32.mrf.mxu0
      %6741 = vmatprep.mubr.bf16.mxu0 0
      %6742 = vmatmul.mubr.bf16.gmra.mxu0 %v6550
      %v6743 = vpop.f32.mrf.mxu0
      %v6744 = vpop.f32.mrf.mxu0
      %v6745 = vpop.f32.mrf.mxu0
      %v6746 = vpop.f32.mrf.mxu0
      %6747 = vmatprep.mubr.bf16.mxu0 0
      %6748 = vmatmul.mubr.bf16.gmra.mxu0 %v6553
      %v6749 = vpop.f32.mrf.mxu0
      %v6750 = vadd.f32 %v3171, %v6749
      %v6751 = vpop.f32.mrf.mxu0
      %v6752 = vpop.f32.mrf.mxu0
      %v6753 = vadd.f32 %v3171, %v6752
      %v6754 = vpop.f32.mrf.mxu0
      %6755 = vmatprep.mubr.bf16.mxu0 0
      %6756 = vmatmul.mubr.bf16.gmra.mxu0 %v6556
      %v6757 = vpop.f32.mrf.mxu0
      %v6758 = vpop.f32.mrf.mxu0
      %v6759 = vpop.f32.mrf.mxu0
      %v6760 = vpop.f32.mrf.mxu0
      %6761 = vmatprep.mubr.bf16.mxu0 0
      %6762 = vmatmul.mubr.bf16.gmra.mxu0 %v6559
      %v6763 = vpop.f32.mrf.mxu0
      %v6764 = vadd.f32 %v3171, %v6763
      %v6765 = vpop.f32.mrf.mxu0
      %v6766 = vpop.f32.mrf.mxu0
      %v6767 = vadd.f32 %v3171, %v6766
      %v6768 = vpop.f32.mrf.mxu0
      %6769 = vmatprep.mubr.bf16.mxu0 0
      %6770 = vmatmul.mubr.bf16.gmra.mxu0 %v6562
      %v6771 = vpop.f32.mrf.mxu0
      %v6772 = vpop.f32.mrf.mxu0
      %v6773 = vpop.f32.mrf.mxu0
      %v6774 = vpop.f32.mrf.mxu0
      %6775 = vmatprep.mubr.bf16.mxu0 0
      %6776 = vmatmul.mubr.bf16.gmra.mxu0 %v6565
      %v6777 = vpop.f32.mrf.mxu0
      %v6778 = vadd.f32 %v3171, %v6777
      %v6779 = vpop.f32.mrf.mxu0
      %v6780 = vpop.f32.mrf.mxu0
      %v6781 = vadd.f32 %v3171, %v6780
      %v6782 = vpop.f32.mrf.mxu0
      %6783 = vmatprep.mubr.bf16.mxu0 0
      %6784 = vmatmul.mubr.bf16.gmra.mxu0 %v6568
      %v6785 = vpop.f32.mrf.mxu0
      %v6786 = vpop.f32.mrf.mxu0
      %v6787 = vpop.f32.mrf.mxu0
      %v6788 = vpop.f32.mrf.mxu0
      %6789 = vmatprep.mubr.bf16.mxu0 0
      %6790 = vmatmul.mubr.bf16.gmra.mxu0 %v6571
      %v6791 = vpop.f32.mrf.mxu0
      %v6792 = vadd.f32 %v3171, %v6791
      %v6793 = vpop.f32.mrf.mxu0
      %v6794 = vpop.f32.mrf.mxu0
      %v6795 = vadd.f32 %v3171, %v6794
      %v6796 = vpop.f32.mrf.mxu0
      %6797 = vmatprep.mubr.bf16.mxu0 0
      %6798 = vmatmul.mubr.bf16.gmra.mxu0 %v6574
      %v6799 = vpop.f32.mrf.mxu0
      %v6800 = vpop.f32.mrf.mxu0
      %v6801 = vpop.f32.mrf.mxu0
      %v6802 = vpop.f32.mrf.mxu0
      %6803 = vmatprep.mubr.bf16.mxu0 0
      %6804 = vmatmul.mubr.bf16.gmra.mxu0 %v6577
      %v6805 = vpop.f32.mrf.mxu0
      %v6806 = vadd.f32 %v3171, %v6805
      %v6807 = vpop.f32.mrf.mxu0
      %v6808 = vpop.f32.mrf.mxu0
      %v6809 = vadd.f32 %v3171, %v6808
      %v6810 = vpop.f32.mrf.mxu0
      %6811 = vmatprep.mubr.bf16.mxu0 0
      %6812 = vmatmul.mubr.bf16.gmra.mxu0 %v6580
      %v6813 = vpop.f32.mrf.mxu0
      %v6814 = vpop.f32.mrf.mxu0
      %v6815 = vpop.f32.mrf.mxu0
      %v6816 = vpop.f32.mrf.mxu0
      %6817 = vmatprep.mubr.bf16.mxu0 0
      %6818 = vmatmul.mubr.bf16.gmra.mxu0 %v6583
      %v6819 = vpop.f32.mrf.mxu0
      %v6820 = vadd.f32 %v3171, %v6819
      %v6821 = vpop.f32.mrf.mxu0
      %v6822 = vpop.f32.mrf.mxu0
      %v6823 = vadd.f32 %v3171, %v6822
      %v6824 = vpop.f32.mrf.mxu0
      %6825 = vmatprep.mubr.bf16.mxu0 0
      %6826 = vmatmul.mubr.bf16.gmra.mxu0 %v6586
      %v6827 = vpop.f32.mrf.mxu0
      %v6828 = vpop.f32.mrf.mxu0
      %v6829 = vpop.f32.mrf.mxu0
      %v6830 = vpop.f32.mrf.mxu0
      %6831 = vmatprep.mubr.bf16.mxu0 0
      %6832 = vmatmul.mubr.bf16.gmra.mxu0 %v6589
      %v6833 = vpop.f32.mrf.mxu0
      %v6834 = vadd.f32 %v3171, %v6833
      %v6835 = vpop.f32.mrf.mxu0
      %v6836 = vpop.f32.mrf.mxu0
      %v6837 = vadd.f32 %v3171, %v6836
      %v6838 = vpop.f32.mrf.mxu0
      %6839 = vmatprep.mubr.bf16.mxu0 0
      %6840 = vmatmul.mubr.bf16.gmra.mxu0 %v6592
      %v6841 = vpop.f32.mrf.mxu0
      %v6842 = vpop.f32.mrf.mxu0
      %v6843 = vpop.f32.mrf.mxu0
      %v6844 = vpop.f32.mrf.mxu0
      %6845 = vmatprep.mubr.bf16.mxu0 0
      %6846 = vmatmul.mubr.bf16.gmra.mxu0 %v6595
      %v6847 = vpop.f32.mrf.mxu0
      %v6848 = vadd.f32 %v3171, %v6847
      %v6849 = vpop.f32.mrf.mxu0
      %v6850 = vpop.f32.mrf.mxu0
      %v6851 = vadd.f32 %v3171, %v6850
      %v6852 = vpop.f32.mrf.mxu0
      %6853 = vmatprep.mubr.bf16.mxu0 0
      %6854 = vmatmul.mubr.bf16.gmra.mxu0 %v6598
      %v6855 = vpop.f32.mrf.mxu0
      %v6856 = vpop.f32.mrf.mxu0
      %v6857 = vpop.f32.mrf.mxu0
      %v6858 = vpop.f32.mrf.mxu0
      %6859 = vdwg.mxu0
      %v6860 = vld [vmem:[%s192] sm:$0xff]
      %v6861 = vld [vmem:[%s192 + $0x8] sm:$0xff]
      %v6862 = vld [vmem:[%s192 + $0x10] sm:$0xff]
      %v6863 = vld [vmem:[%s192 + $0x18] sm:$0xff]
      %v6864 = vld [vmem:[%s192 + $0x20] sm:$0xff]
      %v6865 = vld [vmem:[%s192 + $0x28] sm:$0xff]
      %v6866 = vld [vmem:[%s192 + $0x30] sm:$0xff]
      %v6867 = vld [vmem:[%s192 + $0x38] sm:$0xff]
      %v6868 = vld [vmem:[%s192 + $0x40] sm:$0xff]
      %v6869 = vld [vmem:[%s192 + $0x48] sm:$0xff]
      %v6870 = vld [vmem:[%s192 + $0x50] sm:$0xff]
      %v6871 = vld [vmem:[%s192 + $0x58] sm:$0xff]
      %v6872 = vld [vmem:[%s192 + $0x60] sm:$0xff]
      %v6873 = vld [vmem:[%s192 + $0x68] sm:$0xff]
      %v6874 = vld [vmem:[%s192 + $0x70] sm:$0xff]
      %v6875 = vld [vmem:[%s192 + $0x78] sm:$0xff]
      %v6876 = vld [vmem:[%s192 + $0x80] sm:$0xff]
      %v6877 = vld [vmem:[%s192 + $0x88] sm:$0xff]
      %v6878 = vld [vmem:[%s192 + $0x90] sm:$0xff]
      %v6879 = vld [vmem:[%s192 + $0x98] sm:$0xff]
      %v6880 = vld [vmem:[%s192 + $0xa0] sm:$0xff]
      %v6881 = vld [vmem:[%s192 + $0xa8] sm:$0xff]
      %v6882 = vld [vmem:[%s192 + $0xb0] sm:$0xff]
      %v6883 = vld [vmem:[%s192 + $0xb8] sm:$0xff]
      %v6884 = vld [vmem:[%s192 + $0xc0] sm:$0xff]
      %v6885 = vld [vmem:[%s192 + $0xc8] sm:$0xff]
      %v6886 = vld [vmem:[%s192 + $0xd0] sm:$0xff]
      %v6887 = vld [vmem:[%s192 + $0xd8] sm:$0xff]
      %v6888 = vld [vmem:[%s192 + $0xe0] sm:$0xff]
      %v6889 = vld [vmem:[%s192 + $0xe8] sm:$0xff]
      %v6890 = vld [vmem:[%s192 + $0xf0] sm:$0xff]
      %v6891 = vld [vmem:[%s192 + $0xf8] sm:$0xff]
      %v6892 = vadd.f32 %v6638, %v6860
      %v6893 = vadd.f32 %v6641, %v6861
      %v6894 = vadd.f32 %v6652, %v6862
      %v6895 = vadd.f32 %v6655, %v6863
      %v6896 = vadd.f32 %v6666, %v6864
      %v6897 = vadd.f32 %v6669, %v6865
      %v6898 = vadd.f32 %v6680, %v6866
      %v6899 = vadd.f32 %v6683, %v6867
      %v6900 = vadd.f32 %v6694, %v6868
      %v6901 = vadd.f32 %v6697, %v6869
      %v6902 = vadd.f32 %v6708, %v6870
      %v6903 = vadd.f32 %v6711, %v6871
      %v6904 = vadd.f32 %v6722, %v6872
      %v6905 = vadd.f32 %v6725, %v6873
      %v6906 = vadd.f32 %v6736, %v6874
      %v6907 = vadd.f32 %v6739, %v6875
      %v6908 = vadd.f32 %v6750, %v6876
      %v6909 = vadd.f32 %v6753, %v6877
      %v6910 = vadd.f32 %v6764, %v6878
      %v6911 = vadd.f32 %v6767, %v6879
      %v6912 = vadd.f32 %v6778, %v6880
      %v6913 = vadd.f32 %v6781, %v6881
      %v6914 = vadd.f32 %v6792, %v6882
      %v6915 = vadd.f32 %v6795, %v6883
      %v6916 = vadd.f32 %v6806, %v6884
      %v6917 = vadd.f32 %v6809, %v6885
      %v6918 = vadd.f32 %v6820, %v6886
      %v6919 = vadd.f32 %v6823, %v6887
      %v6920 = vadd.f32 %v6834, %v6888
      %v6921 = vadd.f32 %v6837, %v6889
      %v6922 = vadd.f32 %v6848, %v6890
      %v6923 = vadd.f32 %v6851, %v6891
      %v6924 = vmax.f32 %v6892, 0.0
      %v6925 = vmax.f32 %v6893, 0.0
      %v6926 = vmax.f32 %v6894, 0.0
      %v6927 = vmax.f32 %v6895, 0.0
      %v6928 = vmax.f32 %v6896, 0.0
      %v6929 = vmax.f32 %v6897, 0.0
      %v6930 = vmax.f32 %v6898, 0.0
      %v6931 = vmax.f32 %v6899, 0.0
      %v6932 = vmax.f32 %v6900, 0.0
      %v6933 = vmax.f32 %v6901, 0.0
      %v6934 = vmax.f32 %v6902, 0.0
      %v6935 = vmax.f32 %v6903, 0.0
      %v6936 = vmax.f32 %v6904, 0.0
      %v6937 = vmax.f32 %v6905, 0.0
      %v6938 = vmax.f32 %v6906, 0.0
      %v6939 = vmax.f32 %v6907, 0.0
      %v6940 = vmax.f32 %v6908, 0.0
      %v6941 = vmax.f32 %v6909, 0.0
      %v6942 = vmax.f32 %v6910, 0.0
      %v6943 = vmax.f32 %v6911, 0.0
      %v6944 = vmax.f32 %v6912, 0.0
      %v6945 = vmax.f32 %v6913, 0.0
      %v6946 = vmax.f32 %v6914, 0.0
      %v6947 = vmax.f32 %v6915, 0.0
      %v6948 = vmax.f32 %v6916, 0.0
      %v6949 = vmax.f32 %v6917, 0.0
      %v6950 = vmax.f32 %v6918, 0.0
      %v6951 = vmax.f32 %v6919, 0.0
      %v6952 = vmax.f32 %v6920, 0.0
      %v6953 = vmax.f32 %v6921, 0.0
      %v6954 = vmax.f32 %v6922, 0.0
      %v6955 = vmax.f32 %v6923, 0.0
      %6956 = vst.msk [vmem:[%s197] sm:$0xff] %vm2593, %v6924
      %6957 = vst.msk [vmem:[%s197 + $0x8] sm:$0xff] %vm2593, %v6925
      %6958 = vst.msk [vmem:[%s197 + $0x10] sm:$0xff] %vm2593, %v6926
      %6959 = vst.msk [vmem:[%s197 + $0x18] sm:$0xff] %vm2593, %v6927
      %6960 = vst.msk [vmem:[%s197 + $0x20] sm:$0xff] %vm2593, %v6928
      %6961 = vst.msk [vmem:[%s197 + $0x28] sm:$0xff] %vm2593, %v6929
      %6962 = vst.msk [vmem:[%s197 + $0x30] sm:$0xff] %vm2593, %v6930
      %6963 = vst.msk [vmem:[%s197 + $0x38] sm:$0xff] %vm2593, %v6931
      %6964 = vst.msk [vmem:[%s197 + $0x40] sm:$0xff] %vm2593, %v6932
      %6965 = vst.msk [vmem:[%s197 + $0x48] sm:$0xff] %vm2593, %v6933
      %6966 = vst.msk [vmem:[%s197 + $0x50] sm:$0xff] %vm2593, %v6934
      %6967 = vst.msk [vmem:[%s197 + $0x58] sm:$0xff] %vm2593, %v6935
      %6968 = vst.msk [vmem:[%s197 + $0x60] sm:$0xff] %vm2593, %v6936
      %6969 = vst.msk [vmem:[%s197 + $0x68] sm:$0xff] %vm2593, %v6937
      %6970 = vst.msk [vmem:[%s197 + $0x70] sm:$0xff] %vm2593, %v6938
      %6971 = vst.msk [vmem:[%s197 + $0x78] sm:$0xff] %vm2593, %v6939
      %6972 = vst.msk [vmem:[%s197 + $0x80] sm:$0xff] %vm2593, %v6940
      %6973 = vst.msk [vmem:[%s197 + $0x88] sm:$0xff] %vm2593, %v6941
      %6974 = vst.msk [vmem:[%s197 + $0x90] sm:$0xff] %vm2593, %v6942
      %6975 = vst.msk [vmem:[%s197 + $0x98] sm:$0xff] %vm2593, %v6943
      %6976 = vst.msk [vmem:[%s197 + $0xa0] sm:$0xff] %vm2593, %v6944
      %6977 = vst.msk [vmem:[%s197 + $0xa8] sm:$0xff] %vm2593, %v6945
      %6978 = vst.msk [vmem:[%s197 + $0xb0] sm:$0xff] %vm2593, %v6946
      %6979 = vst.msk [vmem:[%s197 + $0xb8] sm:$0xff] %vm2593, %v6947
      %6980 = vst.msk [vmem:[%s197 + $0xc0] sm:$0xff] %vm2593, %v6948
      %6981 = vst.msk [vmem:[%s197 + $0xc8] sm:$0xff] %vm2593, %v6949
      %6982 = vst.msk [vmem:[%s197 + $0xd0] sm:$0xff] %vm2593, %v6950
      %6983 = vst.msk [vmem:[%s197 + $0xd8] sm:$0xff] %vm2593, %v6951
      %6984 = vst.msk [vmem:[%s197 + $0xe0] sm:$0xff] %vm2593, %v6952
      %6985 = vst.msk [vmem:[%s197 + $0xe8] sm:$0xff] %vm2593, %v6953
      %6986 = vst.msk [vmem:[%s197 + $0xf0] sm:$0xff] %vm2593, %v6954
      %6987 = vst.msk [vmem:[%s197 + $0xf8] sm:$0xff] %vm2593, %v6955
      %p6988 = scmp.lt.s32.totalorder %s15, 1
      %s6989 = scalar_select %p6988, %s15, 1
      %s6990 = smul.addr %s6989, 32
      %s6991 = smul.addr %s6990, 8
      %s6992 = scalar_lea.vmem %s4, %s6991
      // Predicated region
      $region37: #{block_forward.1} parent=35 // pred_check
        %p6993 = pneg %p122
      $region38: #{block_forward.1} parent=35 // pred_check_branch
        %6995 = sbr.rel (%p6993) target = $region40
      $region39: #{block_forward.1} parent=35 // pred_region
        _
      $region40: #{block_forward.1} parent=35 // pred_fallthru
        _
    $region36: #{block_forward.1} parent=5 // pred_fallthru
      _
    %p6996 = scmp.le.s32.totalorder 2, %s10
    // Predicated region
    $region41: #{block_forward.1} parent=5 // pred_check
      %p6997 = pneg %p6996
    $region42: #{block_forward.1} parent=5 // pred_check_branch
      %6999 = sbr.rel (%p6997) target = $region44
    $region43: #{block_forward.1} parent=5 // pred_region
      %s7000 = ssub.s32 %s10, 2
      // Predicated region
      $region45: #{block_forward.1} parent=43 // pred_check
        %p7001 = pneg %p128
      $region46: #{block_forward.1} parent=43 // pred_check_branch
        %7003 = sbr.rel (%p7001) target = $region48
      $region47: #{block_forward.1} parent=43 // pred_region
        %p7004 = scmp.lt.s32.totalorder %s16, 1
        %s7005 = scalar_select %p7004, %s16, 1
        %s7006 = smul.addr %s7005, 32
        %s7007 = smul.addr %s7006, 8
        %s7008 = scalar_lea.vmem %s4, %s7007
      $region48: #{block_forward.1} parent=43 // pred_fallthru
        _
    $region44: #{block_forward.1} parent=5 // pred_fallthru
      _
  $region6: #{block_forward.1} parent=0 // loop_footer
    %s14 = sadd.s32 1, %s10
  $region7: #{block_forward.1} parent=0 // loop_footer_branch
    %9 = sbr.rel target = $region3
  $region8: #{block_forward.1} parent=0 // loop_exit
    _

</llo_original>
